<compile_context>
chip_gen: v7x
topology: tpu7x:2x2x1
jax: 0.10.0
libtpu: 0.0.40
codegen_flags: <defaults>
</compile_context>

<pallas_src>
from functools import partial

import jax
import jax.numpy as jnp
from jax.experimental import pallas as pl
from jax.experimental.pallas import tpu as pltpu

D = 1024          # input feature dim (hardcoded in Structure_CNN)
Co = 100          # conv output channels (hardcoded in Structure_CNN)
CO_PAD = 128      # per-branch channel padding -> MXU/lane friendly width
LANE = 128
Ks = (1, 3, 5)    # structure_cnn_poly = Structure_CNN(hparams, [1, 3, 5]); all odd
BN_EPS = 1e-5


def _fused_conv_kernel(x_ref, w_ref, shift_ref, o_ref, *, T, Tp8, Bb, tap_ncols):
    """All conv branches for Bb batch rows, batch fused into the matmul M dim.

    x_ref:     (Bb*Tp8, D)   bf16 same-padded input rows (Tp8 % 8 == 0)
    w_ref:     (Kmax, D, N)  bf16 fused taps (BN scale folded); tap j is non-zero
                             only in the lane-aligned column prefix [0, tap_ncols[j])
    shift_ref: (1, N)        f32 folded conv-bias + BatchNorm shift
    o_ref:     (Bb, 1, N)    f32 global-max-pooled output
    """
    M = Bb * Tp8
    n_groups = w_ref.shape[2] // LANE
    x2 = x_ref[...]                                        # (M, D) bf16, shared by all taps
    accs = [None] * n_groups                               # per-128-lane-group f32 accumulators
    for j, nj in enumerate(tap_ncols):                     # static unroll over Kmax taps
        y = jnp.dot(x2, w_ref[j, :, :nj],
                    preferred_element_type=jnp.float32)    # (M, nj) f32 on the MXU
        if j:
            # out row m needs y[m + j]: roll left by j (XLU). Wrapped / cross-batch
            # rows only land on t >= T positions, which are masked out below.
            y = pltpu.roll(y, M - j, 0)                    # == jnp.roll(y, -j, axis=0)
        for g in range(nj // LANE):                        # lane-aligned 128-col splits
            blk = y[:, g * LANE:(g + 1) * LANE]
            accs[g] = blk if accs[g] is None else accs[g] + blk

    # Epilogue: mask pad/wrapped rows, per-batch max over time, then bias + ReLU.
    # max_t relu(a_t + s) == relu(max_t a_t + s) since ReLU is monotone.
    valid = (jax.lax.broadcasted_iota(jnp.int32, (Tp8, LANE), 0) < T)[None]
    outs = []
    for g in range(n_groups):
        a3 = accs[g].reshape(Bb, Tp8, LANE)                # free: Tp8 % 8 == 0
        mx = jnp.max(jnp.where(valid, a3, -jnp.inf),
                     axis=1, keepdims=True)                # (Bb, 1, 128)
        outs.append(jnp.maximum(mx + shift_ref[:, g * LANE:(g + 1) * LANE], 0.0))
    o_ref[...] = jnp.concatenate(outs, axis=2).astype(o_ref.dtype)


def _build_fused_params(params, ks):
    """Fold BN (running stats) + conv bias, center taps in Kmax, pad Co -> CO_PAD.

    Branch columns are packed in DESCENDING kernel-size order so each fused tap's
    non-zero columns are a lane-aligned prefix (enables zero-column skipping).

    params[i] = (weight (Co,D,K), bias (Co,), gamma (Co,), beta (Co,),
                 running_mean (Co,), running_var (Co,))
    Returns:
      w_fused   (Kmax, D, N) bf16, N = len(ks)*CO_PAD
      shift     (1, N) f32
      col_off   tuple: column offset of branch ks[i] inside the kernel output
      tap_ncols tuple: active (prefix) column count of each fused tap
    """
    kmax = max(ks)
    ncols = len(ks) * CO_PAD
    order = sorted(range(len(ks)), key=lambda i: -ks[i])      # descending K
    w_fused = jnp.zeros((kmax, D, ncols), jnp.float32)
    shift_fused = jnp.zeros((1, ncols), jnp.float32)
    col_off = [0] * len(ks)
    for slot, i in enumerate(order):
        w, b, g, bt, rm, rv = params[i]
        K = ks[i]
        scale = g / jnp.sqrt(rv + BN_EPS)
        w_folded = w * scale[:, None, None]                   # fold BN scale into weights
        shift = bt + scale * (b - rm)                         # fold conv bias + BN shift
        w_kdc = jnp.transpose(w_folded, (2, 1, 0))            # (Co,D,K) -> (K,D,Co)
        j0 = (kmax - K) // 2                                  # center branch taps inside Kmax
        c0 = slot * CO_PAD
        col_off[i] = c0
        w_fused = w_fused.at[j0:j0 + K, :, c0:c0 + Co].set(w_kdc)
        shift_fused = shift_fused.at[0, c0:c0 + Co].set(shift)
    tap_ncols = []
    for j in range(kmax):
        cnt = sum(1 for i in order
                  if (kmax - ks[i]) // 2 <= j < (kmax - ks[i]) // 2 + ks[i])
        tap_ncols.append(cnt * CO_PAD)
    return w_fused.astype(jnp.bfloat16), shift_fused, tuple(col_off), tuple(tap_ncols)


def _pick_block_batch(B, Tp8):
    """Power-of-two divisor of B (<=8); keep >=2 grid steps when B>=2 (v7x has 2 TCs)
    and keep the double-buffered bf16 x block under ~6 MiB (v5e scoped VMEM)."""
    cands = [d for d in (8, 4, 2, 1) if B % d == 0]
    bb = next((d for d in cands if B // d >= 2), 1)
    while bb > 1 and 2 * bb * Tp8 * D * 2 > 6 * 1024 * 1024:
        bb //= 2
    return bb


def structure_cnn_forward(x_btd, params, ks=Ks):
    """Fused Structure_CNN forward. x: (B, T, D). Returns (B, Co * len(ks))."""
    B, T, Din = x_btd.shape
    assert Din == D
    assert all(k % 2 == 1 for k in ks)
    kmax = max(ks)
    pad = (kmax - 1) // 2
    Tp = T + kmax - 1
    Tp8 = ((Tp + 7) // 8) * 8                                  # sublane-aligned padded length

    w_fused, shift_fused, col_off, tap_ncols = _build_fused_params(params, ks)
    ncols = w_fused.shape[-1]

    # One shared bf16 same-pad of x for all branches (+ zero tail rows to Tp8); the
    # batch/time axes are merged OUTSIDE the kernel (free row-major reshape) so the
    # kernel matmul M dim is Bb*Tp8.
    # TODO(synk): for very short T the convert+pad HBM pass could be folded into the
    # kernel by masking the Kmax-1 edge rows in VMEM instead.
    x_pad = jnp.pad(x_btd.astype(jnp.bfloat16),
                    ((0, 0), (pad, pad + (Tp8 - Tp)), (0, 0)))
    x_flat = x_pad.reshape(B * Tp8, D)

    Bb = _pick_block_batch(B, Tp8)

    out = pl.pallas_call(
        partial(_fused_conv_kernel, T=T, Tp8=Tp8, Bb=Bb, tap_ncols=tap_ncols),
        out_shape=jax.ShapeDtypeStruct((B, 1, ncols), jnp.float32),
        grid=(B // Bb,),
        in_specs=[
            pl.BlockSpec((Bb * Tp8, D), lambda g: (g, 0)),
            # Grid-invariant operands: constant index map -> DMA'd once, never refetched.
            pl.BlockSpec((kmax, D, ncols), lambda g: (0, 0, 0)),
            pl.BlockSpec((1, ncols), lambda g: (0, 0)),
        ],
        out_specs=pl.BlockSpec((Bb, 1, ncols), lambda g: (g, 0, 0)),
        compiler_params=pltpu.CompilerParams(
            dimension_semantics=("parallel",)),
    )(x_flat, w_fused, shift_fused)

    out = out.reshape(B, ncols)
    # The kernel packs branches in descending-K column order (needed for the
    # zero-column skipping); re-emit the real Co channels in Ks order as torch.cat
    # does.  Three tiny B x Co slices -> one fused XLA op; kept outside the kernel so
    # every in-kernel slice stays lane-aligned.
    return jnp.concatenate(
        [out[:, col_off[i]:col_off[i] + Co] for i in range(len(ks))], axis=1)


def _reference_forward(x_btd, params, ks=Ks):
    """Pure-JAX reference (lax conv), using the same bf16-rounded x / folded weights."""
    x_f32 = x_btd.astype(jnp.bfloat16).astype(jnp.float32)
    x_bdt = jnp.transpose(x_f32, (0, 2, 1))                    # (B, D, T) as in PyTorch
    outs = []
    for (w, b, g, bt, rm, rv), K in zip(params, ks):
        scale = g / jnp.sqrt(rv + BN_EPS)
        w_folded = (w * scale[:, None, None]).astype(jnp.bfloat16).astype(jnp.float32)
        shift = bt + scale * (b - rm)
        pad = (K - 1) // 2
        z = jax.lax.conv_general_dilated(
            x_bdt, w_folded, window_strides=(1,), padding=[(pad, pad)],
            dimension_numbers=("NCH", "OIH", "NCH"),
            precision=jax.lax.Precision.HIGHEST,
        ) + shift[None, :, None]
        z = jnp.maximum(z, 0.0)
        outs.append(jnp.max(z, axis=2))
    return jnp.concatenate(outs, axis=1)


if __name__ == "__main__":
    key = jax.random.PRNGKey(0)
    B, T = 2, 16

    keys = jax.random.split(key, 1 + 6 * len(Ks))
    x = jax.random.normal(keys[0], (B, T, D), jnp.float32)

    params = []
    for i, K in enumerate(Ks):
        kw, kb, kg, kbeta, krm, krv = keys[1 + 6 * i: 1 + 6 * (i + 1)]
        gain = jnp.sqrt(2.0)                                  # xavier_uniform, relu gain
        bound = gain * jnp.sqrt(6.0 / (D * K + Co * K))
        weight = jax.random.uniform(kw, (Co, D, K), jnp.float32, -bound, bound)
        bias = jax.random.uniform(kb, (Co,), jnp.float32, -0.1, 0.1)
        gamma = 1.0 + 0.1 * jax.random.normal(kg, (Co,), jnp.float32)
        beta = 0.1 * jax.random.normal(kbeta, (Co,), jnp.float32)
        running_mean = 0.05 * jax.random.normal(krm, (Co,), jnp.float32)
        running_var = jax.random.uniform(krv, (Co,), jnp.float32, 0.5, 1.5)
        params.append((weight, bias, gamma, beta, running_mean, running_var))

    result = jax.block_until_ready(jax.jit(structure_cnn_forward)(x, params))
    assert result.shape == (B, Co * len(Ks)), result.shape

    ref = jax.block_until_ready(_reference_forward(x, params))
    if not jnp.allclose(result, ref, atol=1e-3, rtol=1e-3):
        err = float(jnp.max(jnp.abs(result - ref)))
        raise AssertionError(
            f"Pallas kernel output mismatch vs JAX reference (max abs err {err})")

    print("KERNEL_OK")
</pallas_src>

<mosaic_0001>
module attributes {stable_mosaic.version = 11 : i64} {
  func.func @_fused_conv_kernel(%arg0: i32, %arg1: memref<24x1024xbf16, #tpu.memory_space<vmem>>, %arg2: memref<5x1024x384xbf16, #tpu.memory_space<vmem>>, %arg3: memref<1x384xf32, #tpu.memory_space<vmem>>, %arg4: memref<1x1x384xf32, #tpu.memory_space<vmem>>) attributes {dimension_semantics = [#tpu.dimension_semantics<parallel>], iteration_bounds = array<i64: 2>, scalar_prefetch = 0 : i64, scratch_operands = 0 : i64, tpu.core_type = #tpu.core_type<tc>, window_params = [{transform_indices = @transform_0, window_bounds = array<i64: 24, 1024>}, {pipeline_mode = #tpu.pipeline_mode<synchronous>, transform_indices = @transform_1, window_bounds = array<i64: 5, 1024, 384>}, {pipeline_mode = #tpu.pipeline_mode<synchronous>, transform_indices = @transform_2, window_bounds = array<i64: 1, 384>}, {transform_indices = @transform_3, window_bounds = array<i64: 1, 1, 384>}]} {
    %c0 = arith.constant 0 : index
    %c0_0 = arith.constant 0 : index
    %0 = vector.load %arg1[%c0, %c0_0] : memref<24x1024xbf16, #tpu.memory_space<vmem>>, vector<24x1024xbf16>
    %c0_1 = arith.constant 0 : index
    %c0_2 = arith.constant 0 : index
    %c0_3 = arith.constant 0 : index
    %1 = vector.load %arg2[%c0_1, %c0_2, %c0_3] : memref<5x1024x384xbf16, #tpu.memory_space<vmem>>, vector<1x1024x128xbf16>
    %2 = vector.shape_cast %1 : vector<1x1024x128xbf16> to vector<1024x128xbf16>
    %cst = arith.constant dense<0.000000e+00> : vector<24x128xf32>
    %3 = tpu.matmul %0, %2, %cst {dimension_numbers = #tpu.dot_dimension_numbers<[1], [0], [0], [1], [0, 0, 1, 1], [], []>} : vector<24x1024xbf16>, vector<1024x128xbf16>, vector<24x128xf32> -> vector<24x128xf32>
    %c1 = arith.constant 1 : index
    %c0_4 = arith.constant 0 : index
    %c0_5 = arith.constant 0 : index
    %4 = vector.load %arg2[%c1, %c0_4, %c0_5] : memref<5x1024x384xbf16, #tpu.memory_space<vmem>>, vector<1x1024x256xbf16>
    %5 = vector.shape_cast %4 : vector<1x1024x256xbf16> to vector<1024x256xbf16>
    %cst_6 = arith.constant dense<0.000000e+00> : vector<24x256xf32>
    %6 = tpu.matmul %0, %5, %cst_6 {dimension_numbers = #tpu.dot_dimension_numbers<[1], [0], [0], [1], [0, 0, 1, 1], [], []>} : vector<24x1024xbf16>, vector<1024x256xbf16>, vector<24x256xf32> -> vector<24x256xf32>
    %c23_i32 = arith.constant 23 : i32
    %7 = tpu.dynamic_rotate %6 by %c23_i32 dim 0 : vector<24x256xf32>, i32 -> vector<24x256xf32>
    %8 = vector.extract_strided_slice %7 {offsets = [0, 0], sizes = [24, 128], strides = [1, 1]} : vector<24x256xf32> to vector<24x128xf32>
    %9 = arith.addf %3, %8 : vector<24x128xf32>
    %10 = vector.extract_strided_slice %7 {offsets = [0, 128], sizes = [24, 128], strides = [1, 1]} : vector<24x256xf32> to vector<24x128xf32>
    %c2 = arith.constant 2 : index
    %c0_7 = arith.constant 0 : index
    %c0_8 = arith.constant 0 : index
    %11 = vector.load %arg2[%c2, %c0_7, %c0_8] : memref<5x1024x384xbf16, #tpu.memory_space<vmem>>, vector<1x1024x384xbf16>
    %12 = vector.shape_cast %11 : vector<1x1024x384xbf16> to vector<1024x384xbf16>
    %cst_9 = arith.constant dense<0.000000e+00> : vector<24x384xf32>
    %13 = tpu.matmul %0, %12, %cst_9 {dimension_numbers = #tpu.dot_dimension_numbers<[1], [0], [0], [1], [0, 0, 1, 1], [], []>} : vector<24x1024xbf16>, vector<1024x384xbf16>, vector<24x384xf32> -> vector<24x384xf32>
    %c22_i32 = arith.constant 22 : i32
    %14 = tpu.dynamic_rotate %13 by %c22_i32 dim 0 : vector<24x384xf32>, i32 -> vector<24x384xf32>
    %15 = vector.extract_strided_slice %14 {offsets = [0, 0], sizes = [24, 128], strides = [1, 1]} : vector<24x384xf32> to vector<24x128xf32>
    %16 = arith.addf %9, %15 : vector<24x128xf32>
    %17 = vector.extract_strided_slice %14 {offsets = [0, 128], sizes = [24, 128], strides = [1, 1]} : vector<24x384xf32> to vector<24x128xf32>
    %18 = arith.addf %10, %17 : vector<24x128xf32>
    %19 = vector.extract_strided_slice %14 {offsets = [0, 256], sizes = [24, 128], strides = [1, 1]} : vector<24x384xf32> to vector<24x128xf32>
    %c3 = arith.constant 3 : index
    %c0_10 = arith.constant 0 : index
    %c0_11 = arith.constant 0 : index
    %20 = vector.load %arg2[%c3, %c0_10, %c0_11] : memref<5x1024x384xbf16, #tpu.memory_space<vmem>>, vector<1x1024x256xbf16>
    %21 = vector.shape_cast %20 : vector<1x1024x256xbf16> to vector<1024x256xbf16>
    %cst_12 = arith.constant dense<0.000000e+00> : vector<24x256xf32>
    %22 = tpu.matmul %0, %21, %cst_12 {dimension_numbers = #tpu.dot_dimension_numbers<[1], [0], [0], [1], [0, 0, 1, 1], [], []>} : vector<24x1024xbf16>, vector<1024x256xbf16>, vector<24x256xf32> -> vector<24x256xf32>
    %c21_i32 = arith.constant 21 : i32
    %23 = tpu.dynamic_rotate %22 by %c21_i32 dim 0 : vector<24x256xf32>, i32 -> vector<24x256xf32>
    %24 = vector.extract_strided_slice %23 {offsets = [0, 0], sizes = [24, 128], strides = [1, 1]} : vector<24x256xf32> to vector<24x128xf32>
    %25 = arith.addf %16, %24 : vector<24x128xf32>
    %26 = vector.extract_strided_slice %23 {offsets = [0, 128], sizes = [24, 128], strides = [1, 1]} : vector<24x256xf32> to vector<24x128xf32>
    %27 = arith.addf %18, %26 : vector<24x128xf32>
    %c4 = arith.constant 4 : index
    %c0_13 = arith.constant 0 : index
    %c0_14 = arith.constant 0 : index
    %28 = vector.load %arg2[%c4, %c0_13, %c0_14] : memref<5x1024x384xbf16, #tpu.memory_space<vmem>>, vector<1x1024x128xbf16>
    %29 = vector.shape_cast %28 : vector<1x1024x128xbf16> to vector<1024x128xbf16>
    %cst_15 = arith.constant dense<0.000000e+00> : vector<24x128xf32>
    %30 = tpu.matmul %0, %29, %cst_15 {dimension_numbers = #tpu.dot_dimension_numbers<[1], [0], [0], [1], [0, 0, 1, 1], [], []>} : vector<24x1024xbf16>, vector<1024x128xbf16>, vector<24x128xf32> -> vector<24x128xf32>
    %c20_i32 = arith.constant 20 : i32
    %31 = tpu.dynamic_rotate %30 by %c20_i32 dim 0 : vector<24x128xf32>, i32 -> vector<24x128xf32>
    %32 = arith.addf %25, %31 : vector<24x128xf32>
    %33 = tpu.iota {dimensions = array<i32: 0>} : vector<24x128xi32>
    %c16_i32 = arith.constant 16 : i32
    %34 = vector.broadcast %c16_i32 : i32 to vector<24x128xi32>
    %35 = arith.cmpi slt, %33, %34 : vector<24x128xi32>
    %36 = vector.shape_cast %35 : vector<24x128xi1> to vector<1x24x128xi1>
    %37 = vector.shape_cast %32 : vector<24x128xf32> to vector<1x24x128xf32>
    %cst_16 = arith.constant 0xFF800000 : f32
    %38 = vector.broadcast %cst_16 : f32 to vector<1x24x128xf32>
    %39 = arith.select %36, %37, %38 : vector<1x24x128xi1>, vector<1x24x128xf32>
    %cst_17 = arith.constant dense<0xFF800000> : vector<1x128xf32>
    %40 = vector.multi_reduction <maximumf>, %39, %cst_17 [1] : vector<1x24x128xf32> to vector<1x128xf32>
    %41 = vector.shape_cast %40 : vector<1x128xf32> to vector<1x1x128xf32>
    %c0_18 = arith.constant 0 : index
    %c0_19 = arith.constant 0 : index
    %42 = vector.load %arg3[%c0_18, %c0_19] : memref<1x384xf32, #tpu.memory_space<vmem>>, vector<1x128xf32>
    %43 = vector.shape_cast %42 : vector<1x128xf32> to vector<1x1x128xf32>
    %44 = arith.addf %41, %43 : vector<1x1x128xf32>
    %cst_20 = arith.constant 0.000000e+00 : f32
    %45 = vector.broadcast %cst_20 : f32 to vector<1x1x128xf32>
    %46 = arith.maximumf %44, %45 : vector<1x1x128xf32>
    %47 = vector.shape_cast %27 : vector<24x128xf32> to vector<1x24x128xf32>
    %cst_21 = arith.constant 0xFF800000 : f32
    %48 = vector.broadcast %cst_21 : f32 to vector<1x24x128xf32>
    %49 = arith.select %36, %47, %48 : vector<1x24x128xi1>, vector<1x24x128xf32>
    %cst_22 = arith.constant dense<0xFF800000> : vector<1x128xf32>
    %50 = vector.multi_reduction <maximumf>, %49, %cst_22 [1] : vector<1x24x128xf32> to vector<1x128xf32>
    %51 = vector.shape_cast %50 : vector<1x128xf32> to vector<1x1x128xf32>
    %c0_23 = arith.constant 0 : index
    %c128 = arith.constant 128 : index
    %52 = vector.load %arg3[%c0_23, %c128] : memref<1x384xf32, #tpu.memory_space<vmem>>, vector<1x128xf32>
    %53 = vector.shape_cast %52 : vector<1x128xf32> to vector<1x1x128xf32>
    %54 = arith.addf %51, %53 : vector<1x1x128xf32>
    %cst_24 = arith.constant 0.000000e+00 : f32
    %55 = vector.broadcast %cst_24 : f32 to vector<1x1x128xf32>
    %56 = arith.maximumf %54, %55 : vector<1x1x128xf32>
    %57 = vector.shape_cast %19 : vector<24x128xf32> to vector<1x24x128xf32>
    %cst_25 = arith.constant 0xFF800000 : f32
    %58 = vector.broadcast %cst_25 : f32 to vector<1x24x128xf32>
    %59 = arith.select %36, %57, %58 : vector<1x24x128xi1>, vector<1x24x128xf32>
    %cst_26 = arith.constant dense<0xFF800000> : vector<1x128xf32>
    %60 = vector.multi_reduction <maximumf>, %59, %cst_26 [1] : vector<1x24x128xf32> to vector<1x128xf32>
    %61 = vector.shape_cast %60 : vector<1x128xf32> to vector<1x1x128xf32>
    %c0_27 = arith.constant 0 : index
    %c256 = arith.constant 256 : index
    %62 = vector.load %arg3[%c0_27, %c256] : memref<1x384xf32, #tpu.memory_space<vmem>>, vector<1x128xf32>
    %63 = vector.shape_cast %62 : vector<1x128xf32> to vector<1x1x128xf32>
    %64 = arith.addf %61, %63 : vector<1x1x128xf32>
    %cst_28 = arith.constant 0.000000e+00 : f32
    %65 = vector.broadcast %cst_28 : f32 to vector<1x1x128xf32>
    %66 = arith.maximumf %64, %65 : vector<1x1x128xf32>
    %67 = tpu.concatenate %46, %56, %66 in 2 : vector<1x1x128xf32>, vector<1x1x128xf32>, vector<1x1x128xf32> -> vector<1x1x384xf32>
    %c0_29 = arith.constant 0 : index
    %c0_30 = arith.constant 0 : index
    %c0_31 = arith.constant 0 : index
    %68 = vector.load %arg4[%c0_29, %c0_30, %c0_31] : memref<1x1x384xf32, #tpu.memory_space<vmem>>, vector<1x1x384xf32>
    tpu.vector_store %arg4[%c0_29, %c0_30, %c0_31], %67 {strides = array<i32>} : memref<1x1x384xf32, #tpu.memory_space<vmem>>, vector<1x1x384xf32>,
    return
  }
  func.func @transform_0(%arg0: i32) -> (i32, i32) {
    %c0_i32 = arith.constant 0 : i32
    %c0_i32_0 = arith.constant 0 : i32
    return %arg0, %c0_i32 : i32, i32
  }
  func.func @transform_1(%arg0: i32) -> (i32, i32, i32) {
    %c0_i32 = arith.constant 0 : i32
    %c0_i32_0 = arith.constant 0 : i32
    %c0_i32_1 = arith.constant 0 : i32
    %c0_i32_2 = arith.constant 0 : i32
    return %c0_i32, %c0_i32_0, %c0_i32_1 : i32, i32, i32
  }
  func.func @transform_2(%arg0: i32) -> (i32, i32) {
    %c0_i32 = arith.constant 0 : i32
    %c0_i32_0 = arith.constant 0 : i32
    %c0_i32_1 = arith.constant 0 : i32
    return %c0_i32, %c0_i32_0 : i32, i32
  }
  func.func @transform_3(%arg0: i32) -> (i32, i32, i32) {
    %c0_i32 = arith.constant 0 : i32
    %c0_i32_0 = arith.constant 0 : i32
    %c0_i32_1 = arith.constant 0 : i32
    return %arg0, %c0_i32, %c0_i32_0 : i32, i32, i32
  }
}

</mosaic_0001>

<llo_original>
// kernel: structure_cnn_forward.1
$region0: #{structure_cnn_forward.1}
  #allocation0 [shape = 'u32[]', space=smem, size = 0x4, offset = 0x4, fixed_abs, tag = 'smem constant byte address 0x4 - core index']
  #allocation1 [shape = 'u32[144,128]{1,0:T(1,128)}', space=vmem, size = 0x12000, scoped, tag = 'internal scratch']
  %s0 = inlined_call_operand.vmem [shape: bf16[48,1024], index: 0, kind: input, shape index: {}]
  %s1 = inlined_call_operand.vmem [shape: bf16[5,1024,384], index: 1, kind: input, shape index: {}]
  %s2 = inlined_call_operand.vmem [shape: f32[1,384], index: 2, kind: input, shape index: {}]
  %s3 = inlined_call_operand.vmem [shape: f32[2,1,384], index: 3, kind: output, shape index: {}]
  %s4 = sld [smem:[#allocation0]]
  $region45: #{structure_cnn_forward.1} parent=0
    _
  %s6 = ssub.s32 1, %s4
  %s7 = scalar_select 0, %s6, %s4
  loop: start=0, step=1, limit=4
  $region2: #{structure_cnn_forward.1} parent=0 // loop_pre_header
    _
  $region3: #{structure_cnn_forward.1} parent=0 // loop_header
    %s9 = sphi 0, %s13
    %p10 = scmp.ge.s32.totalorder %s9, 4
    %s19 = sphi 0, %s21
    %s22 = sphi 0, %s19
    %s23 = sphi 0, %s22
    %s39 = sphi 0, %s23
    %s43 = sphi 0, %s43
    %s45 = sphi 0, %s43
    %s46 = sphi 0, %s45
    %s60 = sphi 0, %s46
    %s64 = sphi 0, %s64
    %s66 = sphi 0, %s64
    %s67 = sphi 0, %s66
    %s81 = sphi 0, %s67
    %s87 = sphi 0, %s89
    %s90 = sphi 0, %s87
    %s91 = sphi 0, %s90
    %s107 = sphi 0, %s91
  $region4: #{structure_cnn_forward.1} parent=0 // loop_header_branch
    %12 = sbr.rel (%p10) target = $region8
  $region5: #{structure_cnn_forward.1} parent=0 // loop_body
    %s14 = ssub.s32 %s9, 1
    %s15 = ssub.s32 %s9, 2
    %s16 = sadd.s32 %s9, 1
    %s17 = ssub.s32 %s9, %s16
    %p18 = scmp.eq.s32.totalorder %s17, 0
    %s20 = sadd.s32 %s19, 1
    %s21 = scalar_select %p18, %s19, %s20
    %p24 = pneg %p18
    %p25 = scmp.eq.s32.totalorder %s9, 1
    %p26 = por %p24, %p25
    %p27 = scmp.ne.s32.totalorder %s19, %s22
    %p28 = scmp.eq.s32.totalorder %s9, 0
    %p29 = por %p27, %p28
    %p30 = scmp.ne.s32.totalorder %s19, %s22
    %p31 = scmp.eq.s32.totalorder %s14, 1
    %p32 = por %p30, %p31
    %p33 = scmp.ne.s32.totalorder %s22, %s23
    %p34 = scmp.eq.s32.totalorder %s14, 0
    %p35 = por %p33, %p34
    %p36 = scmp.ne.s32.totalorder %s22, %s23
    %p37 = scmp.eq.s32.totalorder %s15, 1
    %p38 = por %p36, %p37
    %p40 = scmp.ne.s32.totalorder %s23, %s39
    %p41 = scmp.eq.s32.totalorder %s15, 0
    %p42 = por %p40, %p41
    %s44 = sadd.s32 %s43, 1
    %p47 = scmp.eq.s32.totalorder %s9, 1
    %p48 = scmp.ne.s32.totalorder %s43, %s45
    %p49 = scmp.eq.s32.totalorder %s9, 0
    %p50 = por %p48, %p49
    %p51 = scmp.ne.s32.totalorder %s43, %s45
    %p52 = scmp.eq.s32.totalorder %s14, 1
    %p53 = por %p51, %p52
    %p54 = scmp.ne.s32.totalorder %s45, %s46
    %p55 = scmp.eq.s32.totalorder %s14, 0
    %p56 = por %p54, %p55
    %p57 = scmp.ne.s32.totalorder %s45, %s46
    %p58 = scmp.eq.s32.totalorder %s15, 1
    %p59 = por %p57, %p58
    %p61 = scmp.ne.s32.totalorder %s46, %s60
    %p62 = scmp.eq.s32.totalorder %s15, 0
    %p63 = por %p61, %p62
    %s65 = sadd.s32 %s64, 1
    %p68 = scmp.eq.s32.totalorder %s9, 1
    %p69 = scmp.ne.s32.totalorder %s64, %s66
    %p70 = scmp.eq.s32.totalorder %s9, 0
    %p71 = por %p69, %p70
    %p72 = scmp.ne.s32.totalorder %s64, %s66
    %p73 = scmp.eq.s32.totalorder %s14, 1
    %p74 = por %p72, %p73
    %p75 = scmp.ne.s32.totalorder %s66, %s67
    %p76 = scmp.eq.s32.totalorder %s14, 0
    %p77 = por %p75, %p76
    %p78 = scmp.ne.s32.totalorder %s66, %s67
    %p79 = scmp.eq.s32.totalorder %s15, 1
    %p80 = por %p78, %p79
    %p82 = scmp.ne.s32.totalorder %s67, %s81
    %p83 = scmp.eq.s32.totalorder %s15, 0
    %p84 = por %p82, %p83
    %s85 = ssub.s32 %s9, %s16
    %p86 = scmp.eq.s32.totalorder %s85, 0
    %s88 = sadd.s32 %s87, 1
    %s89 = scalar_select %p86, %s87, %s88
    %p92 = pneg %p86
    %p93 = scmp.eq.s32.totalorder %s9, 1
    %p94 = por %p92, %p93
    %p95 = scmp.ne.s32.totalorder %s87, %s90
    %p96 = scmp.eq.s32.totalorder %s9, 0
    %p97 = por %p95, %p96
    %p98 = scmp.ne.s32.totalorder %s87, %s90
    %p99 = scmp.eq.s32.totalorder %s14, 1
    %p100 = por %p98, %p99
    %p101 = scmp.ne.s32.totalorder %s90, %s91
    %p102 = scmp.eq.s32.totalorder %s14, 0
    %p103 = por %p101, %p102
    %p104 = scmp.ne.s32.totalorder %s90, %s91
    %p105 = scmp.eq.s32.totalorder %s15, 1
    %p106 = por %p104, %p105
    %p108 = scmp.ne.s32.totalorder %s91, %s107
    %p109 = scmp.eq.s32.totalorder %s15, 0
    %p110 = por %p108, %p109
    %p111 = scmp.le.s32.totalorder 1, %s9
    %p112 = scmp.lt.s32.totalorder %s9, 3
    %p113 = pnand %p111, %p112
    %p114 = pneg %p113
    // Predicated region
    $region9: #{structure_cnn_forward.1} parent=5 // pred_check
      _
    $region10: #{structure_cnn_forward.1} parent=5 // pred_check_branch
      %116 = sbr.rel (%p113) target = $region12
    $region11: #{structure_cnn_forward.1} parent=5 // pred_region
      %s117 = ssub.s32 %s9, 1
      // Predicated region
      $region13: #{structure_cnn_forward.1} parent=11 // pred_check
        %p118 = pneg %p56
      $region14: #{structure_cnn_forward.1} parent=11 // pred_check_branch
        %120 = sbr.rel (%p118) target = $region16
      $region15: #{structure_cnn_forward.1} parent=11 // pred_region
        _
      $region16: #{structure_cnn_forward.1} parent=11 // pred_fallthru
        _
      // Predicated region
      $region17: #{structure_cnn_forward.1} parent=11 // pred_check
        %p121 = pneg %p77
      $region18: #{structure_cnn_forward.1} parent=11 // pred_check_branch
        %123 = sbr.rel (%p121) target = $region20
      $region19: #{structure_cnn_forward.1} parent=11 // pred_region
        _
      $region20: #{structure_cnn_forward.1} parent=11 // pred_fallthru
        _
    $region12: #{structure_cnn_forward.1} parent=5 // pred_fallthru
      _
    %p124 = scmp.lt.s32.totalorder %s9, 2
    // Predicated region
    $region21: #{structure_cnn_forward.1} parent=5 // pred_check
      %p125 = pneg %p124
    $region22: #{structure_cnn_forward.1} parent=5 // pred_check_branch
      %127 = sbr.rel (%p125) target = $region24
    $region23: #{structure_cnn_forward.1} parent=5 // pred_region
      // Predicated region
      $region25: #{structure_cnn_forward.1} parent=23 // pred_check
        %p128 = pneg %p29
      $region26: #{structure_cnn_forward.1} parent=23 // pred_check_branch
        %130 = sbr.rel (%p128) target = $region28
      $region27: #{structure_cnn_forward.1} parent=23 // pred_region
        %s131 = smul.u32 3, %s9
        %p132 = scmp.lt.s32.totalorder %s131, 5
        %s133 = scalar_select %p132, %s131, 5
        %s134 = smul.addr %s133, 8
        %s135 = smul.addr %s134, 4
        %s136 = scalar_lea.vmem %s0, %s135
        %s137 = smul.u32 3, %s9
      $region28: #{structure_cnn_forward.1} parent=23 // pred_fallthru
        _
    $region24: #{structure_cnn_forward.1} parent=5 // pred_fallthru
      _
    %p138 = scmp.le.s32.totalorder 1, %s9
    %p139 = scmp.lt.s32.totalorder %s9, 3
    %p140 = pnand %p138, %p139
    %p141 = pneg %p140
    // Predicated region
    $region29: #{structure_cnn_forward.1} parent=5 // pred_check
      _
    $region30: #{structure_cnn_forward.1} parent=5 // pred_check_branch
      %143 = sbr.rel (%p140) target = $region32
    $region31: #{structure_cnn_forward.1} parent=5 // pred_region
      %s144 = ssub.s32 %s9, 1
      %s145 = smul.u32 3, %s14
      %p146 = scmp.lt.s32.totalorder %s145, 5
      %s147 = scalar_select %p146, %s145, 5
      %s148 = smul.addr %s147, 8
      %s149 = smul.addr %s148, 4
      %s150 = scalar_lea.vmem %s0, %s149
      %p151 = pneg %p35
      %p152 = pneg %p32
      %p153 = pneg %p56
      %p154 = pneg %p53
      %p155 = pneg %p77
      %p156 = pneg %p74
      %p157 = pneg %p103
      %p158 = pneg %p100
      %p159 = scmp.lt.s32.totalorder %s14, 1
      %s160 = scalar_select %p159, %s14, 1
      %s161 = smul.addr %s160, 3
      %s162 = scalar_lea.vmem %s3, %s161
      %s163 = smul.u32 3, %s14
      %p164 = scmp.lt.s32.totalorder %s163, 5
      %s165 = scalar_select %p164, %s163, 5
      %s166 = smul.addr %s165, 8
      %s167 = smul.addr %s166, 4
      %s168 = scalar_lea.vmem %s0, %s167
      %s169 = smul.u32 3, %s14
      %p170 = scmp.lt.s32.totalorder %s14, 1
      %s171 = scalar_select %p170, %s14, 1
      %s172 = smul.addr %s171, 3
      %s173 = scalar_lea.vmem %s3, %s172
      %v175 = vld [vmem:[%s168] sm:$0xff]
      %v176 = vld [vmem:[%s168 + $0x8] sm:$0xff]
      %v177 = vld [vmem:[%s168 + $0x10] sm:$0xff]
      %v178 = vld [vmem:[%s168 + $0x18] sm:$0xff]
      %v179 = vld [vmem:[%s168 + $0x20] sm:$0xff]
      %v180 = vld [vmem:[%s168 + $0x28] sm:$0xff]
      %v181 = vld [vmem:[%s168 + $0x30] sm:$0xff]
      %v182 = vld [vmem:[%s168 + $0x38] sm:$0xff]
      %v183 = vld [vmem:[%s168 + $0x40] sm:$0xff]
      %v184 = vld [vmem:[%s168 + $0x48] sm:$0xff]
      %v185 = vld [vmem:[%s168 + $0x50] sm:$0xff]
      %v186 = vld [vmem:[%s168 + $0x58] sm:$0xff]
      %v187 = vld [vmem:[%s1] sm:$0xf]
      %v188 = vld [vmem:[%s1 + $0xc] sm:$0xf]
      %v189 = vld [vmem:[%s1 + $0x18] sm:$0xf]
      %v190 = vld [vmem:[%s1 + $0x24] sm:$0xf]
      %v191 = vld [vmem:[%s1 + $0x30] sm:$0xf]
      %v192 = vld [vmem:[%s1 + $0x3c] sm:$0xf]
      %v193 = vld [vmem:[%s1 + $0x48] sm:$0xf]
      %v194 = vld [vmem:[%s1 + $0x54] sm:$0xf]
      %v195 = vld [vmem:[%s1 + $0x60] sm:$0xf]
      %v196 = vld [vmem:[%s1 + $0x6c] sm:$0xf]
      %v197 = vld [vmem:[%s1 + $0x78] sm:$0xf]
      %v198 = vld [vmem:[%s1 + $0x84] sm:$0xf]
      %v199 = vld [vmem:[%s1 + $0x90] sm:$0xf]
      %v200 = vld [vmem:[%s1 + $0x9c] sm:$0xf]
      %v201 = vld [vmem:[%s1 + $0xa8] sm:$0xf]
      %v202 = vld [vmem:[%s1 + $0xb4] sm:$0xf]
      %v203 = vld [vmem:[%s1 + $0xc0] sm:$0xf]
      %v204 = vld [vmem:[%s1 + $0xcc] sm:$0xf]
      %v205 = vld [vmem:[%s1 + $0xd8] sm:$0xf]
      %v206 = vld [vmem:[%s1 + $0xe4] sm:$0xf]
      %v207 = vld [vmem:[%s1 + $0xf0] sm:$0xf]
      %v208 = vld [vmem:[%s1 + $0xfc] sm:$0xf]
      %v209 = vld [vmem:[%s1 + $0x108] sm:$0xf]
      %v210 = vld [vmem:[%s1 + $0x114] sm:$0xf]
      %v211 = vld [vmem:[%s1 + $0x120] sm:$0xf]
      %v212 = vld [vmem:[%s1 + $0x12c] sm:$0xf]
      %v213 = vld [vmem:[%s1 + $0x138] sm:$0xf]
      %v214 = vld [vmem:[%s1 + $0x144] sm:$0xf]
      %v215 = vld [vmem:[%s1 + $0x150] sm:$0xf]
      %v216 = vld [vmem:[%s1 + $0x15c] sm:$0xf]
      %v217 = vld [vmem:[%s1 + $0x168] sm:$0xf]
      %v218 = vld [vmem:[%s1 + $0x174] sm:$0xf]
      %v219 = vld [vmem:[%s1 + $0x180] sm:$0xf]
      %v220 = vld [vmem:[%s1 + $0x18c] sm:$0xf]
      %v221 = vld [vmem:[%s1 + $0x198] sm:$0xf]
      %v222 = vld [vmem:[%s1 + $0x1a4] sm:$0xf]
      %v223 = vld [vmem:[%s1 + $0x1b0] sm:$0xf]
      %v224 = vld [vmem:[%s1 + $0x1bc] sm:$0xf]
      %v225 = vld [vmem:[%s1 + $0x1c8] sm:$0xf]
      %v226 = vld [vmem:[%s1 + $0x1d4] sm:$0xf]
      %v227 = vld [vmem:[%s1 + $0x1e0] sm:$0xf]
      %v228 = vld [vmem:[%s1 + $0x1ec] sm:$0xf]
      %v229 = vld [vmem:[%s1 + $0x1f8] sm:$0xf]
      %v230 = vld [vmem:[%s1 + $0x204] sm:$0xf]
      %v231 = vld [vmem:[%s1 + $0x210] sm:$0xf]
      %v232 = vld [vmem:[%s1 + $0x21c] sm:$0xf]
      %v233 = vld [vmem:[%s1 + $0x228] sm:$0xf]
      %v234 = vld [vmem:[%s1 + $0x234] sm:$0xf]
      %v235 = vld [vmem:[%s1 + $0x240] sm:$0xf]
      %v236 = vld [vmem:[%s1 + $0x24c] sm:$0xf]
      %v237 = vld [vmem:[%s1 + $0x258] sm:$0xf]
      %v238 = vld [vmem:[%s1 + $0x264] sm:$0xf]
      %v239 = vld [vmem:[%s1 + $0x270] sm:$0xf]
      %v240 = vld [vmem:[%s1 + $0x27c] sm:$0xf]
      %v241 = vld [vmem:[%s1 + $0x288] sm:$0xf]
      %v242 = vld [vmem:[%s1 + $0x294] sm:$0xf]
      %v243 = vld [vmem:[%s1 + $0x2a0] sm:$0xf]
      %v244 = vld [vmem:[%s1 + $0x2ac] sm:$0xf]
      %v245 = vld [vmem:[%s1 + $0x2b8] sm:$0xf]
      %v246 = vld [vmem:[%s1 + $0x2c4] sm:$0xf]
      %v247 = vld [vmem:[%s1 + $0x2d0] sm:$0xf]
      %v248 = vld [vmem:[%s1 + $0x2dc] sm:$0xf]
      %v249 = vld [vmem:[%s1 + $0x2e8] sm:$0xf]
      %v250 = vld [vmem:[%s1 + $0x2f4] sm:$0xf]
      %v251 = vld [vmem:[%s1 + $0x300] sm:$0xf]
      %v252 = vld [vmem:[%s1 + $0x30c] sm:$0xf]
      %v253 = vld [vmem:[%s1 + $0x318] sm:$0xf]
      %v254 = vld [vmem:[%s1 + $0x324] sm:$0xf]
      %v255 = vld [vmem:[%s1 + $0x330] sm:$0xf]
      %v256 = vld [vmem:[%s1 + $0x33c] sm:$0xf]
      %v257 = vld [vmem:[%s1 + $0x348] sm:$0xf]
      %v258 = vld [vmem:[%s1 + $0x354] sm:$0xf]
      %v259 = vld [vmem:[%s1 + $0x360] sm:$0xf]
      %v260 = vld [vmem:[%s1 + $0x36c] sm:$0xf]
      %v261 = vld [vmem:[%s1 + $0x378] sm:$0xf]
      %v262 = vld [vmem:[%s1 + $0x384] sm:$0xf]
      %v263 = vld [vmem:[%s1 + $0x390] sm:$0xf]
      %v264 = vld [vmem:[%s1 + $0x39c] sm:$0xf]
      %v265 = vld [vmem:[%s1 + $0x3a8] sm:$0xf]
      %v266 = vld [vmem:[%s1 + $0x3b4] sm:$0xf]
      %v267 = vld [vmem:[%s1 + $0x3c0] sm:$0xf]
      %v268 = vld [vmem:[%s1 + $0x3cc] sm:$0xf]
      %v269 = vld [vmem:[%s1 + $0x3d8] sm:$0xf]
      %v270 = vld [vmem:[%s1 + $0x3e4] sm:$0xf]
      %v271 = vld [vmem:[%s1 + $0x3f0] sm:$0xf]
      %v272 = vld [vmem:[%s1 + $0x3fc] sm:$0xf]
      %v273 = vld [vmem:[%s1 + $0x408] sm:$0xf]
      %v274 = vld [vmem:[%s1 + $0x414] sm:$0xf]
      %v275 = vld [vmem:[%s1 + $0x420] sm:$0xf]
      %v276 = vld [vmem:[%s1 + $0x42c] sm:$0xf]
      %v277 = vld [vmem:[%s1 + $0x438] sm:$0xf]
      %v278 = vld [vmem:[%s1 + $0x444] sm:$0xf]
      %v279 = vld [vmem:[%s1 + $0x450] sm:$0xf]
      %v280 = vld [vmem:[%s1 + $0x45c] sm:$0xf]
      %v281 = vld [vmem:[%s1 + $0x468] sm:$0xf]
      %v282 = vld [vmem:[%s1 + $0x474] sm:$0xf]
      %v283 = vld [vmem:[%s1 + $0x480] sm:$0xf]
      %v284 = vld [vmem:[%s1 + $0x48c] sm:$0xf]
      %v285 = vld [vmem:[%s1 + $0x498] sm:$0xf]
      %v286 = vld [vmem:[%s1 + $0x4a4] sm:$0xf]
      %v287 = vld [vmem:[%s1 + $0x4b0] sm:$0xf]
      %v288 = vld [vmem:[%s1 + $0x4bc] sm:$0xf]
      %v289 = vld [vmem:[%s1 + $0x4c8] sm:$0xf]
      %v290 = vld [vmem:[%s1 + $0x4d4] sm:$0xf]
      %v291 = vld [vmem:[%s1 + $0x4e0] sm:$0xf]
      %v292 = vld [vmem:[%s1 + $0x4ec] sm:$0xf]
      %v293 = vld [vmem:[%s1 + $0x4f8] sm:$0xf]
      %v294 = vld [vmem:[%s1 + $0x504] sm:$0xf]
      %v295 = vld [vmem:[%s1 + $0x510] sm:$0xf]
      %v296 = vld [vmem:[%s1 + $0x51c] sm:$0xf]
      %v297 = vld [vmem:[%s1 + $0x528] sm:$0xf]
      %v298 = vld [vmem:[%s1 + $0x534] sm:$0xf]
      %v299 = vld [vmem:[%s1 + $0x540] sm:$0xf]
      %v300 = vld [vmem:[%s1 + $0x54c] sm:$0xf]
      %v301 = vld [vmem:[%s1 + $0x558] sm:$0xf]
      %v302 = vld [vmem:[%s1 + $0x564] sm:$0xf]
      %v303 = vld [vmem:[%s1 + $0x570] sm:$0xf]
      %v304 = vld [vmem:[%s1 + $0x57c] sm:$0xf]
      %v305 = vld [vmem:[%s1 + $0x588] sm:$0xf]
      %v306 = vld [vmem:[%s1 + $0x594] sm:$0xf]
      %v307 = vld [vmem:[%s1 + $0x5a0] sm:$0xf]
      %v308 = vld [vmem:[%s1 + $0x5ac] sm:$0xf]
      %v309 = vld [vmem:[%s1 + $0x5b8] sm:$0xf]
      %v310 = vld [vmem:[%s1 + $0x5c4] sm:$0xf]
      %v311 = vld [vmem:[%s1 + $0x5d0] sm:$0xf]
      %v312 = vld [vmem:[%s1 + $0x5dc] sm:$0xf]
      %v313 = vld [vmem:[%s1 + $0x5e8] sm:$0xf]
      %v314 = vld [vmem:[%s1 + $0x5f4] sm:$0xf]
      %s315 = scalar_lea.vmem %s1, 1536
      %v316 = vld [vmem:[%s315] sm:$0xff]
      %v317 = vld [vmem:[%s315 + $0xc] sm:$0xff]
      %v318 = vld [vmem:[%s315 + $0x18] sm:$0xff]
      %v319 = vld [vmem:[%s315 + $0x24] sm:$0xff]
      %v320 = vld [vmem:[%s315 + $0x30] sm:$0xff]
      %v321 = vld [vmem:[%s315 + $0x3c] sm:$0xff]
      %v322 = vld [vmem:[%s315 + $0x48] sm:$0xff]
      %v323 = vld [vmem:[%s315 + $0x54] sm:$0xff]
      %v324 = vld [vmem:[%s315 + $0x60] sm:$0xff]
      %v325 = vld [vmem:[%s315 + $0x6c] sm:$0xff]
      %v326 = vld [vmem:[%s315 + $0x78] sm:$0xff]
      %v327 = vld [vmem:[%s315 + $0x84] sm:$0xff]
      %v328 = vld [vmem:[%s315 + $0x90] sm:$0xff]
      %v329 = vld [vmem:[%s315 + $0x9c] sm:$0xff]
      %v330 = vld [vmem:[%s315 + $0xa8] sm:$0xff]
      %v331 = vld [vmem:[%s315 + $0xb4] sm:$0xff]
      %v332 = vld [vmem:[%s315 + $0xc0] sm:$0xff]
      %v333 = vld [vmem:[%s315 + $0xcc] sm:$0xff]
      %v334 = vld [vmem:[%s315 + $0xd8] sm:$0xff]
      %v335 = vld [vmem:[%s315 + $0xe4] sm:$0xff]
      %v336 = vld [vmem:[%s315 + $0xf0] sm:$0xff]
      %v337 = vld [vmem:[%s315 + $0xfc] sm:$0xff]
      %v338 = vld [vmem:[%s315 + $0x108] sm:$0xff]
      %v339 = vld [vmem:[%s315 + $0x114] sm:$0xff]
      %v340 = vld [vmem:[%s315 + $0x120] sm:$0xff]
      %v341 = vld [vmem:[%s315 + $0x12c] sm:$0xff]
      %v342 = vld [vmem:[%s315 + $0x138] sm:$0xff]
      %v343 = vld [vmem:[%s315 + $0x144] sm:$0xff]
      %v344 = vld [vmem:[%s315 + $0x150] sm:$0xff]
      %v345 = vld [vmem:[%s315 + $0x15c] sm:$0xff]
      %v346 = vld [vmem:[%s315 + $0x168] sm:$0xff]
      %v347 = vld [vmem:[%s315 + $0x174] sm:$0xff]
      %v348 = vld [vmem:[%s315 + $0x180] sm:$0xff]
      %v349 = vld [vmem:[%s315 + $0x18c] sm:$0xff]
      %v350 = vld [vmem:[%s315 + $0x198] sm:$0xff]
      %v351 = vld [vmem:[%s315 + $0x1a4] sm:$0xff]
      %v352 = vld [vmem:[%s315 + $0x1b0] sm:$0xff]
      %v353 = vld [vmem:[%s315 + $0x1bc] sm:$0xff]
      %v354 = vld [vmem:[%s315 + $0x1c8] sm:$0xff]
      %v355 = vld [vmem:[%s315 + $0x1d4] sm:$0xff]
      %v356 = vld [vmem:[%s315 + $0x1e0] sm:$0xff]
      %v357 = vld [vmem:[%s315 + $0x1ec] sm:$0xff]
      %v358 = vld [vmem:[%s315 + $0x1f8] sm:$0xff]
      %v359 = vld [vmem:[%s315 + $0x204] sm:$0xff]
      %v360 = vld [vmem:[%s315 + $0x210] sm:$0xff]
      %v361 = vld [vmem:[%s315 + $0x21c] sm:$0xff]
      %v362 = vld [vmem:[%s315 + $0x228] sm:$0xff]
      %v363 = vld [vmem:[%s315 + $0x234] sm:$0xff]
      %v364 = vld [vmem:[%s315 + $0x240] sm:$0xff]
      %v365 = vld [vmem:[%s315 + $0x24c] sm:$0xff]
      %v366 = vld [vmem:[%s315 + $0x258] sm:$0xff]
      %v367 = vld [vmem:[%s315 + $0x264] sm:$0xff]
      %v368 = vld [vmem:[%s315 + $0x270] sm:$0xff]
      %v369 = vld [vmem:[%s315 + $0x27c] sm:$0xff]
      %v370 = vld [vmem:[%s315 + $0x288] sm:$0xff]
      %v371 = vld [vmem:[%s315 + $0x294] sm:$0xff]
      %v372 = vld [vmem:[%s315 + $0x2a0] sm:$0xff]
      %v373 = vld [vmem:[%s315 + $0x2ac] sm:$0xff]
      %v374 = vld [vmem:[%s315 + $0x2b8] sm:$0xff]
      %v375 = vld [vmem:[%s315 + $0x2c4] sm:$0xff]
      %v376 = vld [vmem:[%s315 + $0x2d0] sm:$0xff]
      %v377 = vld [vmem:[%s315 + $0x2dc] sm:$0xff]
      %v378 = vld [vmem:[%s315 + $0x2e8] sm:$0xff]
      %v379 = vld [vmem:[%s315 + $0x2f4] sm:$0xff]
      %v380 = vld [vmem:[%s315 + $0x300] sm:$0xff]
      %v381 = vld [vmem:[%s315 + $0x30c] sm:$0xff]
      %v382 = vld [vmem:[%s315 + $0x318] sm:$0xff]
      %v383 = vld [vmem:[%s315 + $0x324] sm:$0xff]
      %v384 = vld [vmem:[%s315 + $0x330] sm:$0xff]
      %v385 = vld [vmem:[%s315 + $0x33c] sm:$0xff]
      %v386 = vld [vmem:[%s315 + $0x348] sm:$0xff]
      %v387 = vld [vmem:[%s315 + $0x354] sm:$0xff]
      %v388 = vld [vmem:[%s315 + $0x360] sm:$0xff]
      %v389 = vld [vmem:[%s315 + $0x36c] sm:$0xff]
      %v390 = vld [vmem:[%s315 + $0x378] sm:$0xff]
      %v391 = vld [vmem:[%s315 + $0x384] sm:$0xff]
      %v392 = vld [vmem:[%s315 + $0x390] sm:$0xff]
      %v393 = vld [vmem:[%s315 + $0x39c] sm:$0xff]
      %v394 = vld [vmem:[%s315 + $0x3a8] sm:$0xff]
      %v395 = vld [vmem:[%s315 + $0x3b4] sm:$0xff]
      %v396 = vld [vmem:[%s315 + $0x3c0] sm:$0xff]
      %v397 = vld [vmem:[%s315 + $0x3cc] sm:$0xff]
      %v398 = vld [vmem:[%s315 + $0x3d8] sm:$0xff]
      %v399 = vld [vmem:[%s315 + $0x3e4] sm:$0xff]
      %v400 = vld [vmem:[%s315 + $0x3f0] sm:$0xff]
      %v401 = vld [vmem:[%s315 + $0x3fc] sm:$0xff]
      %v402 = vld [vmem:[%s315 + $0x408] sm:$0xff]
      %v403 = vld [vmem:[%s315 + $0x414] sm:$0xff]
      %v404 = vld [vmem:[%s315 + $0x420] sm:$0xff]
      %v405 = vld [vmem:[%s315 + $0x42c] sm:$0xff]
      %v406 = vld [vmem:[%s315 + $0x438] sm:$0xff]
      %v407 = vld [vmem:[%s315 + $0x444] sm:$0xff]
      %v408 = vld [vmem:[%s315 + $0x450] sm:$0xff]
      %v409 = vld [vmem:[%s315 + $0x45c] sm:$0xff]
      %v410 = vld [vmem:[%s315 + $0x468] sm:$0xff]
      %v411 = vld [vmem:[%s315 + $0x474] sm:$0xff]
      %v412 = vld [vmem:[%s315 + $0x480] sm:$0xff]
      %v413 = vld [vmem:[%s315 + $0x48c] sm:$0xff]
      %v414 = vld [vmem:[%s315 + $0x498] sm:$0xff]
      %v415 = vld [vmem:[%s315 + $0x4a4] sm:$0xff]
      %v416 = vld [vmem:[%s315 + $0x4b0] sm:$0xff]
      %v417 = vld [vmem:[%s315 + $0x4bc] sm:$0xff]
      %v418 = vld [vmem:[%s315 + $0x4c8] sm:$0xff]
      %v419 = vld [vmem:[%s315 + $0x4d4] sm:$0xff]
      %v420 = vld [vmem:[%s315 + $0x4e0] sm:$0xff]
      %v421 = vld [vmem:[%s315 + $0x4ec] sm:$0xff]
      %v422 = vld [vmem:[%s315 + $0x4f8] sm:$0xff]
      %v423 = vld [vmem:[%s315 + $0x504] sm:$0xff]
      %v424 = vld [vmem:[%s315 + $0x510] sm:$0xff]
      %v425 = vld [vmem:[%s315 + $0x51c] sm:$0xff]
      %v426 = vld [vmem:[%s315 + $0x528] sm:$0xff]
      %v427 = vld [vmem:[%s315 + $0x534] sm:$0xff]
      %v428 = vld [vmem:[%s315 + $0x540] sm:$0xff]
      %v429 = vld [vmem:[%s315 + $0x54c] sm:$0xff]
      %v430 = vld [vmem:[%s315 + $0x558] sm:$0xff]
      %v431 = vld [vmem:[%s315 + $0x564] sm:$0xff]
      %v432 = vld [vmem:[%s315 + $0x570] sm:$0xff]
      %v433 = vld [vmem:[%s315 + $0x57c] sm:$0xff]
      %v434 = vld [vmem:[%s315 + $0x588] sm:$0xff]
      %v435 = vld [vmem:[%s315 + $0x594] sm:$0xff]
      %v436 = vld [vmem:[%s315 + $0x5a0] sm:$0xff]
      %v437 = vld [vmem:[%s315 + $0x5ac] sm:$0xff]
      %v438 = vld [vmem:[%s315 + $0x5b8] sm:$0xff]
      %v439 = vld [vmem:[%s315 + $0x5c4] sm:$0xff]
      %v440 = vld [vmem:[%s315 + $0x5d0] sm:$0xff]
      %v441 = vld [vmem:[%s315 + $0x5dc] sm:$0xff]
      %v442 = vld [vmem:[%s315 + $0x5e8] sm:$0xff]
      %v443 = vld [vmem:[%s315 + $0x5f4] sm:$0xff]
      %v456 = vunpack.c.l.b16 %v175
      %v457 = vunpack.c.h.b16 %v175
      %v458 = vunpack.c.l.b16 %v176
      %v459 = vunpack.c.h.b16 %v176
      %v460 = vunpack.c.l.b16 %v177
      %v461 = vunpack.c.h.b16 %v177
      %v462 = vunpack.c.l.b16 %v178
      %v463 = vunpack.c.h.b16 %v178
      %v464 = vunpack.c.l.b16 %v179
      %v465 = vunpack.c.h.b16 %v179
      %v466 = vunpack.c.l.b16 %v180
      %v467 = vunpack.c.h.b16 %v180
      %v468 = vunpack.c.l.b16 %v181
      %v469 = vunpack.c.h.b16 %v181
      %v470 = vunpack.c.l.b16 %v182
      %v471 = vunpack.c.h.b16 %v182
      %v472 = vunpack.c.l.b16 %v183
      %v473 = vunpack.c.h.b16 %v183
      %v474 = vunpack.c.l.b16 %v184
      %v475 = vunpack.c.h.b16 %v184
      %v476 = vunpack.c.l.b16 %v185
      %v477 = vunpack.c.h.b16 %v185
      %v478 = vunpack.c.l.b16 %v186
      %v479 = vunpack.c.h.b16 %v186
      %v480 = vpack.c.b16 %v464, %v456
      %v481 = vpack.c.b16 %v465, %v457
      %v482 = vpack.c.b16 %v466, %v458
      %v483 = vpack.c.b16 %v467, %v459
      %v484 = vpack.c.b16 %v468, %v460
      %v485 = vpack.c.b16 %v469, %v461
      %v486 = vpack.c.b16 %v470, %v462
      %v487 = vpack.c.b16 %v471, %v463
      %v488 = vpack.c.b16 %v472, %v472
      %v489 = vpack.c.b16 %v473, %v473
      %v490 = vpack.c.b16 %v474, %v474
      %v491 = vpack.c.b16 %v475, %v475
      %v492 = vpack.c.b16 %v476, %v476
      %v493 = vpack.c.b16 %v477, %v477
      %v494 = vpack.c.b16 %v478, %v478
      %v495 = vpack.c.b16 %v479, %v479
      %v640 = vunpack.c.l.b16 %v316
      %v641 = vunpack.c.h.b16 %v316
      %v642 = vunpack.c.l.b16 %v317
      %v643 = vunpack.c.h.b16 %v317
      %v644 = vunpack.c.l.b16 %v318
      %v645 = vunpack.c.h.b16 %v318
      %v646 = vunpack.c.l.b16 %v319
      %v647 = vunpack.c.h.b16 %v319
      %v648 = vunpack.c.l.b16 %v320
      %v649 = vunpack.c.h.b16 %v320
      %v650 = vunpack.c.l.b16 %v321
      %v651 = vunpack.c.h.b16 %v321
      %v652 = vunpack.c.l.b16 %v322
      %v653 = vunpack.c.h.b16 %v322
      %v654 = vunpack.c.l.b16 %v323
      %v655 = vunpack.c.h.b16 %v323
      %v656 = vunpack.c.l.b16 %v324
      %v657 = vunpack.c.h.b16 %v324
      %v658 = vunpack.c.l.b16 %v325
      %v659 = vunpack.c.h.b16 %v325
      %v660 = vunpack.c.l.b16 %v326
      %v661 = vunpack.c.h.b16 %v326
      %v662 = vunpack.c.l.b16 %v327
      %v663 = vunpack.c.h.b16 %v327
      %v664 = vunpack.c.l.b16 %v328
      %v665 = vunpack.c.h.b16 %v328
      %v666 = vunpack.c.l.b16 %v329
      %v667 = vunpack.c.h.b16 %v329
      %v668 = vunpack.c.l.b16 %v330
      %v669 = vunpack.c.h.b16 %v330
      %v670 = vunpack.c.l.b16 %v331
      %v671 = vunpack.c.h.b16 %v331
      %v672 = vunpack.c.l.b16 %v332
      %v673 = vunpack.c.h.b16 %v332
      %v674 = vunpack.c.l.b16 %v333
      %v675 = vunpack.c.h.b16 %v333
      %v676 = vunpack.c.l.b16 %v334
      %v677 = vunpack.c.h.b16 %v334
      %v678 = vunpack.c.l.b16 %v335
      %v679 = vunpack.c.h.b16 %v335
      %v680 = vunpack.c.l.b16 %v336
      %v681 = vunpack.c.h.b16 %v336
      %v682 = vunpack.c.l.b16 %v337
      %v683 = vunpack.c.h.b16 %v337
      %v684 = vunpack.c.l.b16 %v338
      %v685 = vunpack.c.h.b16 %v338
      %v686 = vunpack.c.l.b16 %v339
      %v687 = vunpack.c.h.b16 %v339
      %v688 = vunpack.c.l.b16 %v340
      %v689 = vunpack.c.h.b16 %v340
      %v690 = vunpack.c.l.b16 %v341
      %v691 = vunpack.c.h.b16 %v341
      %v692 = vunpack.c.l.b16 %v342
      %v693 = vunpack.c.h.b16 %v342
      %v694 = vunpack.c.l.b16 %v343
      %v695 = vunpack.c.h.b16 %v343
      %v696 = vunpack.c.l.b16 %v344
      %v697 = vunpack.c.h.b16 %v344
      %v698 = vunpack.c.l.b16 %v345
      %v699 = vunpack.c.h.b16 %v345
      %v700 = vunpack.c.l.b16 %v346
      %v701 = vunpack.c.h.b16 %v346
      %v702 = vunpack.c.l.b16 %v347
      %v703 = vunpack.c.h.b16 %v347
      %v704 = vunpack.c.l.b16 %v348
      %v705 = vunpack.c.h.b16 %v348
      %v706 = vunpack.c.l.b16 %v349
      %v707 = vunpack.c.h.b16 %v349
      %v708 = vunpack.c.l.b16 %v350
      %v709 = vunpack.c.h.b16 %v350
      %v710 = vunpack.c.l.b16 %v351
      %v711 = vunpack.c.h.b16 %v351
      %v712 = vunpack.c.l.b16 %v352
      %v713 = vunpack.c.h.b16 %v352
      %v714 = vunpack.c.l.b16 %v353
      %v715 = vunpack.c.h.b16 %v353
      %v716 = vunpack.c.l.b16 %v354
      %v717 = vunpack.c.h.b16 %v354
      %v718 = vunpack.c.l.b16 %v355
      %v719 = vunpack.c.h.b16 %v355
      %v720 = vunpack.c.l.b16 %v356
      %v721 = vunpack.c.h.b16 %v356
      %v722 = vunpack.c.l.b16 %v357
      %v723 = vunpack.c.h.b16 %v357
      %v724 = vunpack.c.l.b16 %v358
      %v725 = vunpack.c.h.b16 %v358
      %v726 = vunpack.c.l.b16 %v359
      %v727 = vunpack.c.h.b16 %v359
      %v728 = vunpack.c.l.b16 %v360
      %v729 = vunpack.c.h.b16 %v360
      %v730 = vunpack.c.l.b16 %v361
      %v731 = vunpack.c.h.b16 %v361
      %v732 = vunpack.c.l.b16 %v362
      %v733 = vunpack.c.h.b16 %v362
      %v734 = vunpack.c.l.b16 %v363
      %v735 = vunpack.c.h.b16 %v363
      %v736 = vunpack.c.l.b16 %v364
      %v737 = vunpack.c.h.b16 %v364
      %v738 = vunpack.c.l.b16 %v365
      %v739 = vunpack.c.h.b16 %v365
      %v740 = vunpack.c.l.b16 %v366
      %v741 = vunpack.c.h.b16 %v366
      %v742 = vunpack.c.l.b16 %v367
      %v743 = vunpack.c.h.b16 %v367
      %v744 = vunpack.c.l.b16 %v368
      %v745 = vunpack.c.h.b16 %v368
      %v746 = vunpack.c.l.b16 %v369
      %v747 = vunpack.c.h.b16 %v369
      %v748 = vunpack.c.l.b16 %v370
      %v749 = vunpack.c.h.b16 %v370
      %v750 = vunpack.c.l.b16 %v371
      %v751 = vunpack.c.h.b16 %v371
      %v752 = vunpack.c.l.b16 %v372
      %v753 = vunpack.c.h.b16 %v372
      %v754 = vunpack.c.l.b16 %v373
      %v755 = vunpack.c.h.b16 %v373
      %v756 = vunpack.c.l.b16 %v374
      %v757 = vunpack.c.h.b16 %v374
      %v758 = vunpack.c.l.b16 %v375
      %v759 = vunpack.c.h.b16 %v375
      %v760 = vunpack.c.l.b16 %v376
      %v761 = vunpack.c.h.b16 %v376
      %v762 = vunpack.c.l.b16 %v377
      %v763 = vunpack.c.h.b16 %v377
      %v764 = vunpack.c.l.b16 %v378
      %v765 = vunpack.c.h.b16 %v378
      %v766 = vunpack.c.l.b16 %v379
      %v767 = vunpack.c.h.b16 %v379
      %v768 = vunpack.c.l.b16 %v380
      %v769 = vunpack.c.h.b16 %v380
      %v770 = vunpack.c.l.b16 %v381
      %v771 = vunpack.c.h.b16 %v381
      %v772 = vunpack.c.l.b16 %v382
      %v773 = vunpack.c.h.b16 %v382
      %v774 = vunpack.c.l.b16 %v383
      %v775 = vunpack.c.h.b16 %v383
      %v776 = vunpack.c.l.b16 %v384
      %v777 = vunpack.c.h.b16 %v384
      %v778 = vunpack.c.l.b16 %v385
      %v779 = vunpack.c.h.b16 %v385
      %v780 = vunpack.c.l.b16 %v386
      %v781 = vunpack.c.h.b16 %v386
      %v782 = vunpack.c.l.b16 %v387
      %v783 = vunpack.c.h.b16 %v387
      %v784 = vunpack.c.l.b16 %v388
      %v785 = vunpack.c.h.b16 %v388
      %v786 = vunpack.c.l.b16 %v389
      %v787 = vunpack.c.h.b16 %v389
      %v788 = vunpack.c.l.b16 %v390
      %v789 = vunpack.c.h.b16 %v390
      %v790 = vunpack.c.l.b16 %v391
      %v791 = vunpack.c.h.b16 %v391
      %v792 = vunpack.c.l.b16 %v392
      %v793 = vunpack.c.h.b16 %v392
      %v794 = vunpack.c.l.b16 %v393
      %v795 = vunpack.c.h.b16 %v393
      %v796 = vunpack.c.l.b16 %v394
      %v797 = vunpack.c.h.b16 %v394
      %v798 = vunpack.c.l.b16 %v395
      %v799 = vunpack.c.h.b16 %v395
      %v800 = vunpack.c.l.b16 %v396
      %v801 = vunpack.c.h.b16 %v396
      %v802 = vunpack.c.l.b16 %v397
      %v803 = vunpack.c.h.b16 %v397
      %v804 = vunpack.c.l.b16 %v398
      %v805 = vunpack.c.h.b16 %v398
      %v806 = vunpack.c.l.b16 %v399
      %v807 = vunpack.c.h.b16 %v399
      %v808 = vunpack.c.l.b16 %v400
      %v809 = vunpack.c.h.b16 %v400
      %v810 = vunpack.c.l.b16 %v401
      %v811 = vunpack.c.h.b16 %v401
      %v812 = vunpack.c.l.b16 %v402
      %v813 = vunpack.c.h.b16 %v402
      %v814 = vunpack.c.l.b16 %v403
      %v815 = vunpack.c.h.b16 %v403
      %v816 = vunpack.c.l.b16 %v404
      %v817 = vunpack.c.h.b16 %v404
      %v818 = vunpack.c.l.b16 %v405
      %v819 = vunpack.c.h.b16 %v405
      %v820 = vunpack.c.l.b16 %v406
      %v821 = vunpack.c.h.b16 %v406
      %v822 = vunpack.c.l.b16 %v407
      %v823 = vunpack.c.h.b16 %v407
      %v824 = vunpack.c.l.b16 %v408
      %v825 = vunpack.c.h.b16 %v408
      %v826 = vunpack.c.l.b16 %v409
      %v827 = vunpack.c.h.b16 %v409
      %v828 = vunpack.c.l.b16 %v410
      %v829 = vunpack.c.h.b16 %v410
      %v830 = vunpack.c.l.b16 %v411
      %v831 = vunpack.c.h.b16 %v411
      %v832 = vunpack.c.l.b16 %v412
      %v833 = vunpack.c.h.b16 %v412
      %v834 = vunpack.c.l.b16 %v413
      %v835 = vunpack.c.h.b16 %v413
      %v836 = vunpack.c.l.b16 %v414
      %v837 = vunpack.c.h.b16 %v414
      %v838 = vunpack.c.l.b16 %v415
      %v839 = vunpack.c.h.b16 %v415
      %v840 = vunpack.c.l.b16 %v416
      %v841 = vunpack.c.h.b16 %v416
      %v842 = vunpack.c.l.b16 %v417
      %v843 = vunpack.c.h.b16 %v417
      %v844 = vunpack.c.l.b16 %v418
      %v845 = vunpack.c.h.b16 %v418
      %v846 = vunpack.c.l.b16 %v419
      %v847 = vunpack.c.h.b16 %v419
      %v848 = vunpack.c.l.b16 %v420
      %v849 = vunpack.c.h.b16 %v420
      %v850 = vunpack.c.l.b16 %v421
      %v851 = vunpack.c.h.b16 %v421
      %v852 = vunpack.c.l.b16 %v422
      %v853 = vunpack.c.h.b16 %v422
      %v854 = vunpack.c.l.b16 %v423
      %v855 = vunpack.c.h.b16 %v423
      %v856 = vunpack.c.l.b16 %v424
      %v857 = vunpack.c.h.b16 %v424
      %v858 = vunpack.c.l.b16 %v425
      %v859 = vunpack.c.h.b16 %v425
      %v860 = vunpack.c.l.b16 %v426
      %v861 = vunpack.c.h.b16 %v426
      %v862 = vunpack.c.l.b16 %v427
      %v863 = vunpack.c.h.b16 %v427
      %v864 = vunpack.c.l.b16 %v428
      %v865 = vunpack.c.h.b16 %v428
      %v866 = vunpack.c.l.b16 %v429
      %v867 = vunpack.c.h.b16 %v429
      %v868 = vunpack.c.l.b16 %v430
      %v869 = vunpack.c.h.b16 %v430
      %v870 = vunpack.c.l.b16 %v431
      %v871 = vunpack.c.h.b16 %v431
      %v872 = vunpack.c.l.b16 %v432
      %v873 = vunpack.c.h.b16 %v432
      %v874 = vunpack.c.l.b16 %v433
      %v875 = vunpack.c.h.b16 %v433
      %v876 = vunpack.c.l.b16 %v434
      %v877 = vunpack.c.h.b16 %v434
      %v878 = vunpack.c.l.b16 %v435
      %v879 = vunpack.c.h.b16 %v435
      %v880 = vunpack.c.l.b16 %v436
      %v881 = vunpack.c.h.b16 %v436
      %v882 = vunpack.c.l.b16 %v437
      %v883 = vunpack.c.h.b16 %v437
      %v884 = vunpack.c.l.b16 %v438
      %v885 = vunpack.c.h.b16 %v438
      %v886 = vunpack.c.l.b16 %v439
      %v887 = vunpack.c.h.b16 %v439
      %v888 = vunpack.c.l.b16 %v440
      %v889 = vunpack.c.h.b16 %v440
      %v890 = vunpack.c.l.b16 %v441
      %v891 = vunpack.c.h.b16 %v441
      %v892 = vunpack.c.l.b16 %v442
      %v893 = vunpack.c.h.b16 %v442
      %v894 = vunpack.c.l.b16 %v443
      %v895 = vunpack.c.h.b16 %v443
      %v896 = vpack.c.b16 %v642, %v640
      %v897 = vpack.c.b16 %v643, %v641
      %v898 = vpack.c.b16 %v646, %v644
      %v899 = vpack.c.b16 %v647, %v645
      %v900 = vpack.c.b16 %v650, %v648
      %v901 = vpack.c.b16 %v651, %v649
      %v902 = vpack.c.b16 %v654, %v652
      %v903 = vpack.c.b16 %v655, %v653
      %v904 = vpack.c.b16 %v658, %v656
      %v905 = vpack.c.b16 %v659, %v657
      %v906 = vpack.c.b16 %v662, %v660
      %v907 = vpack.c.b16 %v663, %v661
      %v908 = vpack.c.b16 %v666, %v664
      %v909 = vpack.c.b16 %v667, %v665
      %v910 = vpack.c.b16 %v670, %v668
      %v911 = vpack.c.b16 %v671, %v669
      %v912 = vpack.c.b16 %v674, %v672
      %v913 = vpack.c.b16 %v675, %v673
      %v914 = vpack.c.b16 %v678, %v676
      %v915 = vpack.c.b16 %v679, %v677
      %v916 = vpack.c.b16 %v682, %v680
      %v917 = vpack.c.b16 %v683, %v681
      %v918 = vpack.c.b16 %v686, %v684
      %v919 = vpack.c.b16 %v687, %v685
      %v920 = vpack.c.b16 %v690, %v688
      %v921 = vpack.c.b16 %v691, %v689
      %v922 = vpack.c.b16 %v694, %v692
      %v923 = vpack.c.b16 %v695, %v693
      %v924 = vpack.c.b16 %v698, %v696
      %v925 = vpack.c.b16 %v699, %v697
      %v926 = vpack.c.b16 %v702, %v700
      %v927 = vpack.c.b16 %v703, %v701
      %v928 = vpack.c.b16 %v706, %v704
      %v929 = vpack.c.b16 %v707, %v705
      %v930 = vpack.c.b16 %v710, %v708
      %v931 = vpack.c.b16 %v711, %v709
      %v932 = vpack.c.b16 %v714, %v712
      %v933 = vpack.c.b16 %v715, %v713
      %v934 = vpack.c.b16 %v718, %v716
      %v935 = vpack.c.b16 %v719, %v717
      %v936 = vpack.c.b16 %v722, %v720
      %v937 = vpack.c.b16 %v723, %v721
      %v938 = vpack.c.b16 %v726, %v724
      %v939 = vpack.c.b16 %v727, %v725
      %v940 = vpack.c.b16 %v730, %v728
      %v941 = vpack.c.b16 %v731, %v729
      %v942 = vpack.c.b16 %v734, %v732
      %v943 = vpack.c.b16 %v735, %v733
      %v944 = vpack.c.b16 %v738, %v736
      %v945 = vpack.c.b16 %v739, %v737
      %v946 = vpack.c.b16 %v742, %v740
      %v947 = vpack.c.b16 %v743, %v741
      %v948 = vpack.c.b16 %v746, %v744
      %v949 = vpack.c.b16 %v747, %v745
      %v950 = vpack.c.b16 %v750, %v748
      %v951 = vpack.c.b16 %v751, %v749
      %v952 = vpack.c.b16 %v754, %v752
      %v953 = vpack.c.b16 %v755, %v753
      %v954 = vpack.c.b16 %v758, %v756
      %v955 = vpack.c.b16 %v759, %v757
      %v956 = vpack.c.b16 %v762, %v760
      %v957 = vpack.c.b16 %v763, %v761
      %v958 = vpack.c.b16 %v766, %v764
      %v959 = vpack.c.b16 %v767, %v765
      %v960 = vpack.c.b16 %v770, %v768
      %v961 = vpack.c.b16 %v771, %v769
      %v962 = vpack.c.b16 %v774, %v772
      %v963 = vpack.c.b16 %v775, %v773
      %v964 = vpack.c.b16 %v778, %v776
      %v965 = vpack.c.b16 %v779, %v777
      %v966 = vpack.c.b16 %v782, %v780
      %v967 = vpack.c.b16 %v783, %v781
      %v968 = vpack.c.b16 %v786, %v784
      %v969 = vpack.c.b16 %v787, %v785
      %v970 = vpack.c.b16 %v790, %v788
      %v971 = vpack.c.b16 %v791, %v789
      %v972 = vpack.c.b16 %v794, %v792
      %v973 = vpack.c.b16 %v795, %v793
      %v974 = vpack.c.b16 %v798, %v796
      %v975 = vpack.c.b16 %v799, %v797
      %v976 = vpack.c.b16 %v802, %v800
      %v977 = vpack.c.b16 %v803, %v801
      %v978 = vpack.c.b16 %v806, %v804
      %v979 = vpack.c.b16 %v807, %v805
      %v980 = vpack.c.b16 %v810, %v808
      %v981 = vpack.c.b16 %v811, %v809
      %v982 = vpack.c.b16 %v814, %v812
      %v983 = vpack.c.b16 %v815, %v813
      %v984 = vpack.c.b16 %v818, %v816
      %v985 = vpack.c.b16 %v819, %v817
      %v986 = vpack.c.b16 %v822, %v820
      %v987 = vpack.c.b16 %v823, %v821
      %v988 = vpack.c.b16 %v826, %v824
      %v989 = vpack.c.b16 %v827, %v825
      %v990 = vpack.c.b16 %v830, %v828
      %v991 = vpack.c.b16 %v831, %v829
      %v992 = vpack.c.b16 %v834, %v832
      %v993 = vpack.c.b16 %v835, %v833
      %v994 = vpack.c.b16 %v838, %v836
      %v995 = vpack.c.b16 %v839, %v837
      %v996 = vpack.c.b16 %v842, %v840
      %v997 = vpack.c.b16 %v843, %v841
      %v998 = vpack.c.b16 %v846, %v844
      %v999 = vpack.c.b16 %v847, %v845
      %v1000 = vpack.c.b16 %v850, %v848
      %v1001 = vpack.c.b16 %v851, %v849
      %v1002 = vpack.c.b16 %v854, %v852
      %v1003 = vpack.c.b16 %v855, %v853
      %v1004 = vpack.c.b16 %v858, %v856
      %v1005 = vpack.c.b16 %v859, %v857
      %v1006 = vpack.c.b16 %v862, %v860
      %v1007 = vpack.c.b16 %v863, %v861
      %v1008 = vpack.c.b16 %v866, %v864
      %v1009 = vpack.c.b16 %v867, %v865
      %v1010 = vpack.c.b16 %v870, %v868
      %v1011 = vpack.c.b16 %v871, %v869
      %v1012 = vpack.c.b16 %v874, %v872
      %v1013 = vpack.c.b16 %v875, %v873
      %v1014 = vpack.c.b16 %v878, %v876
      %v1015 = vpack.c.b16 %v879, %v877
      %v1016 = vpack.c.b16 %v882, %v880
      %v1017 = vpack.c.b16 %v883, %v881
      %v1018 = vpack.c.b16 %v886, %v884
      %v1019 = vpack.c.b16 %v887, %v885
      %v1020 = vpack.c.b16 %v890, %v888
      %v1021 = vpack.c.b16 %v891, %v889
      %v1022 = vpack.c.b16 %v894, %v892
      %v1023 = vpack.c.b16 %v895, %v893
      %1152 = vmatprep.subr.bf16.mxu0 %v897
      %1153 = vmatpush1.bf16.msra.mxu0 %v896
      %1154 = vmatprep.subr.bf16.mxu0 %v899
      %1155 = vmatpush1.bf16.msra.mxu0 %v898
      %1156 = vmatprep.subr.bf16.mxu0 %v901
      %1157 = vmatpush1.bf16.msra.mxu0 %v900
      %1158 = vmatprep.subr.bf16.mxu0 %v903
      %1159 = vmatpush1.bf16.msra.mxu0 %v902
      %1160 = vmatprep.subr.bf16.mxu0 %v905
      %1161 = vmatpush1.bf16.msra.mxu0 %v904
      %1162 = vmatprep.subr.bf16.mxu0 %v907
      %1163 = vmatpush1.bf16.msra.mxu0 %v906
      %1164 = vmatprep.subr.bf16.mxu0 %v909
      %1165 = vmatpush1.bf16.msra.mxu0 %v908
      %1166 = vmatprep.subr.bf16.mxu0 %v911
      %1167 = vmatpush1.bf16.msra.mxu0 %v910
      %1168 = vmatprep.subr.bf16.mxu0 %v913
      %1169 = vmatpush1.bf16.msra.mxu0 %v912
      %1170 = vmatprep.subr.bf16.mxu0 %v915
      %1171 = vmatpush1.bf16.msra.mxu0 %v914
      %1172 = vmatprep.subr.bf16.mxu0 %v917
      %1173 = vmatpush1.bf16.msra.mxu0 %v916
      %1174 = vmatprep.subr.bf16.mxu0 %v919
      %1175 = vmatpush1.bf16.msra.mxu0 %v918
      %1176 = vmatprep.subr.bf16.mxu0 %v921
      %1177 = vmatpush1.bf16.msra.mxu0 %v920
      %1178 = vmatprep.subr.bf16.mxu0 %v923
      %1179 = vmatpush1.bf16.msra.mxu0 %v922
      %1180 = vmatprep.subr.bf16.mxu0 %v925
      %1181 = vmatpush1.bf16.msra.mxu0 %v924
      %1182 = vmatprep.subr.bf16.mxu0 %v927
      %1183 = vmatpush1.bf16.msra.mxu0 %v926
      %1184 = vmatprep.mubr.bf16.mxu0 %v481
      %1185 = vmatmul.mubr.bf16.gmra.mrb[0].mxu0 %v480
      %v1186 = vpop.f32.mrb[0].mxu0
      %v1187 = vadd.f32 0.0, %v1186
      %v1188 = vpop.f32.mrb[0].mxu0
      %v1189 = vadd.f32 0.0, %v1188
      %v1190 = vpop.f32.mrb[0].mxu0
      %v1191 = vadd.f32 0.0, %v1190
      %v1192 = vpop.f32.mrb[0].mxu0
      %v1193 = vadd.f32 0.0, %v1192
      %1194 = vmatprep.mubr.bf16.mxu0 %v489
      %1195 = vmatmul.mubr.bf16.gmra.mrb[0].mxu0 %v488
      %v1196 = vpop.f32.mrb[0].mxu0
      %v1197 = vadd.f32 0.0, %v1196
      %v1198 = vpop.f32.mrb[0].mxu0
      %v1199 = vadd.f32 0.0, %v1198
      %v1200 = vpop.f32.mrb[0].mxu0
      %v1201 = vpop.f32.mrb[0].mxu0
      %1202 = vdwg.mxu0
      %1203 = vmatprep.subr.bf16.mxu0 %v929
      %1204 = vmatpush1.bf16.msra.mxu0 %v928
      %1205 = vmatprep.subr.bf16.mxu0 %v931
      %1206 = vmatpush1.bf16.msra.mxu0 %v930
      %1207 = vmatprep.subr.bf16.mxu0 %v933
      %1208 = vmatpush1.bf16.msra.mxu0 %v932
      %1209 = vmatprep.subr.bf16.mxu0 %v935
      %1210 = vmatpush1.bf16.msra.mxu0 %v934
      %1211 = vmatprep.subr.bf16.mxu0 %v937
      %1212 = vmatpush1.bf16.msra.mxu0 %v936
      %1213 = vmatprep.subr.bf16.mxu0 %v939
      %1214 = vmatpush1.bf16.msra.mxu0 %v938
      %1215 = vmatprep.subr.bf16.mxu0 %v941
      %1216 = vmatpush1.bf16.msra.mxu0 %v940
      %1217 = vmatprep.subr.bf16.mxu0 %v943
      %1218 = vmatpush1.bf16.msra.mxu0 %v942
      %1219 = vmatprep.subr.bf16.mxu0 %v945
      %1220 = vmatpush1.bf16.msra.mxu0 %v944
      %1221 = vmatprep.subr.bf16.mxu0 %v947
      %1222 = vmatpush1.bf16.msra.mxu0 %v946
      %1223 = vmatprep.subr.bf16.mxu0 %v949
      %1224 = vmatpush1.bf16.msra.mxu0 %v948
      %1225 = vmatprep.subr.bf16.mxu0 %v951
      %1226 = vmatpush1.bf16.msra.mxu0 %v950
      %1227 = vmatprep.subr.bf16.mxu0 %v953
      %1228 = vmatpush1.bf16.msra.mxu0 %v952
      %1229 = vmatprep.subr.bf16.mxu0 %v955
      %1230 = vmatpush1.bf16.msra.mxu0 %v954
      %1231 = vmatprep.subr.bf16.mxu0 %v957
      %1232 = vmatpush1.bf16.msra.mxu0 %v956
      %1233 = vmatprep.subr.bf16.mxu0 %v959
      %1234 = vmatpush1.bf16.msra.mxu0 %v958
      %1235 = vmatprep.mubr.bf16.mxu0 %v483
      %1236 = vmatmul.mubr.bf16.gmra.mrb[0].mxu0 %v482
      %v1237 = vpop.f32.mrb[0].mxu0
      %v1238 = vadd.f32 %v1187, %v1237
      %v1239 = vpop.f32.mrb[0].mxu0
      %v1240 = vadd.f32 %v1189, %v1239
      %v1241 = vpop.f32.mrb[0].mxu0
      %v1242 = vadd.f32 %v1191, %v1241
      %v1243 = vpop.f32.mrb[0].mxu0
      %v1244 = vadd.f32 %v1193, %v1243
      %1245 = vmatprep.mubr.bf16.mxu0 %v491
      %1246 = vmatmul.mubr.bf16.gmra.mrb[0].mxu0 %v490
      %v1247 = vpop.f32.mrb[0].mxu0
      %v1248 = vadd.f32 %v1197, %v1247
      %v1249 = vpop.f32.mrb[0].mxu0
      %v1250 = vadd.f32 %v1199, %v1249
      %v1251 = vpop.f32.mrb[0].mxu0
      %v1252 = vpop.f32.mrb[0].mxu0
      %1253 = vdwg.mxu0
      %1254 = vmatprep.subr.bf16.mxu0 %v961
      %1255 = vmatpush1.bf16.msra.mxu0 %v960
      %1256 = vmatprep.subr.bf16.mxu0 %v963
      %1257 = vmatpush1.bf16.msra.mxu0 %v962
      %1258 = vmatprep.subr.bf16.mxu0 %v965
      %1259 = vmatpush1.bf16.msra.mxu0 %v964
      %1260 = vmatprep.subr.bf16.mxu0 %v967
      %1261 = vmatpush1.bf16.msra.mxu0 %v966
      %1262 = vmatprep.subr.bf16.mxu0 %v969
      %1263 = vmatpush1.bf16.msra.mxu0 %v968
      %1264 = vmatprep.subr.bf16.mxu0 %v971
      %1265 = vmatpush1.bf16.msra.mxu0 %v970
      %1266 = vmatprep.subr.bf16.mxu0 %v973
      %1267 = vmatpush1.bf16.msra.mxu0 %v972
      %1268 = vmatprep.subr.bf16.mxu0 %v975
      %1269 = vmatpush1.bf16.msra.mxu0 %v974
      %1270 = vmatprep.subr.bf16.mxu0 %v977
      %1271 = vmatpush1.bf16.msra.mxu0 %v976
      %1272 = vmatprep.subr.bf16.mxu0 %v979
      %1273 = vmatpush1.bf16.msra.mxu0 %v978
      %1274 = vmatprep.subr.bf16.mxu0 %v981
      %1275 = vmatpush1.bf16.msra.mxu0 %v980
      %1276 = vmatprep.subr.bf16.mxu0 %v983
      %1277 = vmatpush1.bf16.msra.mxu0 %v982
      %1278 = vmatprep.subr.bf16.mxu0 %v985
      %1279 = vmatpush1.bf16.msra.mxu0 %v984
      %1280 = vmatprep.subr.bf16.mxu0 %v987
      %1281 = vmatpush1.bf16.msra.mxu0 %v986
      %1282 = vmatprep.subr.bf16.mxu0 %v989
      %1283 = vmatpush1.bf16.msra.mxu0 %v988
      %1284 = vmatprep.subr.bf16.mxu0 %v991
      %1285 = vmatpush1.bf16.msra.mxu0 %v990
      %1286 = vmatprep.mubr.bf16.mxu0 %v485
      %1287 = vmatmul.mubr.bf16.gmra.mrb[0].mxu0 %v484
      %v1288 = vpop.f32.mrb[0].mxu0
      %v1289 = vadd.f32 %v1238, %v1288
      %v1290 = vpop.f32.mrb[0].mxu0
      %v1291 = vadd.f32 %v1240, %v1290
      %v1292 = vpop.f32.mrb[0].mxu0
      %v1293 = vadd.f32 %v1242, %v1292
      %v1294 = vpop.f32.mrb[0].mxu0
      %v1295 = vadd.f32 %v1244, %v1294
      %1296 = vmatprep.mubr.bf16.mxu0 %v493
      %1297 = vmatmul.mubr.bf16.gmra.mrb[0].mxu0 %v492
      %v1298 = vpop.f32.mrb[0].mxu0
      %v1299 = vadd.f32 %v1248, %v1298
      %v1300 = vpop.f32.mrb[0].mxu0
      %v1301 = vadd.f32 %v1250, %v1300
      %v1302 = vpop.f32.mrb[0].mxu0
      %v1303 = vpop.f32.mrb[0].mxu0
      %1304 = vdwg.mxu0
      %1305 = vmatprep.subr.bf16.mxu0 %v993
      %1306 = vmatpush1.bf16.msra.mxu0 %v992
      %1307 = vmatprep.subr.bf16.mxu0 %v995
      %1308 = vmatpush1.bf16.msra.mxu0 %v994
      %1309 = vmatprep.subr.bf16.mxu0 %v997
      %1310 = vmatpush1.bf16.msra.mxu0 %v996
      %1311 = vmatprep.subr.bf16.mxu0 %v999
      %1312 = vmatpush1.bf16.msra.mxu0 %v998
      %1313 = vmatprep.subr.bf16.mxu0 %v1001
      %1314 = vmatpush1.bf16.msra.mxu0 %v1000
      %1315 = vmatprep.subr.bf16.mxu0 %v1003
      %1316 = vmatpush1.bf16.msra.mxu0 %v1002
      %1317 = vmatprep.subr.bf16.mxu0 %v1005
      %1318 = vmatpush1.bf16.msra.mxu0 %v1004
      %1319 = vmatprep.subr.bf16.mxu0 %v1007
      %1320 = vmatpush1.bf16.msra.mxu0 %v1006
      %1321 = vmatprep.subr.bf16.mxu0 %v1009
      %1322 = vmatpush1.bf16.msra.mxu0 %v1008
      %1323 = vmatprep.subr.bf16.mxu0 %v1011
      %1324 = vmatpush1.bf16.msra.mxu0 %v1010
      %1325 = vmatprep.subr.bf16.mxu0 %v1013
      %1326 = vmatpush1.bf16.msra.mxu0 %v1012
      %1327 = vmatprep.subr.bf16.mxu0 %v1015
      %1328 = vmatpush1.bf16.msra.mxu0 %v1014
      %1329 = vmatprep.subr.bf16.mxu0 %v1017
      %1330 = vmatpush1.bf16.msra.mxu0 %v1016
      %1331 = vmatprep.subr.bf16.mxu0 %v1019
      %1332 = vmatpush1.bf16.msra.mxu0 %v1018
      %1333 = vmatprep.subr.bf16.mxu0 %v1021
      %1334 = vmatpush1.bf16.msra.mxu0 %v1020
      %1335 = vmatprep.subr.bf16.mxu0 %v1023
      %1336 = vmatpush1.bf16.msra.mxu0 %v1022
      %1337 = vmatprep.mubr.bf16.mxu0 %v487
      %1338 = vmatmul.mubr.bf16.gmra.mrb[0].mxu0 %v486
      %v1339 = vpop.f32.mrb[0].mxu0
      %v1340 = vadd.f32 %v1289, %v1339
      %v1341 = vpop.f32.mrb[0].mxu0
      %v1342 = vadd.f32 %v1291, %v1341
      %v1343 = vpop.f32.mrb[0].mxu0
      %v1344 = vadd.f32 %v1293, %v1343
      %v1345 = vpop.f32.mrb[0].mxu0
      %v1346 = vadd.f32 %v1295, %v1345
      %1347 = vmatprep.mubr.bf16.mxu0 %v495
      %1348 = vmatmul.mubr.bf16.gmra.mrb[0].mxu0 %v494
      %v1349 = vpop.f32.mrb[0].mxu0
      %v1350 = vadd.f32 %v1299, %v1349
      %v1351 = vpop.f32.mrb[0].mxu0
      %v1352 = vadd.f32 %v1301, %v1351
      %v1353 = vpop.f32.mrb[0].mxu0
      %v1354 = vpop.f32.mrb[0].mxu0
      %1355 = vdwg.mxu0
      %v1356 = vrot.slane %v1340, 1
      %v1357 = vrot.slane %v1342, 1
      %v1358 = vrot.slane %v1344, 1
      %v1359 = vrot.slane %v1346, 1
      %v1360 = vrot.slane %v1350, 1
      %v1361 = vrot.slane %v1352, 1
      %v1362 = vlaneseq
      %v1363 = vshrl.u32 %v1362, 7
      %vm1364 = vcmp.lt.s32.totalorder %v1363, 7
      %v1365 = vsel %vm1364, %v1358, %v1360
      %v1366 = vsel %vm1364, %v1359, %v1361
      %v1367 = vsel %vm1364, %v1356, %v1358
      %v1368 = vsel %vm1364, %v1357, %v1359
      %v1369 = vsel %vm1364, %v1360, %v1356
      %v1370 = vsel %vm1364, %v1361, %v1357
      %v1499 = vunpack.c.l.b16 %v187
      %v1500 = vunpack.c.l.b16 %v188
      %v1501 = vunpack.c.l.b16 %v189
      %v1502 = vunpack.c.l.b16 %v190
      %v1503 = vunpack.c.l.b16 %v191
      %v1504 = vunpack.c.l.b16 %v192
      %v1505 = vunpack.c.l.b16 %v193
      %v1506 = vunpack.c.l.b16 %v194
      %v1507 = vunpack.c.l.b16 %v195
      %v1508 = vunpack.c.l.b16 %v196
      %v1509 = vunpack.c.l.b16 %v197
      %v1510 = vunpack.c.l.b16 %v198
      %v1511 = vunpack.c.l.b16 %v199
      %v1512 = vunpack.c.l.b16 %v200
      %v1513 = vunpack.c.l.b16 %v201
      %v1514 = vunpack.c.l.b16 %v202
      %v1515 = vunpack.c.l.b16 %v203
      %v1516 = vunpack.c.l.b16 %v204
      %v1517 = vunpack.c.l.b16 %v205
      %v1518 = vunpack.c.l.b16 %v206
      %v1519 = vunpack.c.l.b16 %v207
      %v1520 = vunpack.c.l.b16 %v208
      %v1521 = vunpack.c.l.b16 %v209
      %v1522 = vunpack.c.l.b16 %v210
      %v1523 = vunpack.c.l.b16 %v211
      %v1524 = vunpack.c.l.b16 %v212
      %v1525 = vunpack.c.l.b16 %v213
      %v1526 = vunpack.c.l.b16 %v214
      %v1527 = vunpack.c.l.b16 %v215
      %v1528 = vunpack.c.l.b16 %v216
      %v1529 = vunpack.c.l.b16 %v217
      %v1530 = vunpack.c.l.b16 %v218
      %v1531 = vunpack.c.l.b16 %v219
      %v1532 = vunpack.c.l.b16 %v220
      %v1533 = vunpack.c.l.b16 %v221
      %v1534 = vunpack.c.l.b16 %v222
      %v1535 = vunpack.c.l.b16 %v223
      %v1536 = vunpack.c.l.b16 %v224
      %v1537 = vunpack.c.l.b16 %v225
      %v1538 = vunpack.c.l.b16 %v226
      %v1539 = vunpack.c.l.b16 %v227
      %v1540 = vunpack.c.l.b16 %v228
      %v1541 = vunpack.c.l.b16 %v229
      %v1542 = vunpack.c.l.b16 %v230
      %v1543 = vunpack.c.l.b16 %v231
      %v1544 = vunpack.c.l.b16 %v232
      %v1545 = vunpack.c.l.b16 %v233
      %v1546 = vunpack.c.l.b16 %v234
      %v1547 = vunpack.c.l.b16 %v235
      %v1548 = vunpack.c.l.b16 %v236
      %v1549 = vunpack.c.l.b16 %v237
      %v1550 = vunpack.c.l.b16 %v238
      %v1551 = vunpack.c.l.b16 %v239
      %v1552 = vunpack.c.l.b16 %v240
      %v1553 = vunpack.c.l.b16 %v241
      %v1554 = vunpack.c.l.b16 %v242
      %v1555 = vunpack.c.l.b16 %v243
      %v1556 = vunpack.c.l.b16 %v244
      %v1557 = vunpack.c.l.b16 %v245
      %v1558 = vunpack.c.l.b16 %v246
      %v1559 = vunpack.c.l.b16 %v247
      %v1560 = vunpack.c.l.b16 %v248
      %v1561 = vunpack.c.l.b16 %v249
      %v1562 = vunpack.c.l.b16 %v250
      %v1563 = vunpack.c.l.b16 %v251
      %v1564 = vunpack.c.l.b16 %v252
      %v1565 = vunpack.c.l.b16 %v253
      %v1566 = vunpack.c.l.b16 %v254
      %v1567 = vunpack.c.l.b16 %v255
      %v1568 = vunpack.c.l.b16 %v256
      %v1569 = vunpack.c.l.b16 %v257
      %v1570 = vunpack.c.l.b16 %v258
      %v1571 = vunpack.c.l.b16 %v259
      %v1572 = vunpack.c.l.b16 %v260
      %v1573 = vunpack.c.l.b16 %v261
      %v1574 = vunpack.c.l.b16 %v262
      %v1575 = vunpack.c.l.b16 %v263
      %v1576 = vunpack.c.l.b16 %v264
      %v1577 = vunpack.c.l.b16 %v265
      %v1578 = vunpack.c.l.b16 %v266
      %v1579 = vunpack.c.l.b16 %v267
      %v1580 = vunpack.c.l.b16 %v268
      %v1581 = vunpack.c.l.b16 %v269
      %v1582 = vunpack.c.l.b16 %v270
      %v1583 = vunpack.c.l.b16 %v271
      %v1584 = vunpack.c.l.b16 %v272
      %v1585 = vunpack.c.l.b16 %v273
      %v1586 = vunpack.c.l.b16 %v274
      %v1587 = vunpack.c.l.b16 %v275
      %v1588 = vunpack.c.l.b16 %v276
      %v1589 = vunpack.c.l.b16 %v277
      %v1590 = vunpack.c.l.b16 %v278
      %v1591 = vunpack.c.l.b16 %v279
      %v1592 = vunpack.c.l.b16 %v280
      %v1593 = vunpack.c.l.b16 %v281
      %v1594 = vunpack.c.l.b16 %v282
      %v1595 = vunpack.c.l.b16 %v283
      %v1596 = vunpack.c.l.b16 %v284
      %v1597 = vunpack.c.l.b16 %v285
      %v1598 = vunpack.c.l.b16 %v286
      %v1599 = vunpack.c.l.b16 %v287
      %v1600 = vunpack.c.l.b16 %v288
      %v1601 = vunpack.c.l.b16 %v289
      %v1602 = vunpack.c.l.b16 %v290
      %v1603 = vunpack.c.l.b16 %v291
      %v1604 = vunpack.c.l.b16 %v292
      %v1605 = vunpack.c.l.b16 %v293
      %v1606 = vunpack.c.l.b16 %v294
      %v1607 = vunpack.c.l.b16 %v295
      %v1608 = vunpack.c.l.b16 %v296
      %v1609 = vunpack.c.l.b16 %v297
      %v1610 = vunpack.c.l.b16 %v298
      %v1611 = vunpack.c.l.b16 %v299
      %v1612 = vunpack.c.l.b16 %v300
      %v1613 = vunpack.c.l.b16 %v301
      %v1614 = vunpack.c.l.b16 %v302
      %v1615 = vunpack.c.l.b16 %v303
      %v1616 = vunpack.c.l.b16 %v304
      %v1617 = vunpack.c.l.b16 %v305
      %v1618 = vunpack.c.l.b16 %v306
      %v1619 = vunpack.c.l.b16 %v307
      %v1620 = vunpack.c.l.b16 %v308
      %v1621 = vunpack.c.l.b16 %v309
      %v1622 = vunpack.c.l.b16 %v310
      %v1623 = vunpack.c.l.b16 %v311
      %v1624 = vunpack.c.l.b16 %v312
      %v1625 = vunpack.c.l.b16 %v313
      %v1626 = vunpack.c.l.b16 %v314
      %v1627 = vpack.c.b16 %v1500, %v1499
      %v1628 = vpack.c.b16 %v1502, %v1501
      %v1629 = vpack.c.b16 %v1504, %v1503
      %v1630 = vpack.c.b16 %v1506, %v1505
      %v1631 = vpack.c.b16 %v1508, %v1507
      %v1632 = vpack.c.b16 %v1510, %v1509
      %v1633 = vpack.c.b16 %v1512, %v1511
      %v1634 = vpack.c.b16 %v1514, %v1513
      %v1635 = vpack.c.b16 %v1516, %v1515
      %v1636 = vpack.c.b16 %v1518, %v1517
      %v1637 = vpack.c.b16 %v1520, %v1519
      %v1638 = vpack.c.b16 %v1522, %v1521
      %v1639 = vpack.c.b16 %v1524, %v1523
      %v1640 = vpack.c.b16 %v1526, %v1525
      %v1641 = vpack.c.b16 %v1528, %v1527
      %v1642 = vpack.c.b16 %v1530, %v1529
      %v1643 = vpack.c.b16 %v1532, %v1531
      %v1644 = vpack.c.b16 %v1534, %v1533
      %v1645 = vpack.c.b16 %v1536, %v1535
      %v1646 = vpack.c.b16 %v1538, %v1537
      %v1647 = vpack.c.b16 %v1540, %v1539
      %v1648 = vpack.c.b16 %v1542, %v1541
      %v1649 = vpack.c.b16 %v1544, %v1543
      %v1650 = vpack.c.b16 %v1546, %v1545
      %v1651 = vpack.c.b16 %v1548, %v1547
      %v1652 = vpack.c.b16 %v1550, %v1549
      %v1653 = vpack.c.b16 %v1552, %v1551
      %v1654 = vpack.c.b16 %v1554, %v1553
      %v1655 = vpack.c.b16 %v1556, %v1555
      %v1656 = vpack.c.b16 %v1558, %v1557
      %v1657 = vpack.c.b16 %v1560, %v1559
      %v1658 = vpack.c.b16 %v1562, %v1561
      %v1659 = vpack.c.b16 %v1564, %v1563
      %v1660 = vpack.c.b16 %v1566, %v1565
      %v1661 = vpack.c.b16 %v1568, %v1567
      %v1662 = vpack.c.b16 %v1570, %v1569
      %v1663 = vpack.c.b16 %v1572, %v1571
      %v1664 = vpack.c.b16 %v1574, %v1573
      %v1665 = vpack.c.b16 %v1576, %v1575
      %v1666 = vpack.c.b16 %v1578, %v1577
      %v1667 = vpack.c.b16 %v1580, %v1579
      %v1668 = vpack.c.b16 %v1582, %v1581
      %v1669 = vpack.c.b16 %v1584, %v1583
      %v1670 = vpack.c.b16 %v1586, %v1585
      %v1671 = vpack.c.b16 %v1588, %v1587
      %v1672 = vpack.c.b16 %v1590, %v1589
      %v1673 = vpack.c.b16 %v1592, %v1591
      %v1674 = vpack.c.b16 %v1594, %v1593
      %v1675 = vpack.c.b16 %v1596, %v1595
      %v1676 = vpack.c.b16 %v1598, %v1597
      %v1677 = vpack.c.b16 %v1600, %v1599
      %v1678 = vpack.c.b16 %v1602, %v1601
      %v1679 = vpack.c.b16 %v1604, %v1603
      %v1680 = vpack.c.b16 %v1606, %v1605
      %v1681 = vpack.c.b16 %v1608, %v1607
      %v1682 = vpack.c.b16 %v1610, %v1609
      %v1683 = vpack.c.b16 %v1612, %v1611
      %v1684 = vpack.c.b16 %v1614, %v1613
      %v1685 = vpack.c.b16 %v1616, %v1615
      %v1686 = vpack.c.b16 %v1618, %v1617
      %v1687 = vpack.c.b16 %v1620, %v1619
      %v1688 = vpack.c.b16 %v1622, %v1621
      %v1689 = vpack.c.b16 %v1624, %v1623
      %v1690 = vpack.c.b16 %v1626, %v1625
      %1755 = vmatprep.subr.bf16.mxu0 0
      %1756 = vmatpush1.bf16.msra.mxu0 %v1627
      %1757 = vmatprep.subr.bf16.mxu0 0
      %1758 = vmatpush1.bf16.msra.mxu0 %v1628
      %1759 = vmatprep.subr.bf16.mxu0 0
      %1760 = vmatpush1.bf16.msra.mxu0 %v1629
      %1761 = vmatprep.subr.bf16.mxu0 0
      %1762 = vmatpush1.bf16.msra.mxu0 %v1630
      %1763 = vmatprep.subr.bf16.mxu0 0
      %1764 = vmatpush1.bf16.msra.mxu0 %v1631
      %1765 = vmatprep.subr.bf16.mxu0 0
      %1766 = vmatpush1.bf16.msra.mxu0 %v1632
      %1767 = vmatprep.subr.bf16.mxu0 0
      %1768 = vmatpush1.bf16.msra.mxu0 %v1633
      %1769 = vmatprep.subr.bf16.mxu0 0
      %1770 = vmatpush1.bf16.msra.mxu0 %v1634
      %1771 = vmatprep.subr.bf16.mxu0 0
      %1772 = vmatpush1.bf16.msra.mxu0 %v1635
      %1773 = vmatprep.subr.bf16.mxu0 0
      %1774 = vmatpush1.bf16.msra.mxu0 %v1636
      %1775 = vmatprep.subr.bf16.mxu0 0
      %1776 = vmatpush1.bf16.msra.mxu0 %v1637
      %1777 = vmatprep.subr.bf16.mxu0 0
      %1778 = vmatpush1.bf16.msra.mxu0 %v1638
      %1779 = vmatprep.subr.bf16.mxu0 0
      %1780 = vmatpush1.bf16.msra.mxu0 %v1639
      %1781 = vmatprep.subr.bf16.mxu0 0
      %1782 = vmatpush1.bf16.msra.mxu0 %v1640
      %1783 = vmatprep.subr.bf16.mxu0 0
      %1784 = vmatpush1.bf16.msra.mxu0 %v1641
      %1785 = vmatprep.subr.bf16.mxu0 0
      %1786 = vmatpush1.bf16.msra.mxu0 %v1642
      %1787 = vmatprep.mubr.bf16.mxu0 %v481
      %1788 = vmatmul.mubr.bf16.gmra.mrb[0].mxu0 %v480
      %v1789 = vpop.f32.mrb[0].mxu0
      %v1790 = vadd.f32 %v1367, %v1789
      %v1791 = vpop.f32.mrb[0].mxu0
      %v1792 = vpop.f32.mrb[0].mxu0
      %v1793 = vadd.f32 %v1365, %v1792
      %v1794 = vpop.f32.mrb[0].mxu0
      %1795 = vmatprep.mubr.bf16.mxu0 %v489
      %1796 = vmatmul.mubr.bf16.gmra.mrb[0].mxu0 %v488
      %v1797 = vpop.f32.mrb[0].mxu0
      %v1798 = vadd.f32 %v1369, %v1797
      %v1799 = vpop.f32.mrb[0].mxu0
      %v1800 = vpop.f32.mrb[0].mxu0
      %v1801 = vpop.f32.mrb[0].mxu0
      %1802 = vdwg.mxu0
      %1803 = vmatprep.subr.bf16.mxu0 0
      %1804 = vmatpush1.bf16.msra.mxu0 %v1643
      %1805 = vmatprep.subr.bf16.mxu0 0
      %1806 = vmatpush1.bf16.msra.mxu0 %v1644
      %1807 = vmatprep.subr.bf16.mxu0 0
      %1808 = vmatpush1.bf16.msra.mxu0 %v1645
      %1809 = vmatprep.subr.bf16.mxu0 0
      %1810 = vmatpush1.bf16.msra.mxu0 %v1646
      %1811 = vmatprep.subr.bf16.mxu0 0
      %1812 = vmatpush1.bf16.msra.mxu0 %v1647
      %1813 = vmatprep.subr.bf16.mxu0 0
      %1814 = vmatpush1.bf16.msra.mxu0 %v1648
      %1815 = vmatprep.subr.bf16.mxu0 0
      %1816 = vmatpush1.bf16.msra.mxu0 %v1649
      %1817 = vmatprep.subr.bf16.mxu0 0
      %1818 = vmatpush1.bf16.msra.mxu0 %v1650
      %1819 = vmatprep.subr.bf16.mxu0 0
      %1820 = vmatpush1.bf16.msra.mxu0 %v1651
      %1821 = vmatprep.subr.bf16.mxu0 0
      %1822 = vmatpush1.bf16.msra.mxu0 %v1652
      %1823 = vmatprep.subr.bf16.mxu0 0
      %1824 = vmatpush1.bf16.msra.mxu0 %v1653
      %1825 = vmatprep.subr.bf16.mxu0 0
      %1826 = vmatpush1.bf16.msra.mxu0 %v1654
      %1827 = vmatprep.subr.bf16.mxu0 0
      %1828 = vmatpush1.bf16.msra.mxu0 %v1655
      %1829 = vmatprep.subr.bf16.mxu0 0
      %1830 = vmatpush1.bf16.msra.mxu0 %v1656
      %1831 = vmatprep.subr.bf16.mxu0 0
      %1832 = vmatpush1.bf16.msra.mxu0 %v1657
      %1833 = vmatprep.subr.bf16.mxu0 0
      %1834 = vmatpush1.bf16.msra.mxu0 %v1658
      %1835 = vmatprep.mubr.bf16.mxu0 %v483
      %1836 = vmatmul.mubr.bf16.gmra.mrb[0].mxu0 %v482
      %v1837 = vpop.f32.mrb[0].mxu0
      %v1838 = vadd.f32 %v1790, %v1837
      %v1839 = vpop.f32.mrb[0].mxu0
      %v1840 = vpop.f32.mrb[0].mxu0
      %v1841 = vadd.f32 %v1793, %v1840
      %v1842 = vpop.f32.mrb[0].mxu0
      %1843 = vmatprep.mubr.bf16.mxu0 %v491
      %1844 = vmatmul.mubr.bf16.gmra.mrb[0].mxu0 %v490
      %v1845 = vpop.f32.mrb[0].mxu0
      %v1846 = vadd.f32 %v1798, %v1845
      %v1847 = vpop.f32.mrb[0].mxu0
      %v1848 = vpop.f32.mrb[0].mxu0
      %v1849 = vpop.f32.mrb[0].mxu0
      %1850 = vdwg.mxu0
      %1851 = vmatprep.subr.bf16.mxu0 0
      %1852 = vmatpush1.bf16.msra.mxu0 %v1659
      %1853 = vmatprep.subr.bf16.mxu0 0
      %1854 = vmatpush1.bf16.msra.mxu0 %v1660
      %1855 = vmatprep.subr.bf16.mxu0 0
      %1856 = vmatpush1.bf16.msra.mxu0 %v1661
      %1857 = vmatprep.subr.bf16.mxu0 0
      %1858 = vmatpush1.bf16.msra.mxu0 %v1662
      %1859 = vmatprep.subr.bf16.mxu0 0
      %1860 = vmatpush1.bf16.msra.mxu0 %v1663
      %1861 = vmatprep.subr.bf16.mxu0 0
      %1862 = vmatpush1.bf16.msra.mxu0 %v1664
      %1863 = vmatprep.subr.bf16.mxu0 0
      %1864 = vmatpush1.bf16.msra.mxu0 %v1665
      %1865 = vmatprep.subr.bf16.mxu0 0
      %1866 = vmatpush1.bf16.msra.mxu0 %v1666
      %1867 = vmatprep.subr.bf16.mxu0 0
      %1868 = vmatpush1.bf16.msra.mxu0 %v1667
      %1869 = vmatprep.subr.bf16.mxu0 0
      %1870 = vmatpush1.bf16.msra.mxu0 %v1668
      %1871 = vmatprep.subr.bf16.mxu0 0
      %1872 = vmatpush1.bf16.msra.mxu0 %v1669
      %1873 = vmatprep.subr.bf16.mxu0 0
      %1874 = vmatpush1.bf16.msra.mxu0 %v1670
      %1875 = vmatprep.subr.bf16.mxu0 0
      %1876 = vmatpush1.bf16.msra.mxu0 %v1671
      %1877 = vmatprep.subr.bf16.mxu0 0
      %1878 = vmatpush1.bf16.msra.mxu0 %v1672
      %1879 = vmatprep.subr.bf16.mxu0 0
      %1880 = vmatpush1.bf16.msra.mxu0 %v1673
      %1881 = vmatprep.subr.bf16.mxu0 0
      %1882 = vmatpush1.bf16.msra.mxu0 %v1674
      %1883 = vmatprep.mubr.bf16.mxu0 %v485
      %1884 = vmatmul.mubr.bf16.gmra.mrb[0].mxu0 %v484
      %v1885 = vpop.f32.mrb[0].mxu0
      %v1886 = vadd.f32 %v1838, %v1885
      %v1887 = vpop.f32.mrb[0].mxu0
      %v1888 = vpop.f32.mrb[0].mxu0
      %v1889 = vadd.f32 %v1841, %v1888
      %v1890 = vpop.f32.mrb[0].mxu0
      %1891 = vmatprep.mubr.bf16.mxu0 %v493
      %1892 = vmatmul.mubr.bf16.gmra.mrb[0].mxu0 %v492
      %v1893 = vpop.f32.mrb[0].mxu0
      %v1894 = vadd.f32 %v1846, %v1893
      %v1895 = vpop.f32.mrb[0].mxu0
      %v1896 = vpop.f32.mrb[0].mxu0
      %v1897 = vpop.f32.mrb[0].mxu0
      %1898 = vdwg.mxu0
      %1899 = vmatprep.subr.bf16.mxu0 0
      %1900 = vmatpush1.bf16.msra.mxu0 %v1675
      %1901 = vmatprep.subr.bf16.mxu0 0
      %1902 = vmatpush1.bf16.msra.mxu0 %v1676
      %1903 = vmatprep.subr.bf16.mxu0 0
      %1904 = vmatpush1.bf16.msra.mxu0 %v1677
      %1905 = vmatprep.subr.bf16.mxu0 0
      %1906 = vmatpush1.bf16.msra.mxu0 %v1678
      %1907 = vmatprep.subr.bf16.mxu0 0
      %1908 = vmatpush1.bf16.msra.mxu0 %v1679
      %1909 = vmatprep.subr.bf16.mxu0 0
      %1910 = vmatpush1.bf16.msra.mxu0 %v1680
      %1911 = vmatprep.subr.bf16.mxu0 0
      %1912 = vmatpush1.bf16.msra.mxu0 %v1681
      %1913 = vmatprep.subr.bf16.mxu0 0
      %1914 = vmatpush1.bf16.msra.mxu0 %v1682
      %1915 = vmatprep.subr.bf16.mxu0 0
      %1916 = vmatpush1.bf16.msra.mxu0 %v1683
      %1917 = vmatprep.subr.bf16.mxu0 0
      %1918 = vmatpush1.bf16.msra.mxu0 %v1684
      %1919 = vmatprep.subr.bf16.mxu0 0
      %1920 = vmatpush1.bf16.msra.mxu0 %v1685
      %1921 = vmatprep.subr.bf16.mxu0 0
      %1922 = vmatpush1.bf16.msra.mxu0 %v1686
      %1923 = vmatprep.subr.bf16.mxu0 0
      %1924 = vmatpush1.bf16.msra.mxu0 %v1687
      %1925 = vmatprep.subr.bf16.mxu0 0
      %1926 = vmatpush1.bf16.msra.mxu0 %v1688
      %1927 = vmatprep.subr.bf16.mxu0 0
      %1928 = vmatpush1.bf16.msra.mxu0 %v1689
      %1929 = vmatprep.subr.bf16.mxu0 0
      %1930 = vmatpush1.bf16.msra.mxu0 %v1690
      %1931 = vmatprep.mubr.bf16.mxu0 %v487
      %1932 = vmatmul.mubr.bf16.gmra.mrb[0].mxu0 %v486
      %v1933 = vpop.f32.mrb[0].mxu0
      %v1934 = vadd.f32 %v1886, %v1933
      %v1935 = vpop.f32.mrb[0].mxu0
      %v1936 = vpop.f32.mrb[0].mxu0
      %v1937 = vadd.f32 %v1889, %v1936
      %v1938 = vpop.f32.mrb[0].mxu0
      %1939 = vmatprep.mubr.bf16.mxu0 %v495
      %1940 = vmatmul.mubr.bf16.gmra.mrb[0].mxu0 %v494
      %v1941 = vpop.f32.mrb[0].mxu0
      %v1942 = vadd.f32 %v1894, %v1941
      %v1943 = vpop.f32.mrb[0].mxu0
      %v1944 = vpop.f32.mrb[0].mxu0
      %v1945 = vpop.f32.mrb[0].mxu0
      %1946 = vdwg.mxu0
      %s1947 = scalar_lea.vmem %s1, 3072
      %v1948 = vld [vmem:[%s1947] sm:$0xff]
      %v1949 = vld [vmem:[%s1947 + $0x8] sm:$0xf]
      %v1950 = vld [vmem:[%s1947 + $0xc] sm:$0xff]
      %v1951 = vld [vmem:[%s1947 + $0x14] sm:$0xf]
      %v1952 = vld [vmem:[%s1947 + $0x18] sm:$0xff]
      %v1953 = vld [vmem:[%s1947 + $0x20] sm:$0xf]
      %v1954 = vld [vmem:[%s1947 + $0x24] sm:$0xff]
      %v1955 = vld [vmem:[%s1947 + $0x2c] sm:$0xf]
      %v1956 = vld [vmem:[%s1947 + $0x30] sm:$0xff]
      %v1957 = vld [vmem:[%s1947 + $0x38] sm:$0xf]
      %v1958 = vld [vmem:[%s1947 + $0x3c] sm:$0xff]
      %v1959 = vld [vmem:[%s1947 + $0x44] sm:$0xf]
      %v1960 = vld [vmem:[%s1947 + $0x48] sm:$0xff]
      %v1961 = vld [vmem:[%s1947 + $0x50] sm:$0xf]
      %v1962 = vld [vmem:[%s1947 + $0x54] sm:$0xff]
      %v1963 = vld [vmem:[%s1947 + $0x5c] sm:$0xf]
      %v1964 = vld [vmem:[%s1947 + $0x60] sm:$0xff]
      %v1965 = vld [vmem:[%s1947 + $0x68] sm:$0xf]
      %v1966 = vld [vmem:[%s1947 + $0x6c] sm:$0xff]
      %v1967 = vld [vmem:[%s1947 + $0x74] sm:$0xf]
      %v1968 = vld [vmem:[%s1947 + $0x78] sm:$0xff]
      %v1969 = vld [vmem:[%s1947 + $0x80] sm:$0xf]
      %v1970 = vld [vmem:[%s1947 + $0x84] sm:$0xff]
      %v1971 = vld [vmem:[%s1947 + $0x8c] sm:$0xf]
      %v1972 = vld [vmem:[%s1947 + $0x90] sm:$0xff]
      %v1973 = vld [vmem:[%s1947 + $0x98] sm:$0xf]
      %v1974 = vld [vmem:[%s1947 + $0x9c] sm:$0xff]
      %v1975 = vld [vmem:[%s1947 + $0xa4] sm:$0xf]
      %v1976 = vld [vmem:[%s1947 + $0xa8] sm:$0xff]
      %v1977 = vld [vmem:[%s1947 + $0xb0] sm:$0xf]
      %v1978 = vld [vmem:[%s1947 + $0xb4] sm:$0xff]
      %v1979 = vld [vmem:[%s1947 + $0xbc] sm:$0xf]
      %v1980 = vld [vmem:[%s1947 + $0xc0] sm:$0xff]
      %v1981 = vld [vmem:[%s1947 + $0xc8] sm:$0xf]
      %v1982 = vld [vmem:[%s1947 + $0xcc] sm:$0xff]
      %v1983 = vld [vmem:[%s1947 + $0xd4] sm:$0xf]
      %v1984 = vld [vmem:[%s1947 + $0xd8] sm:$0xff]
      %v1985 = vld [vmem:[%s1947 + $0xe0] sm:$0xf]
      %v1986 = vld [vmem:[%s1947 + $0xe4] sm:$0xff]
      %v1987 = vld [vmem:[%s1947 + $0xec] sm:$0xf]
      %v1988 = vld [vmem:[%s1947 + $0xf0] sm:$0xff]
      %v1989 = vld [vmem:[%s1947 + $0xf8] sm:$0xf]
      %v1990 = vld [vmem:[%s1947 + $0xfc] sm:$0xff]
      %v1991 = vld [vmem:[%s1947 + $0x104] sm:$0xf]
      %v1992 = vld [vmem:[%s1947 + $0x108] sm:$0xff]
      %v1993 = vld [vmem:[%s1947 + $0x110] sm:$0xf]
      %v1994 = vld [vmem:[%s1947 + $0x114] sm:$0xff]
      %v1995 = vld [vmem:[%s1947 + $0x11c] sm:$0xf]
      %v1996 = vld [vmem:[%s1947 + $0x120] sm:$0xff]
      %v1997 = vld [vmem:[%s1947 + $0x128] sm:$0xf]
      %v1998 = vld [vmem:[%s1947 + $0x12c] sm:$0xff]
      %v1999 = vld [vmem:[%s1947 + $0x134] sm:$0xf]
      %v2000 = vld [vmem:[%s1947 + $0x138] sm:$0xff]
      %v2001 = vld [vmem:[%s1947 + $0x140] sm:$0xf]
      %v2002 = vld [vmem:[%s1947 + $0x144] sm:$0xff]
      %v2003 = vld [vmem:[%s1947 + $0x14c] sm:$0xf]
      %v2004 = vld [vmem:[%s1947 + $0x150] sm:$0xff]
      %v2005 = vld [vmem:[%s1947 + $0x158] sm:$0xf]
      %v2006 = vld [vmem:[%s1947 + $0x15c] sm:$0xff]
      %v2007 = vld [vmem:[%s1947 + $0x164] sm:$0xf]
      %v2008 = vld [vmem:[%s1947 + $0x168] sm:$0xff]
      %v2009 = vld [vmem:[%s1947 + $0x170] sm:$0xf]
      %v2010 = vld [vmem:[%s1947 + $0x174] sm:$0xff]
      %v2011 = vld [vmem:[%s1947 + $0x17c] sm:$0xf]
      %v2012 = vld [vmem:[%s1947 + $0x180] sm:$0xff]
      %v2013 = vld [vmem:[%s1947 + $0x188] sm:$0xf]
      %v2014 = vld [vmem:[%s1947 + $0x18c] sm:$0xff]
      %v2015 = vld [vmem:[%s1947 + $0x194] sm:$0xf]
      %v2016 = vld [vmem:[%s1947 + $0x198] sm:$0xff]
      %v2017 = vld [vmem:[%s1947 + $0x1a0] sm:$0xf]
      %v2018 = vld [vmem:[%s1947 + $0x1a4] sm:$0xff]
      %v2019 = vld [vmem:[%s1947 + $0x1ac] sm:$0xf]
      %v2020 = vld [vmem:[%s1947 + $0x1b0] sm:$0xff]
      %v2021 = vld [vmem:[%s1947 + $0x1b8] sm:$0xf]
      %v2022 = vld [vmem:[%s1947 + $0x1bc] sm:$0xff]
      %v2023 = vld [vmem:[%s1947 + $0x1c4] sm:$0xf]
      %v2024 = vld [vmem:[%s1947 + $0x1c8] sm:$0xff]
      %v2025 = vld [vmem:[%s1947 + $0x1d0] sm:$0xf]
      %v2026 = vld [vmem:[%s1947 + $0x1d4] sm:$0xff]
      %v2027 = vld [vmem:[%s1947 + $0x1dc] sm:$0xf]
      %v2028 = vld [vmem:[%s1947 + $0x1e0] sm:$0xff]
      %v2029 = vld [vmem:[%s1947 + $0x1e8] sm:$0xf]
      %v2030 = vld [vmem:[%s1947 + $0x1ec] sm:$0xff]
      %v2031 = vld [vmem:[%s1947 + $0x1f4] sm:$0xf]
      %v2032 = vld [vmem:[%s1947 + $0x1f8] sm:$0xff]
      %v2033 = vld [vmem:[%s1947 + $0x200] sm:$0xf]
      %v2034 = vld [vmem:[%s1947 + $0x204] sm:$0xff]
      %v2035 = vld [vmem:[%s1947 + $0x20c] sm:$0xf]
      %v2036 = vld [vmem:[%s1947 + $0x210] sm:$0xff]
      %v2037 = vld [vmem:[%s1947 + $0x218] sm:$0xf]
      %v2038 = vld [vmem:[%s1947 + $0x21c] sm:$0xff]
      %v2039 = vld [vmem:[%s1947 + $0x224] sm:$0xf]
      %v2040 = vld [vmem:[%s1947 + $0x228] sm:$0xff]
      %v2041 = vld [vmem:[%s1947 + $0x230] sm:$0xf]
      %v2042 = vld [vmem:[%s1947 + $0x234] sm:$0xff]
      %v2043 = vld [vmem:[%s1947 + $0x23c] sm:$0xf]
      %v2044 = vld [vmem:[%s1947 + $0x240] sm:$0xff]
      %v2045 = vld [vmem:[%s1947 + $0x248] sm:$0xf]
      %v2046 = vld [vmem:[%s1947 + $0x24c] sm:$0xff]
      %v2047 = vld [vmem:[%s1947 + $0x254] sm:$0xf]
      %v2048 = vld [vmem:[%s1947 + $0x258] sm:$0xff]
      %v2049 = vld [vmem:[%s1947 + $0x260] sm:$0xf]
      %v2050 = vld [vmem:[%s1947 + $0x264] sm:$0xff]
      %v2051 = vld [vmem:[%s1947 + $0x26c] sm:$0xf]
      %v2052 = vld [vmem:[%s1947 + $0x270] sm:$0xff]
      %v2053 = vld [vmem:[%s1947 + $0x278] sm:$0xf]
      %v2054 = vld [vmem:[%s1947 + $0x27c] sm:$0xff]
      %v2055 = vld [vmem:[%s1947 + $0x284] sm:$0xf]
      %v2056 = vld [vmem:[%s1947 + $0x288] sm:$0xff]
      %v2057 = vld [vmem:[%s1947 + $0x290] sm:$0xf]
      %v2058 = vld [vmem:[%s1947 + $0x294] sm:$0xff]
      %v2059 = vld [vmem:[%s1947 + $0x29c] sm:$0xf]
      %v2060 = vld [vmem:[%s1947 + $0x2a0] sm:$0xff]
      %v2061 = vld [vmem:[%s1947 + $0x2a8] sm:$0xf]
      %v2062 = vld [vmem:[%s1947 + $0x2ac] sm:$0xff]
      %v2063 = vld [vmem:[%s1947 + $0x2b4] sm:$0xf]
      %v2064 = vld [vmem:[%s1947 + $0x2b8] sm:$0xff]
      %v2065 = vld [vmem:[%s1947 + $0x2c0] sm:$0xf]
      %v2066 = vld [vmem:[%s1947 + $0x2c4] sm:$0xff]
      %v2067 = vld [vmem:[%s1947 + $0x2cc] sm:$0xf]
      %v2068 = vld [vmem:[%s1947 + $0x2d0] sm:$0xff]
      %v2069 = vld [vmem:[%s1947 + $0x2d8] sm:$0xf]
      %v2070 = vld [vmem:[%s1947 + $0x2dc] sm:$0xff]
      %v2071 = vld [vmem:[%s1947 + $0x2e4] sm:$0xf]
      %v2072 = vld [vmem:[%s1947 + $0x2e8] sm:$0xff]
      %v2073 = vld [vmem:[%s1947 + $0x2f0] sm:$0xf]
      %v2074 = vld [vmem:[%s1947 + $0x2f4] sm:$0xff]
      %v2075 = vld [vmem:[%s1947 + $0x2fc] sm:$0xf]
      %v2076 = vld [vmem:[%s1947 + $0x300] sm:$0xff]
      %v2077 = vld [vmem:[%s1947 + $0x308] sm:$0xf]
      %v2078 = vld [vmem:[%s1947 + $0x30c] sm:$0xff]
      %v2079 = vld [vmem:[%s1947 + $0x314] sm:$0xf]
      %v2080 = vld [vmem:[%s1947 + $0x318] sm:$0xff]
      %v2081 = vld [vmem:[%s1947 + $0x320] sm:$0xf]
      %v2082 = vld [vmem:[%s1947 + $0x324] sm:$0xff]
      %v2083 = vld [vmem:[%s1947 + $0x32c] sm:$0xf]
      %v2084 = vld [vmem:[%s1947 + $0x330] sm:$0xff]
      %v2085 = vld [vmem:[%s1947 + $0x338] sm:$0xf]
      %v2086 = vld [vmem:[%s1947 + $0x33c] sm:$0xff]
      %v2087 = vld [vmem:[%s1947 + $0x344] sm:$0xf]
      %v2088 = vld [vmem:[%s1947 + $0x348] sm:$0xff]
      %v2089 = vld [vmem:[%s1947 + $0x350] sm:$0xf]
      %v2090 = vld [vmem:[%s1947 + $0x354] sm:$0xff]
      %v2091 = vld [vmem:[%s1947 + $0x35c] sm:$0xf]
      %v2092 = vld [vmem:[%s1947 + $0x360] sm:$0xff]
      %v2093 = vld [vmem:[%s1947 + $0x368] sm:$0xf]
      %v2094 = vld [vmem:[%s1947 + $0x36c] sm:$0xff]
      %v2095 = vld [vmem:[%s1947 + $0x374] sm:$0xf]
      %v2096 = vld [vmem:[%s1947 + $0x378] sm:$0xff]
      %v2097 = vld [vmem:[%s1947 + $0x380] sm:$0xf]
      %v2098 = vld [vmem:[%s1947 + $0x384] sm:$0xff]
      %v2099 = vld [vmem:[%s1947 + $0x38c] sm:$0xf]
      %v2100 = vld [vmem:[%s1947 + $0x390] sm:$0xff]
      %v2101 = vld [vmem:[%s1947 + $0x398] sm:$0xf]
      %v2102 = vld [vmem:[%s1947 + $0x39c] sm:$0xff]
      %v2103 = vld [vmem:[%s1947 + $0x3a4] sm:$0xf]
      %v2104 = vld [vmem:[%s1947 + $0x3a8] sm:$0xff]
      %v2105 = vld [vmem:[%s1947 + $0x3b0] sm:$0xf]
      %v2106 = vld [vmem:[%s1947 + $0x3b4] sm:$0xff]
      %v2107 = vld [vmem:[%s1947 + $0x3bc] sm:$0xf]
      %v2108 = vld [vmem:[%s1947 + $0x3c0] sm:$0xff]
      %v2109 = vld [vmem:[%s1947 + $0x3c8] sm:$0xf]
      %v2110 = vld [vmem:[%s1947 + $0x3cc] sm:$0xff]
      %v2111 = vld [vmem:[%s1947 + $0x3d4] sm:$0xf]
      %v2112 = vld [vmem:[%s1947 + $0x3d8] sm:$0xff]
      %v2113 = vld [vmem:[%s1947 + $0x3e0] sm:$0xf]
      %v2114 = vld [vmem:[%s1947 + $0x3e4] sm:$0xff]
      %v2115 = vld [vmem:[%s1947 + $0x3ec] sm:$0xf]
      %v2116 = vld [vmem:[%s1947 + $0x3f0] sm:$0xff]
      %v2117 = vld [vmem:[%s1947 + $0x3f8] sm:$0xf]
      %v2118 = vld [vmem:[%s1947 + $0x3fc] sm:$0xff]
      %v2119 = vld [vmem:[%s1947 + $0x404] sm:$0xf]
      %v2120 = vld [vmem:[%s1947 + $0x408] sm:$0xff]
      %v2121 = vld [vmem:[%s1947 + $0x410] sm:$0xf]
      %v2122 = vld [vmem:[%s1947 + $0x414] sm:$0xff]
      %v2123 = vld [vmem:[%s1947 + $0x41c] sm:$0xf]
      %v2124 = vld [vmem:[%s1947 + $0x420] sm:$0xff]
      %v2125 = vld [vmem:[%s1947 + $0x428] sm:$0xf]
      %v2126 = vld [vmem:[%s1947 + $0x42c] sm:$0xff]
      %v2127 = vld [vmem:[%s1947 + $0x434] sm:$0xf]
      %v2128 = vld [vmem:[%s1947 + $0x438] sm:$0xff]
      %v2129 = vld [vmem:[%s1947 + $0x440] sm:$0xf]
      %v2130 = vld [vmem:[%s1947 + $0x444] sm:$0xff]
      %v2131 = vld [vmem:[%s1947 + $0x44c] sm:$0xf]
      %v2132 = vld [vmem:[%s1947 + $0x450] sm:$0xff]
      %v2133 = vld [vmem:[%s1947 + $0x458] sm:$0xf]
      %v2134 = vld [vmem:[%s1947 + $0x45c] sm:$0xff]
      %v2135 = vld [vmem:[%s1947 + $0x464] sm:$0xf]
      %v2136 = vld [vmem:[%s1947 + $0x468] sm:$0xff]
      %v2137 = vld [vmem:[%s1947 + $0x470] sm:$0xf]
      %v2138 = vld [vmem:[%s1947 + $0x474] sm:$0xff]
      %v2139 = vld [vmem:[%s1947 + $0x47c] sm:$0xf]
      %v2140 = vld [vmem:[%s1947 + $0x480] sm:$0xff]
      %v2141 = vld [vmem:[%s1947 + $0x488] sm:$0xf]
      %v2142 = vld [vmem:[%s1947 + $0x48c] sm:$0xff]
      %v2143 = vld [vmem:[%s1947 + $0x494] sm:$0xf]
      %v2144 = vld [vmem:[%s1947 + $0x498] sm:$0xff]
      %v2145 = vld [vmem:[%s1947 + $0x4a0] sm:$0xf]
      %v2146 = vld [vmem:[%s1947 + $0x4a4] sm:$0xff]
      %v2147 = vld [vmem:[%s1947 + $0x4ac] sm:$0xf]
      %v2148 = vld [vmem:[%s1947 + $0x4b0] sm:$0xff]
      %v2149 = vld [vmem:[%s1947 + $0x4b8] sm:$0xf]
      %v2150 = vld [vmem:[%s1947 + $0x4bc] sm:$0xff]
      %v2151 = vld [vmem:[%s1947 + $0x4c4] sm:$0xf]
      %v2152 = vld [vmem:[%s1947 + $0x4c8] sm:$0xff]
      %v2153 = vld [vmem:[%s1947 + $0x4d0] sm:$0xf]
      %v2154 = vld [vmem:[%s1947 + $0x4d4] sm:$0xff]
      %v2155 = vld [vmem:[%s1947 + $0x4dc] sm:$0xf]
      %v2156 = vld [vmem:[%s1947 + $0x4e0] sm:$0xff]
      %v2157 = vld [vmem:[%s1947 + $0x4e8] sm:$0xf]
      %v2158 = vld [vmem:[%s1947 + $0x4ec] sm:$0xff]
      %v2159 = vld [vmem:[%s1947 + $0x4f4] sm:$0xf]
      %v2160 = vld [vmem:[%s1947 + $0x4f8] sm:$0xff]
      %v2161 = vld [vmem:[%s1947 + $0x500] sm:$0xf]
      %v2162 = vld [vmem:[%s1947 + $0x504] sm:$0xff]
      %v2163 = vld [vmem:[%s1947 + $0x50c] sm:$0xf]
      %v2164 = vld [vmem:[%s1947 + $0x510] sm:$0xff]
      %v2165 = vld [vmem:[%s1947 + $0x518] sm:$0xf]
      %v2166 = vld [vmem:[%s1947 + $0x51c] sm:$0xff]
      %v2167 = vld [vmem:[%s1947 + $0x524] sm:$0xf]
      %v2168 = vld [vmem:[%s1947 + $0x528] sm:$0xff]
      %v2169 = vld [vmem:[%s1947 + $0x530] sm:$0xf]
      %v2170 = vld [vmem:[%s1947 + $0x534] sm:$0xff]
      %v2171 = vld [vmem:[%s1947 + $0x53c] sm:$0xf]
      %v2172 = vld [vmem:[%s1947 + $0x540] sm:$0xff]
      %v2173 = vld [vmem:[%s1947 + $0x548] sm:$0xf]
      %v2174 = vld [vmem:[%s1947 + $0x54c] sm:$0xff]
      %v2175 = vld [vmem:[%s1947 + $0x554] sm:$0xf]
      %v2176 = vld [vmem:[%s1947 + $0x558] sm:$0xff]
      %v2177 = vld [vmem:[%s1947 + $0x560] sm:$0xf]
      %v2178 = vld [vmem:[%s1947 + $0x564] sm:$0xff]
      %v2179 = vld [vmem:[%s1947 + $0x56c] sm:$0xf]
      %v2180 = vld [vmem:[%s1947 + $0x570] sm:$0xff]
      %v2181 = vld [vmem:[%s1947 + $0x578] sm:$0xf]
      %v2182 = vld [vmem:[%s1947 + $0x57c] sm:$0xff]
      %v2183 = vld [vmem:[%s1947 + $0x584] sm:$0xf]
      %v2184 = vld [vmem:[%s1947 + $0x588] sm:$0xff]
      %v2185 = vld [vmem:[%s1947 + $0x590] sm:$0xf]
      %v2186 = vld [vmem:[%s1947 + $0x594] sm:$0xff]
      %v2187 = vld [vmem:[%s1947 + $0x59c] sm:$0xf]
      %v2188 = vld [vmem:[%s1947 + $0x5a0] sm:$0xff]
      %v2189 = vld [vmem:[%s1947 + $0x5a8] sm:$0xf]
      %v2190 = vld [vmem:[%s1947 + $0x5ac] sm:$0xff]
      %v2191 = vld [vmem:[%s1947 + $0x5b4] sm:$0xf]
      %v2192 = vld [vmem:[%s1947 + $0x5b8] sm:$0xff]
      %v2193 = vld [vmem:[%s1947 + $0x5c0] sm:$0xf]
      %v2194 = vld [vmem:[%s1947 + $0x5c4] sm:$0xff]
      %v2195 = vld [vmem:[%s1947 + $0x5cc] sm:$0xf]
      %v2196 = vld [vmem:[%s1947 + $0x5d0] sm:$0xff]
      %v2197 = vld [vmem:[%s1947 + $0x5d8] sm:$0xf]
      %v2198 = vld [vmem:[%s1947 + $0x5dc] sm:$0xff]
      %v2199 = vld [vmem:[%s1947 + $0x5e4] sm:$0xf]
      %v2200 = vld [vmem:[%s1947 + $0x5e8] sm:$0xff]
      %v2201 = vld [vmem:[%s1947 + $0x5f0] sm:$0xf]
      %v2202 = vld [vmem:[%s1947 + $0x5f4] sm:$0xff]
      %v2203 = vld [vmem:[%s1947 + $0x5fc] sm:$0xf]
      %v2460 = vunpack.c.l.b16 %v1948
      %v2461 = vunpack.c.h.b16 %v1948
      %v2462 = vunpack.c.l.b16 %v1949
      %v2463 = vunpack.c.l.b16 %v1950
      %v2464 = vunpack.c.h.b16 %v1950
      %v2465 = vunpack.c.l.b16 %v1951
      %v2466 = vunpack.c.l.b16 %v1952
      %v2467 = vunpack.c.h.b16 %v1952
      %v2468 = vunpack.c.l.b16 %v1953
      %v2469 = vunpack.c.l.b16 %v1954
      %v2470 = vunpack.c.h.b16 %v1954
      %v2471 = vunpack.c.l.b16 %v1955
      %v2472 = vunpack.c.l.b16 %v1956
      %v2473 = vunpack.c.h.b16 %v1956
      %v2474 = vunpack.c.l.b16 %v1957
      %v2475 = vunpack.c.l.b16 %v1958
      %v2476 = vunpack.c.h.b16 %v1958
      %v2477 = vunpack.c.l.b16 %v1959
      %v2478 = vunpack.c.l.b16 %v1960
      %v2479 = vunpack.c.h.b16 %v1960
      %v2480 = vunpack.c.l.b16 %v1961
      %v2481 = vunpack.c.l.b16 %v1962
      %v2482 = vunpack.c.h.b16 %v1962
      %v2483 = vunpack.c.l.b16 %v1963
      %v2484 = vunpack.c.l.b16 %v1964
      %v2485 = vunpack.c.h.b16 %v1964
      %v2486 = vunpack.c.l.b16 %v1965
      %v2487 = vunpack.c.l.b16 %v1966
      %v2488 = vunpack.c.h.b16 %v1966
      %v2489 = vunpack.c.l.b16 %v1967
      %v2490 = vunpack.c.l.b16 %v1968
      %v2491 = vunpack.c.h.b16 %v1968
      %v2492 = vunpack.c.l.b16 %v1969
      %v2493 = vunpack.c.l.b16 %v1970
      %v2494 = vunpack.c.h.b16 %v1970
      %v2495 = vunpack.c.l.b16 %v1971
      %v2496 = vunpack.c.l.b16 %v1972
      %v2497 = vunpack.c.h.b16 %v1972
      %v2498 = vunpack.c.l.b16 %v1973
      %v2499 = vunpack.c.l.b16 %v1974
      %v2500 = vunpack.c.h.b16 %v1974
      %v2501 = vunpack.c.l.b16 %v1975
      %v2502 = vunpack.c.l.b16 %v1976
      %v2503 = vunpack.c.h.b16 %v1976
      %v2504 = vunpack.c.l.b16 %v1977
      %v2505 = vunpack.c.l.b16 %v1978
      %v2506 = vunpack.c.h.b16 %v1978
      %v2507 = vunpack.c.l.b16 %v1979
      %v2508 = vunpack.c.l.b16 %v1980
      %v2509 = vunpack.c.h.b16 %v1980
      %v2510 = vunpack.c.l.b16 %v1981
      %v2511 = vunpack.c.l.b16 %v1982
      %v2512 = vunpack.c.h.b16 %v1982
      %v2513 = vunpack.c.l.b16 %v1983
      %v2514 = vunpack.c.l.b16 %v1984
      %v2515 = vunpack.c.h.b16 %v1984
      %v2516 = vunpack.c.l.b16 %v1985
      %v2517 = vunpack.c.l.b16 %v1986
      %v2518 = vunpack.c.h.b16 %v1986
      %v2519 = vunpack.c.l.b16 %v1987
      %v2520 = vunpack.c.l.b16 %v1988
      %v2521 = vunpack.c.h.b16 %v1988
      %v2522 = vunpack.c.l.b16 %v1989
      %v2523 = vunpack.c.l.b16 %v1990
      %v2524 = vunpack.c.h.b16 %v1990
      %v2525 = vunpack.c.l.b16 %v1991
      %v2526 = vunpack.c.l.b16 %v1992
      %v2527 = vunpack.c.h.b16 %v1992
      %v2528 = vunpack.c.l.b16 %v1993
      %v2529 = vunpack.c.l.b16 %v1994
      %v2530 = vunpack.c.h.b16 %v1994
      %v2531 = vunpack.c.l.b16 %v1995
      %v2532 = vunpack.c.l.b16 %v1996
      %v2533 = vunpack.c.h.b16 %v1996
      %v2534 = vunpack.c.l.b16 %v1997
      %v2535 = vunpack.c.l.b16 %v1998
      %v2536 = vunpack.c.h.b16 %v1998
      %v2537 = vunpack.c.l.b16 %v1999
      %v2538 = vunpack.c.l.b16 %v2000
      %v2539 = vunpack.c.h.b16 %v2000
      %v2540 = vunpack.c.l.b16 %v2001
      %v2541 = vunpack.c.l.b16 %v2002
      %v2542 = vunpack.c.h.b16 %v2002
      %v2543 = vunpack.c.l.b16 %v2003
      %v2544 = vunpack.c.l.b16 %v2004
      %v2545 = vunpack.c.h.b16 %v2004
      %v2546 = vunpack.c.l.b16 %v2005
      %v2547 = vunpack.c.l.b16 %v2006
      %v2548 = vunpack.c.h.b16 %v2006
      %v2549 = vunpack.c.l.b16 %v2007
      %v2550 = vunpack.c.l.b16 %v2008
      %v2551 = vunpack.c.h.b16 %v2008
      %v2552 = vunpack.c.l.b16 %v2009
      %v2553 = vunpack.c.l.b16 %v2010
      %v2554 = vunpack.c.h.b16 %v2010
      %v2555 = vunpack.c.l.b16 %v2011
      %v2556 = vunpack.c.l.b16 %v2012
      %v2557 = vunpack.c.h.b16 %v2012
      %v2558 = vunpack.c.l.b16 %v2013
      %v2559 = vunpack.c.l.b16 %v2014
      %v2560 = vunpack.c.h.b16 %v2014
      %v2561 = vunpack.c.l.b16 %v2015
      %v2562 = vunpack.c.l.b16 %v2016
      %v2563 = vunpack.c.h.b16 %v2016
      %v2564 = vunpack.c.l.b16 %v2017
      %v2565 = vunpack.c.l.b16 %v2018
      %v2566 = vunpack.c.h.b16 %v2018
      %v2567 = vunpack.c.l.b16 %v2019
      %v2568 = vunpack.c.l.b16 %v2020
      %v2569 = vunpack.c.h.b16 %v2020
      %v2570 = vunpack.c.l.b16 %v2021
      %v2571 = vunpack.c.l.b16 %v2022
      %v2572 = vunpack.c.h.b16 %v2022
      %v2573 = vunpack.c.l.b16 %v2023
      %v2574 = vunpack.c.l.b16 %v2024
      %v2575 = vunpack.c.h.b16 %v2024
      %v2576 = vunpack.c.l.b16 %v2025
      %v2577 = vunpack.c.l.b16 %v2026
      %v2578 = vunpack.c.h.b16 %v2026
      %v2579 = vunpack.c.l.b16 %v2027
      %v2580 = vunpack.c.l.b16 %v2028
      %v2581 = vunpack.c.h.b16 %v2028
      %v2582 = vunpack.c.l.b16 %v2029
      %v2583 = vunpack.c.l.b16 %v2030
      %v2584 = vunpack.c.h.b16 %v2030
      %v2585 = vunpack.c.l.b16 %v2031
      %v2586 = vunpack.c.l.b16 %v2032
      %v2587 = vunpack.c.h.b16 %v2032
      %v2588 = vunpack.c.l.b16 %v2033
      %v2589 = vunpack.c.l.b16 %v2034
      %v2590 = vunpack.c.h.b16 %v2034
      %v2591 = vunpack.c.l.b16 %v2035
      %v2592 = vunpack.c.l.b16 %v2036
      %v2593 = vunpack.c.h.b16 %v2036
      %v2594 = vunpack.c.l.b16 %v2037
      %v2595 = vunpack.c.l.b16 %v2038
      %v2596 = vunpack.c.h.b16 %v2038
      %v2597 = vunpack.c.l.b16 %v2039
      %v2598 = vunpack.c.l.b16 %v2040
      %v2599 = vunpack.c.h.b16 %v2040
      %v2600 = vunpack.c.l.b16 %v2041
      %v2601 = vunpack.c.l.b16 %v2042
      %v2602 = vunpack.c.h.b16 %v2042
      %v2603 = vunpack.c.l.b16 %v2043
      %v2604 = vunpack.c.l.b16 %v2044
      %v2605 = vunpack.c.h.b16 %v2044
      %v2606 = vunpack.c.l.b16 %v2045
      %v2607 = vunpack.c.l.b16 %v2046
      %v2608 = vunpack.c.h.b16 %v2046
      %v2609 = vunpack.c.l.b16 %v2047
      %v2610 = vunpack.c.l.b16 %v2048
      %v2611 = vunpack.c.h.b16 %v2048
      %v2612 = vunpack.c.l.b16 %v2049
      %v2613 = vunpack.c.l.b16 %v2050
      %v2614 = vunpack.c.h.b16 %v2050
      %v2615 = vunpack.c.l.b16 %v2051
      %v2616 = vunpack.c.l.b16 %v2052
      %v2617 = vunpack.c.h.b16 %v2052
      %v2618 = vunpack.c.l.b16 %v2053
      %v2619 = vunpack.c.l.b16 %v2054
      %v2620 = vunpack.c.h.b16 %v2054
      %v2621 = vunpack.c.l.b16 %v2055
      %v2622 = vunpack.c.l.b16 %v2056
      %v2623 = vunpack.c.h.b16 %v2056
      %v2624 = vunpack.c.l.b16 %v2057
      %v2625 = vunpack.c.l.b16 %v2058
      %v2626 = vunpack.c.h.b16 %v2058
      %v2627 = vunpack.c.l.b16 %v2059
      %v2628 = vunpack.c.l.b16 %v2060
      %v2629 = vunpack.c.h.b16 %v2060
      %v2630 = vunpack.c.l.b16 %v2061
      %v2631 = vunpack.c.l.b16 %v2062
      %v2632 = vunpack.c.h.b16 %v2062
      %v2633 = vunpack.c.l.b16 %v2063
      %v2634 = vunpack.c.l.b16 %v2064
      %v2635 = vunpack.c.h.b16 %v2064
      %v2636 = vunpack.c.l.b16 %v2065
      %v2637 = vunpack.c.l.b16 %v2066
      %v2638 = vunpack.c.h.b16 %v2066
      %v2639 = vunpack.c.l.b16 %v2067
      %v2640 = vunpack.c.l.b16 %v2068
      %v2641 = vunpack.c.h.b16 %v2068
      %v2642 = vunpack.c.l.b16 %v2069
      %v2643 = vunpack.c.l.b16 %v2070
      %v2644 = vunpack.c.h.b16 %v2070
      %v2645 = vunpack.c.l.b16 %v2071
      %v2646 = vunpack.c.l.b16 %v2072
      %v2647 = vunpack.c.h.b16 %v2072
      %v2648 = vunpack.c.l.b16 %v2073
      %v2649 = vunpack.c.l.b16 %v2074
      %v2650 = vunpack.c.h.b16 %v2074
      %v2651 = vunpack.c.l.b16 %v2075
      %v2652 = vunpack.c.l.b16 %v2076
      %v2653 = vunpack.c.h.b16 %v2076
      %v2654 = vunpack.c.l.b16 %v2077
      %v2655 = vunpack.c.l.b16 %v2078
      %v2656 = vunpack.c.h.b16 %v2078
      %v2657 = vunpack.c.l.b16 %v2079
      %v2658 = vunpack.c.l.b16 %v2080
      %v2659 = vunpack.c.h.b16 %v2080
      %v2660 = vunpack.c.l.b16 %v2081
      %v2661 = vunpack.c.l.b16 %v2082
      %v2662 = vunpack.c.h.b16 %v2082
      %v2663 = vunpack.c.l.b16 %v2083
      %v2664 = vunpack.c.l.b16 %v2084
      %v2665 = vunpack.c.h.b16 %v2084
      %v2666 = vunpack.c.l.b16 %v2085
      %v2667 = vunpack.c.l.b16 %v2086
      %v2668 = vunpack.c.h.b16 %v2086
      %v2669 = vunpack.c.l.b16 %v2087
      %v2670 = vunpack.c.l.b16 %v2088
      %v2671 = vunpack.c.h.b16 %v2088
      %v2672 = vunpack.c.l.b16 %v2089
      %v2673 = vunpack.c.l.b16 %v2090
      %v2674 = vunpack.c.h.b16 %v2090
      %v2675 = vunpack.c.l.b16 %v2091
      %v2676 = vunpack.c.l.b16 %v2092
      %v2677 = vunpack.c.h.b16 %v2092
      %v2678 = vunpack.c.l.b16 %v2093
      %v2679 = vunpack.c.l.b16 %v2094
      %v2680 = vunpack.c.h.b16 %v2094
      %v2681 = vunpack.c.l.b16 %v2095
      %v2682 = vunpack.c.l.b16 %v2096
      %v2683 = vunpack.c.h.b16 %v2096
      %v2684 = vunpack.c.l.b16 %v2097
      %v2685 = vunpack.c.l.b16 %v2098
      %v2686 = vunpack.c.h.b16 %v2098
      %v2687 = vunpack.c.l.b16 %v2099
      %v2688 = vunpack.c.l.b16 %v2100
      %v2689 = vunpack.c.h.b16 %v2100
      %v2690 = vunpack.c.l.b16 %v2101
      %v2691 = vunpack.c.l.b16 %v2102
      %v2692 = vunpack.c.h.b16 %v2102
      %v2693 = vunpack.c.l.b16 %v2103
      %v2694 = vunpack.c.l.b16 %v2104
      %v2695 = vunpack.c.h.b16 %v2104
      %v2696 = vunpack.c.l.b16 %v2105
      %v2697 = vunpack.c.l.b16 %v2106
      %v2698 = vunpack.c.h.b16 %v2106
      %v2699 = vunpack.c.l.b16 %v2107
      %v2700 = vunpack.c.l.b16 %v2108
      %v2701 = vunpack.c.h.b16 %v2108
      %v2702 = vunpack.c.l.b16 %v2109
      %v2703 = vunpack.c.l.b16 %v2110
      %v2704 = vunpack.c.h.b16 %v2110
      %v2705 = vunpack.c.l.b16 %v2111
      %v2706 = vunpack.c.l.b16 %v2112
      %v2707 = vunpack.c.h.b16 %v2112
      %v2708 = vunpack.c.l.b16 %v2113
      %v2709 = vunpack.c.l.b16 %v2114
      %v2710 = vunpack.c.h.b16 %v2114
      %v2711 = vunpack.c.l.b16 %v2115
      %v2712 = vunpack.c.l.b16 %v2116
      %v2713 = vunpack.c.h.b16 %v2116
      %v2714 = vunpack.c.l.b16 %v2117
      %v2715 = vunpack.c.l.b16 %v2118
      %v2716 = vunpack.c.h.b16 %v2118
      %v2717 = vunpack.c.l.b16 %v2119
      %v2718 = vunpack.c.l.b16 %v2120
      %v2719 = vunpack.c.h.b16 %v2120
      %v2720 = vunpack.c.l.b16 %v2121
      %v2721 = vunpack.c.l.b16 %v2122
      %v2722 = vunpack.c.h.b16 %v2122
      %v2723 = vunpack.c.l.b16 %v2123
      %v2724 = vunpack.c.l.b16 %v2124
      %v2725 = vunpack.c.h.b16 %v2124
      %v2726 = vunpack.c.l.b16 %v2125
      %v2727 = vunpack.c.l.b16 %v2126
      %v2728 = vunpack.c.h.b16 %v2126
      %v2729 = vunpack.c.l.b16 %v2127
      %v2730 = vunpack.c.l.b16 %v2128
      %v2731 = vunpack.c.h.b16 %v2128
      %v2732 = vunpack.c.l.b16 %v2129
      %v2733 = vunpack.c.l.b16 %v2130
      %v2734 = vunpack.c.h.b16 %v2130
      %v2735 = vunpack.c.l.b16 %v2131
      %v2736 = vunpack.c.l.b16 %v2132
      %v2737 = vunpack.c.h.b16 %v2132
      %v2738 = vunpack.c.l.b16 %v2133
      %v2739 = vunpack.c.l.b16 %v2134
      %v2740 = vunpack.c.h.b16 %v2134
      %v2741 = vunpack.c.l.b16 %v2135
      %v2742 = vunpack.c.l.b16 %v2136
      %v2743 = vunpack.c.h.b16 %v2136
      %v2744 = vunpack.c.l.b16 %v2137
      %v2745 = vunpack.c.l.b16 %v2138
      %v2746 = vunpack.c.h.b16 %v2138
      %v2747 = vunpack.c.l.b16 %v2139
      %v2748 = vunpack.c.l.b16 %v2140
      %v2749 = vunpack.c.h.b16 %v2140
      %v2750 = vunpack.c.l.b16 %v2141
      %v2751 = vunpack.c.l.b16 %v2142
      %v2752 = vunpack.c.h.b16 %v2142
      %v2753 = vunpack.c.l.b16 %v2143
      %v2754 = vunpack.c.l.b16 %v2144
      %v2755 = vunpack.c.h.b16 %v2144
      %v2756 = vunpack.c.l.b16 %v2145
      %v2757 = vunpack.c.l.b16 %v2146
      %v2758 = vunpack.c.h.b16 %v2146
      %v2759 = vunpack.c.l.b16 %v2147
      %v2760 = vunpack.c.l.b16 %v2148
      %v2761 = vunpack.c.h.b16 %v2148
      %v2762 = vunpack.c.l.b16 %v2149
      %v2763 = vunpack.c.l.b16 %v2150
      %v2764 = vunpack.c.h.b16 %v2150
      %v2765 = vunpack.c.l.b16 %v2151
      %v2766 = vunpack.c.l.b16 %v2152
      %v2767 = vunpack.c.h.b16 %v2152
      %v2768 = vunpack.c.l.b16 %v2153
      %v2769 = vunpack.c.l.b16 %v2154
      %v2770 = vunpack.c.h.b16 %v2154
      %v2771 = vunpack.c.l.b16 %v2155
      %v2772 = vunpack.c.l.b16 %v2156
      %v2773 = vunpack.c.h.b16 %v2156
      %v2774 = vunpack.c.l.b16 %v2157
      %v2775 = vunpack.c.l.b16 %v2158
      %v2776 = vunpack.c.h.b16 %v2158
      %v2777 = vunpack.c.l.b16 %v2159
      %v2778 = vunpack.c.l.b16 %v2160
      %v2779 = vunpack.c.h.b16 %v2160
      %v2780 = vunpack.c.l.b16 %v2161
      %v2781 = vunpack.c.l.b16 %v2162
      %v2782 = vunpack.c.h.b16 %v2162
      %v2783 = vunpack.c.l.b16 %v2163
      %v2784 = vunpack.c.l.b16 %v2164
      %v2785 = vunpack.c.h.b16 %v2164
      %v2786 = vunpack.c.l.b16 %v2165
      %v2787 = vunpack.c.l.b16 %v2166
      %v2788 = vunpack.c.h.b16 %v2166
      %v2789 = vunpack.c.l.b16 %v2167
      %v2790 = vunpack.c.l.b16 %v2168
      %v2791 = vunpack.c.h.b16 %v2168
      %v2792 = vunpack.c.l.b16 %v2169
      %v2793 = vunpack.c.l.b16 %v2170
      %v2794 = vunpack.c.h.b16 %v2170
      %v2795 = vunpack.c.l.b16 %v2171
      %v2796 = vunpack.c.l.b16 %v2172
      %v2797 = vunpack.c.h.b16 %v2172
      %v2798 = vunpack.c.l.b16 %v2173
      %v2799 = vunpack.c.l.b16 %v2174
      %v2800 = vunpack.c.h.b16 %v2174
      %v2801 = vunpack.c.l.b16 %v2175
      %v2802 = vunpack.c.l.b16 %v2176
      %v2803 = vunpack.c.h.b16 %v2176
      %v2804 = vunpack.c.l.b16 %v2177
      %v2805 = vunpack.c.l.b16 %v2178
      %v2806 = vunpack.c.h.b16 %v2178
      %v2807 = vunpack.c.l.b16 %v2179
      %v2808 = vunpack.c.l.b16 %v2180
      %v2809 = vunpack.c.h.b16 %v2180
      %v2810 = vunpack.c.l.b16 %v2181
      %v2811 = vunpack.c.l.b16 %v2182
      %v2812 = vunpack.c.h.b16 %v2182
      %v2813 = vunpack.c.l.b16 %v2183
      %v2814 = vunpack.c.l.b16 %v2184
      %v2815 = vunpack.c.h.b16 %v2184
      %v2816 = vunpack.c.l.b16 %v2185
      %v2817 = vunpack.c.l.b16 %v2186
      %v2818 = vunpack.c.h.b16 %v2186
      %v2819 = vunpack.c.l.b16 %v2187
      %v2820 = vunpack.c.l.b16 %v2188
      %v2821 = vunpack.c.h.b16 %v2188
      %v2822 = vunpack.c.l.b16 %v2189
      %v2823 = vunpack.c.l.b16 %v2190
      %v2824 = vunpack.c.h.b16 %v2190
      %v2825 = vunpack.c.l.b16 %v2191
      %v2826 = vunpack.c.l.b16 %v2192
      %v2827 = vunpack.c.h.b16 %v2192
      %v2828 = vunpack.c.l.b16 %v2193
      %v2829 = vunpack.c.l.b16 %v2194
      %v2830 = vunpack.c.h.b16 %v2194
      %v2831 = vunpack.c.l.b16 %v2195
      %v2832 = vunpack.c.l.b16 %v2196
      %v2833 = vunpack.c.h.b16 %v2196
      %v2834 = vunpack.c.l.b16 %v2197
      %v2835 = vunpack.c.l.b16 %v2198
      %v2836 = vunpack.c.h.b16 %v2198
      %v2837 = vunpack.c.l.b16 %v2199
      %v2838 = vunpack.c.l.b16 %v2200
      %v2839 = vunpack.c.h.b16 %v2200
      %v2840 = vunpack.c.l.b16 %v2201
      %v2841 = vunpack.c.l.b16 %v2202
      %v2842 = vunpack.c.h.b16 %v2202
      %v2843 = vunpack.c.l.b16 %v2203
      %v2844 = vpack.c.b16 %v2463, %v2460
      %v2845 = vpack.c.b16 %v2464, %v2461
      %v2846 = vpack.c.b16 %v2465, %v2462
      %v2847 = vpack.c.b16 %v2469, %v2466
      %v2848 = vpack.c.b16 %v2470, %v2467
      %v2849 = vpack.c.b16 %v2471, %v2468
      %v2850 = vpack.c.b16 %v2475, %v2472
      %v2851 = vpack.c.b16 %v2476, %v2473
      %v2852 = vpack.c.b16 %v2477, %v2474
      %v2853 = vpack.c.b16 %v2481, %v2478
      %v2854 = vpack.c.b16 %v2482, %v2479
      %v2855 = vpack.c.b16 %v2483, %v2480
      %v2856 = vpack.c.b16 %v2487, %v2484
      %v2857 = vpack.c.b16 %v2488, %v2485
      %v2858 = vpack.c.b16 %v2489, %v2486
      %v2859 = vpack.c.b16 %v2493, %v2490
      %v2860 = vpack.c.b16 %v2494, %v2491
      %v2861 = vpack.c.b16 %v2495, %v2492
      %v2862 = vpack.c.b16 %v2499, %v2496
      %v2863 = vpack.c.b16 %v2500, %v2497
      %v2864 = vpack.c.b16 %v2501, %v2498
      %v2865 = vpack.c.b16 %v2505, %v2502
      %v2866 = vpack.c.b16 %v2506, %v2503
      %v2867 = vpack.c.b16 %v2507, %v2504
      %v2868 = vpack.c.b16 %v2511, %v2508
      %v2869 = vpack.c.b16 %v2512, %v2509
      %v2870 = vpack.c.b16 %v2513, %v2510
      %v2871 = vpack.c.b16 %v2517, %v2514
      %v2872 = vpack.c.b16 %v2518, %v2515
      %v2873 = vpack.c.b16 %v2519, %v2516
      %v2874 = vpack.c.b16 %v2523, %v2520
      %v2875 = vpack.c.b16 %v2524, %v2521
      %v2876 = vpack.c.b16 %v2525, %v2522
      %v2877 = vpack.c.b16 %v2529, %v2526
      %v2878 = vpack.c.b16 %v2530, %v2527
      %v2879 = vpack.c.b16 %v2531, %v2528
      %v2880 = vpack.c.b16 %v2535, %v2532
      %v2881 = vpack.c.b16 %v2536, %v2533
      %v2882 = vpack.c.b16 %v2537, %v2534
      %v2883 = vpack.c.b16 %v2541, %v2538
      %v2884 = vpack.c.b16 %v2542, %v2539
      %v2885 = vpack.c.b16 %v2543, %v2540
      %v2886 = vpack.c.b16 %v2547, %v2544
      %v2887 = vpack.c.b16 %v2548, %v2545
      %v2888 = vpack.c.b16 %v2549, %v2546
      %v2889 = vpack.c.b16 %v2553, %v2550
      %v2890 = vpack.c.b16 %v2554, %v2551
      %v2891 = vpack.c.b16 %v2555, %v2552
      %v2892 = vpack.c.b16 %v2559, %v2556
      %v2893 = vpack.c.b16 %v2560, %v2557
      %v2894 = vpack.c.b16 %v2561, %v2558
      %v2895 = vpack.c.b16 %v2565, %v2562
      %v2896 = vpack.c.b16 %v2566, %v2563
      %v2897 = vpack.c.b16 %v2567, %v2564
      %v2898 = vpack.c.b16 %v2571, %v2568
      %v2899 = vpack.c.b16 %v2572, %v2569
      %v2900 = vpack.c.b16 %v2573, %v2570
      %v2901 = vpack.c.b16 %v2577, %v2574
      %v2902 = vpack.c.b16 %v2578, %v2575
      %v2903 = vpack.c.b16 %v2579, %v2576
      %v2904 = vpack.c.b16 %v2583, %v2580
      %v2905 = vpack.c.b16 %v2584, %v2581
      %v2906 = vpack.c.b16 %v2585, %v2582
      %v2907 = vpack.c.b16 %v2589, %v2586
      %v2908 = vpack.c.b16 %v2590, %v2587
      %v2909 = vpack.c.b16 %v2591, %v2588
      %v2910 = vpack.c.b16 %v2595, %v2592
      %v2911 = vpack.c.b16 %v2596, %v2593
      %v2912 = vpack.c.b16 %v2597, %v2594
      %v2913 = vpack.c.b16 %v2601, %v2598
      %v2914 = vpack.c.b16 %v2602, %v2599
      %v2915 = vpack.c.b16 %v2603, %v2600
      %v2916 = vpack.c.b16 %v2607, %v2604
      %v2917 = vpack.c.b16 %v2608, %v2605
      %v2918 = vpack.c.b16 %v2609, %v2606
      %v2919 = vpack.c.b16 %v2613, %v2610
      %v2920 = vpack.c.b16 %v2614, %v2611
      %v2921 = vpack.c.b16 %v2615, %v2612
      %v2922 = vpack.c.b16 %v2619, %v2616
      %v2923 = vpack.c.b16 %v2620, %v2617
      %v2924 = vpack.c.b16 %v2621, %v2618
      %v2925 = vpack.c.b16 %v2625, %v2622
      %v2926 = vpack.c.b16 %v2626, %v2623
      %v2927 = vpack.c.b16 %v2627, %v2624
      %v2928 = vpack.c.b16 %v2631, %v2628
      %v2929 = vpack.c.b16 %v2632, %v2629
      %v2930 = vpack.c.b16 %v2633, %v2630
      %v2931 = vpack.c.b16 %v2637, %v2634
      %v2932 = vpack.c.b16 %v2638, %v2635
      %v2933 = vpack.c.b16 %v2639, %v2636
      %v2934 = vpack.c.b16 %v2643, %v2640
      %v2935 = vpack.c.b16 %v2644, %v2641
      %v2936 = vpack.c.b16 %v2645, %v2642
      %v2937 = vpack.c.b16 %v2649, %v2646
      %v2938 = vpack.c.b16 %v2650, %v2647
      %v2939 = vpack.c.b16 %v2651, %v2648
      %v2940 = vpack.c.b16 %v2655, %v2652
      %v2941 = vpack.c.b16 %v2656, %v2653
      %v2942 = vpack.c.b16 %v2657, %v2654
      %v2943 = vpack.c.b16 %v2661, %v2658
      %v2944 = vpack.c.b16 %v2662, %v2659
      %v2945 = vpack.c.b16 %v2663, %v2660
      %v2946 = vpack.c.b16 %v2667, %v2664
      %v2947 = vpack.c.b16 %v2668, %v2665
      %v2948 = vpack.c.b16 %v2669, %v2666
      %v2949 = vpack.c.b16 %v2673, %v2670
      %v2950 = vpack.c.b16 %v2674, %v2671
      %v2951 = vpack.c.b16 %v2675, %v2672
      %v2952 = vpack.c.b16 %v2679, %v2676
      %v2953 = vpack.c.b16 %v2680, %v2677
      %v2954 = vpack.c.b16 %v2681, %v2678
      %v2955 = vpack.c.b16 %v2685, %v2682
      %v2956 = vpack.c.b16 %v2686, %v2683
      %v2957 = vpack.c.b16 %v2687, %v2684
      %v2958 = vpack.c.b16 %v2691, %v2688
      %v2959 = vpack.c.b16 %v2692, %v2689
      %v2960 = vpack.c.b16 %v2693, %v2690
      %v2961 = vpack.c.b16 %v2697, %v2694
      %v2962 = vpack.c.b16 %v2698, %v2695
      %v2963 = vpack.c.b16 %v2699, %v2696
      %v2964 = vpack.c.b16 %v2703, %v2700
      %v2965 = vpack.c.b16 %v2704, %v2701
      %v2966 = vpack.c.b16 %v2705, %v2702
      %v2967 = vpack.c.b16 %v2709, %v2706
      %v2968 = vpack.c.b16 %v2710, %v2707
      %v2969 = vpack.c.b16 %v2711, %v2708
      %v2970 = vpack.c.b16 %v2715, %v2712
      %v2971 = vpack.c.b16 %v2716, %v2713
      %v2972 = vpack.c.b16 %v2717, %v2714
      %v2973 = vpack.c.b16 %v2721, %v2718
      %v2974 = vpack.c.b16 %v2722, %v2719
      %v2975 = vpack.c.b16 %v2723, %v2720
      %v2976 = vpack.c.b16 %v2727, %v2724
      %v2977 = vpack.c.b16 %v2728, %v2725
      %v2978 = vpack.c.b16 %v2729, %v2726
      %v2979 = vpack.c.b16 %v2733, %v2730
      %v2980 = vpack.c.b16 %v2734, %v2731
      %v2981 = vpack.c.b16 %v2735, %v2732
      %v2982 = vpack.c.b16 %v2739, %v2736
      %v2983 = vpack.c.b16 %v2740, %v2737
      %v2984 = vpack.c.b16 %v2741, %v2738
      %v2985 = vpack.c.b16 %v2745, %v2742
      %v2986 = vpack.c.b16 %v2746, %v2743
      %v2987 = vpack.c.b16 %v2747, %v2744
      %v2988 = vpack.c.b16 %v2751, %v2748
      %v2989 = vpack.c.b16 %v2752, %v2749
      %v2990 = vpack.c.b16 %v2753, %v2750
      %v2991 = vpack.c.b16 %v2757, %v2754
      %v2992 = vpack.c.b16 %v2758, %v2755
      %v2993 = vpack.c.b16 %v2759, %v2756
      %v2994 = vpack.c.b16 %v2763, %v2760
      %v2995 = vpack.c.b16 %v2764, %v2761
      %v2996 = vpack.c.b16 %v2765, %v2762
      %v2997 = vpack.c.b16 %v2769, %v2766
      %v2998 = vpack.c.b16 %v2770, %v2767
      %v2999 = vpack.c.b16 %v2771, %v2768
      %v3000 = vpack.c.b16 %v2775, %v2772
      %v3001 = vpack.c.b16 %v2776, %v2773
      %v3002 = vpack.c.b16 %v2777, %v2774
      %v3003 = vpack.c.b16 %v2781, %v2778
      %v3004 = vpack.c.b16 %v2782, %v2779
      %v3005 = vpack.c.b16 %v2783, %v2780
      %v3006 = vpack.c.b16 %v2787, %v2784
      %v3007 = vpack.c.b16 %v2788, %v2785
      %v3008 = vpack.c.b16 %v2789, %v2786
      %v3009 = vpack.c.b16 %v2793, %v2790
      %v3010 = vpack.c.b16 %v2794, %v2791
      %v3011 = vpack.c.b16 %v2795, %v2792
      %v3012 = vpack.c.b16 %v2799, %v2796
      %v3013 = vpack.c.b16 %v2800, %v2797
      %v3014 = vpack.c.b16 %v2801, %v2798
      %v3015 = vpack.c.b16 %v2805, %v2802
      %v3016 = vpack.c.b16 %v2806, %v2803
      %v3017 = vpack.c.b16 %v2807, %v2804
      %v3018 = vpack.c.b16 %v2811, %v2808
      %v3019 = vpack.c.b16 %v2812, %v2809
      %v3020 = vpack.c.b16 %v2813, %v2810
      %v3021 = vpack.c.b16 %v2817, %v2814
      %v3022 = vpack.c.b16 %v2818, %v2815
      %v3023 = vpack.c.b16 %v2819, %v2816
      %v3024 = vpack.c.b16 %v2823, %v2820
      %v3025 = vpack.c.b16 %v2824, %v2821
      %v3026 = vpack.c.b16 %v2825, %v2822
      %v3027 = vpack.c.b16 %v2829, %v2826
      %v3028 = vpack.c.b16 %v2830, %v2827
      %v3029 = vpack.c.b16 %v2831, %v2828
      %v3030 = vpack.c.b16 %v2835, %v2832
      %v3031 = vpack.c.b16 %v2836, %v2833
      %v3032 = vpack.c.b16 %v2837, %v2834
      %v3033 = vpack.c.b16 %v2841, %v2838
      %v3034 = vpack.c.b16 %v2842, %v2839
      %v3035 = vpack.c.b16 %v2843, %v2840
      %3228 = vmatprep.subr.bf16.mxu0 %v2845
      %3229 = vmatpush1.bf16.msra.mxu0 %v2844
      %3230 = vmatprep.subr.bf16.mxu0 %v2848
      %3231 = vmatpush1.bf16.msra.mxu0 %v2847
      %3232 = vmatprep.subr.bf16.mxu0 %v2851
      %3233 = vmatpush1.bf16.msra.mxu0 %v2850
      %3234 = vmatprep.subr.bf16.mxu0 %v2854
      %3235 = vmatpush1.bf16.msra.mxu0 %v2853
      %3236 = vmatprep.subr.bf16.mxu0 %v2857
      %3237 = vmatpush1.bf16.msra.mxu0 %v2856
      %3238 = vmatprep.subr.bf16.mxu0 %v2860
      %3239 = vmatpush1.bf16.msra.mxu0 %v2859
      %3240 = vmatprep.subr.bf16.mxu0 %v2863
      %3241 = vmatpush1.bf16.msra.mxu0 %v2862
      %3242 = vmatprep.subr.bf16.mxu0 %v2866
      %3243 = vmatpush1.bf16.msra.mxu0 %v2865
      %3244 = vmatprep.subr.bf16.mxu0 %v2869
      %3245 = vmatpush1.bf16.msra.mxu0 %v2868
      %3246 = vmatprep.subr.bf16.mxu0 %v2872
      %3247 = vmatpush1.bf16.msra.mxu0 %v2871
      %3248 = vmatprep.subr.bf16.mxu0 %v2875
      %3249 = vmatpush1.bf16.msra.mxu0 %v2874
      %3250 = vmatprep.subr.bf16.mxu0 %v2878
      %3251 = vmatpush1.bf16.msra.mxu0 %v2877
      %3252 = vmatprep.subr.bf16.mxu0 %v2881
      %3253 = vmatpush1.bf16.msra.mxu0 %v2880
      %3254 = vmatprep.subr.bf16.mxu0 %v2884
      %3255 = vmatpush1.bf16.msra.mxu0 %v2883
      %3256 = vmatprep.subr.bf16.mxu0 %v2887
      %3257 = vmatpush1.bf16.msra.mxu0 %v2886
      %3258 = vmatprep.subr.bf16.mxu0 %v2890
      %3259 = vmatpush1.bf16.msra.mxu0 %v2889
      %3260 = vmatprep.mubr.bf16.mxu0 %v481
      %3261 = vmatmul.mubr.bf16.gmra.mrb[0].mxu0 %v480
      %v3262 = vpop.f32.mrb[0].mxu0
      %v3263 = vadd.f32 0.0, %v3262
      %v3264 = vpop.f32.mrb[0].mxu0
      %v3265 = vadd.f32 0.0, %v3264
      %v3266 = vpop.f32.mrb[0].mxu0
      %v3267 = vadd.f32 0.0, %v3266
      %v3268 = vpop.f32.mrb[0].mxu0
      %v3269 = vadd.f32 0.0, %v3268
      %3270 = vmatprep.mubr.bf16.mxu0 %v489
      %3271 = vmatmul.mubr.bf16.gmra.mrb[0].mxu0 %v488
      %v3272 = vpop.f32.mrb[0].mxu0
      %v3273 = vadd.f32 0.0, %v3272
      %v3274 = vpop.f32.mrb[0].mxu0
      %v3275 = vadd.f32 0.0, %v3274
      %v3276 = vpop.f32.mrb[0].mxu0
      %v3277 = vpop.f32.mrb[0].mxu0
      %3278 = vdwg.mxu0
      %3279 = vmatprep.subr.bf16.mxu0 %v2893
      %3280 = vmatpush1.bf16.msra.mxu0 %v2892
      %3281 = vmatprep.subr.bf16.mxu0 %v2896
      %3282 = vmatpush1.bf16.msra.mxu0 %v2895
      %3283 = vmatprep.subr.bf16.mxu0 %v2899
      %3284 = vmatpush1.bf16.msra.mxu0 %v2898
      %3285 = vmatprep.subr.bf16.mxu0 %v2902
      %3286 = vmatpush1.bf16.msra.mxu0 %v2901
      %3287 = vmatprep.subr.bf16.mxu0 %v2905
      %3288 = vmatpush1.bf16.msra.mxu0 %v2904
      %3289 = vmatprep.subr.bf16.mxu0 %v2908
      %3290 = vmatpush1.bf16.msra.mxu0 %v2907
      %3291 = vmatprep.subr.bf16.mxu0 %v2911
      %3292 = vmatpush1.bf16.msra.mxu0 %v2910
      %3293 = vmatprep.subr.bf16.mxu0 %v2914
      %3294 = vmatpush1.bf16.msra.mxu0 %v2913
      %3295 = vmatprep.subr.bf16.mxu0 %v2917
      %3296 = vmatpush1.bf16.msra.mxu0 %v2916
      %3297 = vmatprep.subr.bf16.mxu0 %v2920
      %3298 = vmatpush1.bf16.msra.mxu0 %v2919
      %3299 = vmatprep.subr.bf16.mxu0 %v2923
      %3300 = vmatpush1.bf16.msra.mxu0 %v2922
      %3301 = vmatprep.subr.bf16.mxu0 %v2926
      %3302 = vmatpush1.bf16.msra.mxu0 %v2925
      %3303 = vmatprep.subr.bf16.mxu0 %v2929
      %3304 = vmatpush1.bf16.msra.mxu0 %v2928
      %3305 = vmatprep.subr.bf16.mxu0 %v2932
      %3306 = vmatpush1.bf16.msra.mxu0 %v2931
      %3307 = vmatprep.subr.bf16.mxu0 %v2935
      %3308 = vmatpush1.bf16.msra.mxu0 %v2934
      %3309 = vmatprep.subr.bf16.mxu0 %v2938
      %3310 = vmatpush1.bf16.msra.mxu0 %v2937
      %3311 = vmatprep.mubr.bf16.mxu0 %v483
      %3312 = vmatmul.mubr.bf16.gmra.mrb[0].mxu0 %v482
      %v3313 = vpop.f32.mrb[0].mxu0
      %v3314 = vadd.f32 %v3263, %v3313
      %v3315 = vpop.f32.mrb[0].mxu0
      %v3316 = vadd.f32 %v3265, %v3315
      %v3317 = vpop.f32.mrb[0].mxu0
      %v3318 = vadd.f32 %v3267, %v3317
      %v3319 = vpop.f32.mrb[0].mxu0
      %v3320 = vadd.f32 %v3269, %v3319
      %3321 = vmatprep.mubr.bf16.mxu0 %v491
      %3322 = vmatmul.mubr.bf16.gmra.mrb[0].mxu0 %v490
      %v3323 = vpop.f32.mrb[0].mxu0
      %v3324 = vadd.f32 %v3273, %v3323
      %v3325 = vpop.f32.mrb[0].mxu0
      %v3326 = vadd.f32 %v3275, %v3325
      %v3327 = vpop.f32.mrb[0].mxu0
      %v3328 = vpop.f32.mrb[0].mxu0
      %3329 = vdwg.mxu0
      %3330 = vmatprep.subr.bf16.mxu0 %v2941
      %3331 = vmatpush1.bf16.msra.mxu0 %v2940
      %3332 = vmatprep.subr.bf16.mxu0 %v2944
      %3333 = vmatpush1.bf16.msra.mxu0 %v2943
      %3334 = vmatprep.subr.bf16.mxu0 %v2947
      %3335 = vmatpush1.bf16.msra.mxu0 %v2946
      %3336 = vmatprep.subr.bf16.mxu0 %v2950
      %3337 = vmatpush1.bf16.msra.mxu0 %v2949
      %3338 = vmatprep.subr.bf16.mxu0 %v2953
      %3339 = vmatpush1.bf16.msra.mxu0 %v2952
      %3340 = vmatprep.subr.bf16.mxu0 %v2956
      %3341 = vmatpush1.bf16.msra.mxu0 %v2955
      %3342 = vmatprep.subr.bf16.mxu0 %v2959
      %3343 = vmatpush1.bf16.msra.mxu0 %v2958
      %3344 = vmatprep.subr.bf16.mxu0 %v2962
      %3345 = vmatpush1.bf16.msra.mxu0 %v2961
      %3346 = vmatprep.subr.bf16.mxu0 %v2965
      %3347 = vmatpush1.bf16.msra.mxu0 %v2964
      %3348 = vmatprep.subr.bf16.mxu0 %v2968
      %3349 = vmatpush1.bf16.msra.mxu0 %v2967
      %3350 = vmatprep.subr.bf16.mxu0 %v2971
      %3351 = vmatpush1.bf16.msra.mxu0 %v2970
      %3352 = vmatprep.subr.bf16.mxu0 %v2974
      %3353 = vmatpush1.bf16.msra.mxu0 %v2973
      %3354 = vmatprep.subr.bf16.mxu0 %v2977
      %3355 = vmatpush1.bf16.msra.mxu0 %v2976
      %3356 = vmatprep.subr.bf16.mxu0 %v2980
      %3357 = vmatpush1.bf16.msra.mxu0 %v2979
      %3358 = vmatprep.subr.bf16.mxu0 %v2983
      %3359 = vmatpush1.bf16.msra.mxu0 %v2982
      %3360 = vmatprep.subr.bf16.mxu0 %v2986
      %3361 = vmatpush1.bf16.msra.mxu0 %v2985
      %3362 = vmatprep.mubr.bf16.mxu0 %v485
      %3363 = vmatmul.mubr.bf16.gmra.mrb[0].mxu0 %v484
      %v3364 = vpop.f32.mrb[0].mxu0
      %v3365 = vadd.f32 %v3314, %v3364
      %v3366 = vpop.f32.mrb[0].mxu0
      %v3367 = vadd.f32 %v3316, %v3366
      %v3368 = vpop.f32.mrb[0].mxu0
      %v3369 = vadd.f32 %v3318, %v3368
      %v3370 = vpop.f32.mrb[0].mxu0
      %v3371 = vadd.f32 %v3320, %v3370
      %3372 = vmatprep.mubr.bf16.mxu0 %v493
      %3373 = vmatmul.mubr.bf16.gmra.mrb[0].mxu0 %v492
      %v3374 = vpop.f32.mrb[0].mxu0
      %v3375 = vadd.f32 %v3324, %v3374
      %v3376 = vpop.f32.mrb[0].mxu0
      %v3377 = vadd.f32 %v3326, %v3376
      %v3378 = vpop.f32.mrb[0].mxu0
      %v3379 = vpop.f32.mrb[0].mxu0
      %3380 = vdwg.mxu0
      %3381 = vmatprep.subr.bf16.mxu0 %v2989
      %3382 = vmatpush1.bf16.msra.mxu0 %v2988
      %3383 = vmatprep.subr.bf16.mxu0 %v2992
      %3384 = vmatpush1.bf16.msra.mxu0 %v2991
      %3385 = vmatprep.subr.bf16.mxu0 %v2995
      %3386 = vmatpush1.bf16.msra.mxu0 %v2994
      %3387 = vmatprep.subr.bf16.mxu0 %v2998
      %3388 = vmatpush1.bf16.msra.mxu0 %v2997
      %3389 = vmatprep.subr.bf16.mxu0 %v3001
      %3390 = vmatpush1.bf16.msra.mxu0 %v3000
      %3391 = vmatprep.subr.bf16.mxu0 %v3004
      %3392 = vmatpush1.bf16.msra.mxu0 %v3003
      %3393 = vmatprep.subr.bf16.mxu0 %v3007
      %3394 = vmatpush1.bf16.msra.mxu0 %v3006
      %3395 = vmatprep.subr.bf16.mxu0 %v3010
      %3396 = vmatpush1.bf16.msra.mxu0 %v3009
      %3397 = vmatprep.subr.bf16.mxu0 %v3013
      %3398 = vmatpush1.bf16.msra.mxu0 %v3012
      %3399 = vmatprep.subr.bf16.mxu0 %v3016
      %3400 = vmatpush1.bf16.msra.mxu0 %v3015
      %3401 = vmatprep.subr.bf16.mxu0 %v3019
      %3402 = vmatpush1.bf16.msra.mxu0 %v3018
      %3403 = vmatprep.subr.bf16.mxu0 %v3022
      %3404 = vmatpush1.bf16.msra.mxu0 %v3021
      %3405 = vmatprep.subr.bf16.mxu0 %v3025
      %3406 = vmatpush1.bf16.msra.mxu0 %v3024
      %3407 = vmatprep.subr.bf16.mxu0 %v3028
      %3408 = vmatpush1.bf16.msra.mxu0 %v3027
      %3409 = vmatprep.subr.bf16.mxu0 %v3031
      %3410 = vmatpush1.bf16.msra.mxu0 %v3030
      %3411 = vmatprep.subr.bf16.mxu0 %v3034
      %3412 = vmatpush1.bf16.msra.mxu0 %v3033
      %3413 = vmatprep.mubr.bf16.mxu0 %v487
      %3414 = vmatmul.mubr.bf16.gmra.mrb[0].mxu0 %v486
      %v3415 = vpop.f32.mrb[0].mxu0
      %v3416 = vadd.f32 %v3365, %v3415
      %v3417 = vpop.f32.mrb[0].mxu0
      %v3418 = vadd.f32 %v3367, %v3417
      %v3419 = vpop.f32.mrb[0].mxu0
      %v3420 = vadd.f32 %v3369, %v3419
      %v3421 = vpop.f32.mrb[0].mxu0
      %v3422 = vadd.f32 %v3371, %v3421
      %3423 = vmatprep.mubr.bf16.mxu0 %v495
      %3424 = vmatmul.mubr.bf16.gmra.mrb[0].mxu0 %v494
      %v3425 = vpop.f32.mrb[0].mxu0
      %v3426 = vadd.f32 %v3375, %v3425
      %v3427 = vpop.f32.mrb[0].mxu0
      %v3428 = vadd.f32 %v3377, %v3427
      %v3429 = vpop.f32.mrb[0].mxu0
      %v3430 = vpop.f32.mrb[0].mxu0
      %3431 = vdwg.mxu0
      %3432 = vmatprep.subr.bf16.mxu0 0
      %3433 = vmatpush1.bf16.msra.mxu0 %v2846
      %3434 = vmatprep.subr.bf16.mxu0 0
      %3435 = vmatpush1.bf16.msra.mxu0 %v2849
      %3436 = vmatprep.subr.bf16.mxu0 0
      %3437 = vmatpush1.bf16.msra.mxu0 %v2852
      %3438 = vmatprep.subr.bf16.mxu0 0
      %3439 = vmatpush1.bf16.msra.mxu0 %v2855
      %3440 = vmatprep.subr.bf16.mxu0 0
      %3441 = vmatpush1.bf16.msra.mxu0 %v2858
      %3442 = vmatprep.subr.bf16.mxu0 0
      %3443 = vmatpush1.bf16.msra.mxu0 %v2861
      %3444 = vmatprep.subr.bf16.mxu0 0
      %3445 = vmatpush1.bf16.msra.mxu0 %v2864
      %3446 = vmatprep.subr.bf16.mxu0 0
      %3447 = vmatpush1.bf16.msra.mxu0 %v2867
      %3448 = vmatprep.subr.bf16.mxu0 0
      %3449 = vmatpush1.bf16.msra.mxu0 %v2870
      %3450 = vmatprep.subr.bf16.mxu0 0
      %3451 = vmatpush1.bf16.msra.mxu0 %v2873
      %3452 = vmatprep.subr.bf16.mxu0 0
      %3453 = vmatpush1.bf16.msra.mxu0 %v2876
      %3454 = vmatprep.subr.bf16.mxu0 0
      %3455 = vmatpush1.bf16.msra.mxu0 %v2879
      %3456 = vmatprep.subr.bf16.mxu0 0
      %3457 = vmatpush1.bf16.msra.mxu0 %v2882
      %3458 = vmatprep.subr.bf16.mxu0 0
      %3459 = vmatpush1.bf16.msra.mxu0 %v2885
      %3460 = vmatprep.subr.bf16.mxu0 0
      %3461 = vmatpush1.bf16.msra.mxu0 %v2888
      %3462 = vmatprep.subr.bf16.mxu0 0
      %3463 = vmatpush1.bf16.msra.mxu0 %v2891
      %3464 = vmatprep.mubr.bf16.mxu0 %v481
      %3465 = vmatmul.mubr.bf16.gmra.mrb[0].mxu0 %v480
      %v3466 = vpop.f32.mrb[0].mxu0
      %v3467 = vadd.f32 0.0, %v3466
      %v3468 = vpop.f32.mrb[0].mxu0
      %v3469 = vpop.f32.mrb[0].mxu0
      %v3470 = vadd.f32 0.0, %v3469
      %v3471 = vpop.f32.mrb[0].mxu0
      %3472 = vmatprep.mubr.bf16.mxu0 %v489
      %3473 = vmatmul.mubr.bf16.gmra.mrb[0].mxu0 %v488
      %v3474 = vpop.f32.mrb[0].mxu0
      %v3475 = vadd.f32 0.0, %v3474
      %v3476 = vpop.f32.mrb[0].mxu0
      %v3477 = vpop.f32.mrb[0].mxu0
      %v3478 = vpop.f32.mrb[0].mxu0
      %3479 = vdwg.mxu0
      %3480 = vmatprep.subr.bf16.mxu0 0
      %3481 = vmatpush1.bf16.msra.mxu0 %v2894
      %3482 = vmatprep.subr.bf16.mxu0 0
      %3483 = vmatpush1.bf16.msra.mxu0 %v2897
      %3484 = vmatprep.subr.bf16.mxu0 0
      %3485 = vmatpush1.bf16.msra.mxu0 %v2900
      %3486 = vmatprep.subr.bf16.mxu0 0
      %3487 = vmatpush1.bf16.msra.mxu0 %v2903
      %3488 = vmatprep.subr.bf16.mxu0 0
      %3489 = vmatpush1.bf16.msra.mxu0 %v2906
      %3490 = vmatprep.subr.bf16.mxu0 0
      %3491 = vmatpush1.bf16.msra.mxu0 %v2909
      %3492 = vmatprep.subr.bf16.mxu0 0
      %3493 = vmatpush1.bf16.msra.mxu0 %v2912
      %3494 = vmatprep.subr.bf16.mxu0 0
      %3495 = vmatpush1.bf16.msra.mxu0 %v2915
      %3496 = vmatprep.subr.bf16.mxu0 0
      %3497 = vmatpush1.bf16.msra.mxu0 %v2918
      %3498 = vmatprep.subr.bf16.mxu0 0
      %3499 = vmatpush1.bf16.msra.mxu0 %v2921
      %3500 = vmatprep.subr.bf16.mxu0 0
      %3501 = vmatpush1.bf16.msra.mxu0 %v2924
      %3502 = vmatprep.subr.bf16.mxu0 0
      %3503 = vmatpush1.bf16.msra.mxu0 %v2927
      %3504 = vmatprep.subr.bf16.mxu0 0
      %3505 = vmatpush1.bf16.msra.mxu0 %v2930
      %3506 = vmatprep.subr.bf16.mxu0 0
      %3507 = vmatpush1.bf16.msra.mxu0 %v2933
      %3508 = vmatprep.subr.bf16.mxu0 0
      %3509 = vmatpush1.bf16.msra.mxu0 %v2936
      %3510 = vmatprep.subr.bf16.mxu0 0
      %3511 = vmatpush1.bf16.msra.mxu0 %v2939
      %3512 = vmatprep.mubr.bf16.mxu0 %v483
      %3513 = vmatmul.mubr.bf16.gmra.mrb[0].mxu0 %v482
      %v3514 = vpop.f32.mrb[0].mxu0
      %v3515 = vadd.f32 %v3467, %v3514
      %v3516 = vpop.f32.mrb[0].mxu0
      %v3517 = vpop.f32.mrb[0].mxu0
      %v3518 = vadd.f32 %v3470, %v3517
      %v3519 = vpop.f32.mrb[0].mxu0
      %3520 = vmatprep.mubr.bf16.mxu0 %v491
      %3521 = vmatmul.mubr.bf16.gmra.mrb[0].mxu0 %v490
      %v3522 = vpop.f32.mrb[0].mxu0
      %v3523 = vadd.f32 %v3475, %v3522
      %v3524 = vpop.f32.mrb[0].mxu0
      %v3525 = vpop.f32.mrb[0].mxu0
      %v3526 = vpop.f32.mrb[0].mxu0
      %3527 = vdwg.mxu0
      %3528 = vmatprep.subr.bf16.mxu0 0
      %3529 = vmatpush1.bf16.msra.mxu0 %v2942
      %3530 = vmatprep.subr.bf16.mxu0 0
      %3531 = vmatpush1.bf16.msra.mxu0 %v2945
      %3532 = vmatprep.subr.bf16.mxu0 0
      %3533 = vmatpush1.bf16.msra.mxu0 %v2948
      %3534 = vmatprep.subr.bf16.mxu0 0
      %3535 = vmatpush1.bf16.msra.mxu0 %v2951
      %3536 = vmatprep.subr.bf16.mxu0 0
      %3537 = vmatpush1.bf16.msra.mxu0 %v2954
      %3538 = vmatprep.subr.bf16.mxu0 0
      %3539 = vmatpush1.bf16.msra.mxu0 %v2957
      %3540 = vmatprep.subr.bf16.mxu0 0
      %3541 = vmatpush1.bf16.msra.mxu0 %v2960
      %3542 = vmatprep.subr.bf16.mxu0 0
      %3543 = vmatpush1.bf16.msra.mxu0 %v2963
      %3544 = vmatprep.subr.bf16.mxu0 0
      %3545 = vmatpush1.bf16.msra.mxu0 %v2966
      %3546 = vmatprep.subr.bf16.mxu0 0
      %3547 = vmatpush1.bf16.msra.mxu0 %v2969
      %3548 = vmatprep.subr.bf16.mxu0 0
      %3549 = vmatpush1.bf16.msra.mxu0 %v2972
      %3550 = vmatprep.subr.bf16.mxu0 0
      %3551 = vmatpush1.bf16.msra.mxu0 %v2975
      %3552 = vmatprep.subr.bf16.mxu0 0
      %3553 = vmatpush1.bf16.msra.mxu0 %v2978
      %3554 = vmatprep.subr.bf16.mxu0 0
      %3555 = vmatpush1.bf16.msra.mxu0 %v2981
      %3556 = vmatprep.subr.bf16.mxu0 0
      %3557 = vmatpush1.bf16.msra.mxu0 %v2984
      %3558 = vmatprep.subr.bf16.mxu0 0
      %3559 = vmatpush1.bf16.msra.mxu0 %v2987
      %3560 = vmatprep.mubr.bf16.mxu0 %v485
      %3561 = vmatmul.mubr.bf16.gmra.mrb[0].mxu0 %v484
      %v3562 = vpop.f32.mrb[0].mxu0
      %v3563 = vadd.f32 %v3515, %v3562
      %v3564 = vpop.f32.mrb[0].mxu0
      %v3565 = vpop.f32.mrb[0].mxu0
      %v3566 = vadd.f32 %v3518, %v3565
      %v3567 = vpop.f32.mrb[0].mxu0
      %3568 = vmatprep.mubr.bf16.mxu0 %v493
      %3569 = vmatmul.mubr.bf16.gmra.mrb[0].mxu0 %v492
      %v3570 = vpop.f32.mrb[0].mxu0
      %v3571 = vadd.f32 %v3523, %v3570
      %v3572 = vpop.f32.mrb[0].mxu0
      %v3573 = vpop.f32.mrb[0].mxu0
      %v3574 = vpop.f32.mrb[0].mxu0
      %3575 = vdwg.mxu0
      %3576 = vmatprep.subr.bf16.mxu0 0
      %3577 = vmatpush1.bf16.msra.mxu0 %v2990
      %3578 = vmatprep.subr.bf16.mxu0 0
      %3579 = vmatpush1.bf16.msra.mxu0 %v2993
      %3580 = vmatprep.subr.bf16.mxu0 0
      %3581 = vmatpush1.bf16.msra.mxu0 %v2996
      %3582 = vmatprep.subr.bf16.mxu0 0
      %3583 = vmatpush1.bf16.msra.mxu0 %v2999
      %3584 = vmatprep.subr.bf16.mxu0 0
      %3585 = vmatpush1.bf16.msra.mxu0 %v3002
      %3586 = vmatprep.subr.bf16.mxu0 0
      %3587 = vmatpush1.bf16.msra.mxu0 %v3005
      %3588 = vmatprep.subr.bf16.mxu0 0
      %3589 = vmatpush1.bf16.msra.mxu0 %v3008
      %3590 = vmatprep.subr.bf16.mxu0 0
      %3591 = vmatpush1.bf16.msra.mxu0 %v3011
      %3592 = vmatprep.subr.bf16.mxu0 0
      %3593 = vmatpush1.bf16.msra.mxu0 %v3014
      %3594 = vmatprep.subr.bf16.mxu0 0
      %3595 = vmatpush1.bf16.msra.mxu0 %v3017
      %3596 = vmatprep.subr.bf16.mxu0 0
      %3597 = vmatpush1.bf16.msra.mxu0 %v3020
      %3598 = vmatprep.subr.bf16.mxu0 0
      %3599 = vmatpush1.bf16.msra.mxu0 %v3023
      %3600 = vmatprep.subr.bf16.mxu0 0
      %3601 = vmatpush1.bf16.msra.mxu0 %v3026
      %3602 = vmatprep.subr.bf16.mxu0 0
      %3603 = vmatpush1.bf16.msra.mxu0 %v3029
      %3604 = vmatprep.subr.bf16.mxu0 0
      %3605 = vmatpush1.bf16.msra.mxu0 %v3032
      %3606 = vmatprep.subr.bf16.mxu0 0
      %3607 = vmatpush1.bf16.msra.mxu0 %v3035
      %3608 = vmatprep.mubr.bf16.mxu0 %v487
      %3609 = vmatmul.mubr.bf16.gmra.mrb[0].mxu0 %v486
      %v3610 = vpop.f32.mrb[0].mxu0
      %v3611 = vadd.f32 %v3563, %v3610
      %v3612 = vpop.f32.mrb[0].mxu0
      %v3613 = vpop.f32.mrb[0].mxu0
      %v3614 = vadd.f32 %v3566, %v3613
      %v3615 = vpop.f32.mrb[0].mxu0
      %3616 = vmatprep.mubr.bf16.mxu0 %v495
      %3617 = vmatmul.mubr.bf16.gmra.mrb[0].mxu0 %v494
      %v3618 = vpop.f32.mrb[0].mxu0
      %v3619 = vadd.f32 %v3571, %v3618
      %v3620 = vpop.f32.mrb[0].mxu0
      %v3621 = vpop.f32.mrb[0].mxu0
      %v3622 = vpop.f32.mrb[0].mxu0
      %3623 = vdwg.mxu0
      %v3624 = vrot.slane %v3416, 2
      %v3625 = vrot.slane %v3418, 2
      %v3626 = vrot.slane %v3611, 2
      %v3627 = vrot.slane %v3420, 2
      %v3628 = vrot.slane %v3422, 2
      %v3629 = vrot.slane %v3614, 2
      %v3630 = vrot.slane %v3426, 2
      %v3631 = vrot.slane %v3428, 2
      %v3632 = vrot.slane %v3619, 2
      %vm3633 = vcmp.lt.s32.totalorder %v1363, 6
      %v3634 = vsel %vm3633, %v3627, %v3630
      %v3635 = vsel %vm3633, %v3628, %v3631
      %v3636 = vsel %vm3633, %v3629, %v3632
      %v3637 = vsel %vm3633, %v3624, %v3627
      %v3638 = vsel %vm3633, %v3625, %v3628
      %v3639 = vsel %vm3633, %v3626, %v3629
      %v3640 = vsel %vm3633, %v3630, %v3624
      %v3641 = vsel %vm3633, %v3631, %v3625
      %v3642 = vsel %vm3633, %v3632, %v3626
      %v3643 = vadd.f32 %v1934, %v3637
      %v3644 = vadd.f32 %v1937, %v3634
      %v3645 = vadd.f32 %v1942, %v3640
      %v3646 = vadd.f32 %v1368, %v3638
      %v3647 = vadd.f32 %v1366, %v3635
      %v3648 = vadd.f32 %v1370, %v3641
      %s3649 = scalar_lea.vmem %s1, 4608
      %v3650 = vld [vmem:[%s3649] sm:$0xff]
      %v3651 = vld [vmem:[%s3649 + $0xc] sm:$0xff]
      %v3652 = vld [vmem:[%s3649 + $0x18] sm:$0xff]
      %v3653 = vld [vmem:[%s3649 + $0x24] sm:$0xff]
      %v3654 = vld [vmem:[%s3649 + $0x30] sm:$0xff]
      %v3655 = vld [vmem:[%s3649 + $0x3c] sm:$0xff]
      %v3656 = vld [vmem:[%s3649 + $0x48] sm:$0xff]
      %v3657 = vld [vmem:[%s3649 + $0x54] sm:$0xff]
      %v3658 = vld [vmem:[%s3649 + $0x60] sm:$0xff]
      %v3659 = vld [vmem:[%s3649 + $0x6c] sm:$0xff]
      %v3660 = vld [vmem:[%s3649 + $0x78] sm:$0xff]
      %v3661 = vld [vmem:[%s3649 + $0x84] sm:$0xff]
      %v3662 = vld [vmem:[%s3649 + $0x90] sm:$0xff]
      %v3663 = vld [vmem:[%s3649 + $0x9c] sm:$0xff]
      %v3664 = vld [vmem:[%s3649 + $0xa8] sm:$0xff]
      %v3665 = vld [vmem:[%s3649 + $0xb4] sm:$0xff]
      %v3666 = vld [vmem:[%s3649 + $0xc0] sm:$0xff]
      %v3667 = vld [vmem:[%s3649 + $0xcc] sm:$0xff]
      %v3668 = vld [vmem:[%s3649 + $0xd8] sm:$0xff]
      %v3669 = vld [vmem:[%s3649 + $0xe4] sm:$0xff]
      %v3670 = vld [vmem:[%s3649 + $0xf0] sm:$0xff]
      %v3671 = vld [vmem:[%s3649 + $0xfc] sm:$0xff]
      %v3672 = vld [vmem:[%s3649 + $0x108] sm:$0xff]
      %v3673 = vld [vmem:[%s3649 + $0x114] sm:$0xff]
      %v3674 = vld [vmem:[%s3649 + $0x120] sm:$0xff]
      %v3675 = vld [vmem:[%s3649 + $0x12c] sm:$0xff]
      %v3676 = vld [vmem:[%s3649 + $0x138] sm:$0xff]
      %v3677 = vld [vmem:[%s3649 + $0x144] sm:$0xff]
      %v3678 = vld [vmem:[%s3649 + $0x150] sm:$0xff]
      %v3679 = vld [vmem:[%s3649 + $0x15c] sm:$0xff]
      %v3680 = vld [vmem:[%s3649 + $0x168] sm:$0xff]
      %v3681 = vld [vmem:[%s3649 + $0x174] sm:$0xff]
      %v3682 = vld [vmem:[%s3649 + $0x180] sm:$0xff]
      %v3683 = vld [vmem:[%s3649 + $0x18c] sm:$0xff]
      %v3684 = vld [vmem:[%s3649 + $0x198] sm:$0xff]
      %v3685 = vld [vmem:[%s3649 + $0x1a4] sm:$0xff]
      %v3686 = vld [vmem:[%s3649 + $0x1b0] sm:$0xff]
      %v3687 = vld [vmem:[%s3649 + $0x1bc] sm:$0xff]
      %v3688 = vld [vmem:[%s3649 + $0x1c8] sm:$0xff]
      %v3689 = vld [vmem:[%s3649 + $0x1d4] sm:$0xff]
      %v3690 = vld [vmem:[%s3649 + $0x1e0] sm:$0xff]
      %v3691 = vld [vmem:[%s3649 + $0x1ec] sm:$0xff]
      %v3692 = vld [vmem:[%s3649 + $0x1f8] sm:$0xff]
      %v3693 = vld [vmem:[%s3649 + $0x204] sm:$0xff]
      %v3694 = vld [vmem:[%s3649 + $0x210] sm:$0xff]
      %v3695 = vld [vmem:[%s3649 + $0x21c] sm:$0xff]
      %v3696 = vld [vmem:[%s3649 + $0x228] sm:$0xff]
      %v3697 = vld [vmem:[%s3649 + $0x234] sm:$0xff]
      %v3698 = vld [vmem:[%s3649 + $0x240] sm:$0xff]
      %v3699 = vld [vmem:[%s3649 + $0x24c] sm:$0xff]
      %v3700 = vld [vmem:[%s3649 + $0x258] sm:$0xff]
      %v3701 = vld [vmem:[%s3649 + $0x264] sm:$0xff]
      %v3702 = vld [vmem:[%s3649 + $0x270] sm:$0xff]
      %v3703 = vld [vmem:[%s3649 + $0x27c] sm:$0xff]
      %v3704 = vld [vmem:[%s3649 + $0x288] sm:$0xff]
      %v3705 = vld [vmem:[%s3649 + $0x294] sm:$0xff]
      %v3706 = vld [vmem:[%s3649 + $0x2a0] sm:$0xff]
      %v3707 = vld [vmem:[%s3649 + $0x2ac] sm:$0xff]
      %v3708 = vld [vmem:[%s3649 + $0x2b8] sm:$0xff]
      %v3709 = vld [vmem:[%s3649 + $0x2c4] sm:$0xff]
      %v3710 = vld [vmem:[%s3649 + $0x2d0] sm:$0xff]
      %v3711 = vld [vmem:[%s3649 + $0x2dc] sm:$0xff]
      %v3712 = vld [vmem:[%s3649 + $0x2e8] sm:$0xff]
      %v3713 = vld [vmem:[%s3649 + $0x2f4] sm:$0xff]
      %v3714 = vld [vmem:[%s3649 + $0x300] sm:$0xff]
      %v3715 = vld [vmem:[%s3649 + $0x30c] sm:$0xff]
      %v3716 = vld [vmem:[%s3649 + $0x318] sm:$0xff]
      %v3717 = vld [vmem:[%s3649 + $0x324] sm:$0xff]
      %v3718 = vld [vmem:[%s3649 + $0x330] sm:$0xff]
      %v3719 = vld [vmem:[%s3649 + $0x33c] sm:$0xff]
      %v3720 = vld [vmem:[%s3649 + $0x348] sm:$0xff]
      %v3721 = vld [vmem:[%s3649 + $0x354] sm:$0xff]
      %v3722 = vld [vmem:[%s3649 + $0x360] sm:$0xff]
      %v3723 = vld [vmem:[%s3649 + $0x36c] sm:$0xff]
      %v3724 = vld [vmem:[%s3649 + $0x378] sm:$0xff]
      %v3725 = vld [vmem:[%s3649 + $0x384] sm:$0xff]
      %v3726 = vld [vmem:[%s3649 + $0x390] sm:$0xff]
      %v3727 = vld [vmem:[%s3649 + $0x39c] sm:$0xff]
      %v3728 = vld [vmem:[%s3649 + $0x3a8] sm:$0xff]
      %v3729 = vld [vmem:[%s3649 + $0x3b4] sm:$0xff]
      %v3730 = vld [vmem:[%s3649 + $0x3c0] sm:$0xff]
      %v3731 = vld [vmem:[%s3649 + $0x3cc] sm:$0xff]
      %v3732 = vld [vmem:[%s3649 + $0x3d8] sm:$0xff]
      %v3733 = vld [vmem:[%s3649 + $0x3e4] sm:$0xff]
      %v3734 = vld [vmem:[%s3649 + $0x3f0] sm:$0xff]
      %v3735 = vld [vmem:[%s3649 + $0x3fc] sm:$0xff]
      %v3736 = vld [vmem:[%s3649 + $0x408] sm:$0xff]
      %v3737 = vld [vmem:[%s3649 + $0x414] sm:$0xff]
      %v3738 = vld [vmem:[%s3649 + $0x420] sm:$0xff]
      %v3739 = vld [vmem:[%s3649 + $0x42c] sm:$0xff]
      %v3740 = vld [vmem:[%s3649 + $0x438] sm:$0xff]
      %v3741 = vld [vmem:[%s3649 + $0x444] sm:$0xff]
      %v3742 = vld [vmem:[%s3649 + $0x450] sm:$0xff]
      %v3743 = vld [vmem:[%s3649 + $0x45c] sm:$0xff]
      %v3744 = vld [vmem:[%s3649 + $0x468] sm:$0xff]
      %v3745 = vld [vmem:[%s3649 + $0x474] sm:$0xff]
      %v3746 = vld [vmem:[%s3649 + $0x480] sm:$0xff]
      %v3747 = vld [vmem:[%s3649 + $0x48c] sm:$0xff]
      %v3748 = vld [vmem:[%s3649 + $0x498] sm:$0xff]
      %v3749 = vld [vmem:[%s3649 + $0x4a4] sm:$0xff]
      %v3750 = vld [vmem:[%s3649 + $0x4b0] sm:$0xff]
      %v3751 = vld [vmem:[%s3649 + $0x4bc] sm:$0xff]
      %v3752 = vld [vmem:[%s3649 + $0x4c8] sm:$0xff]
      %v3753 = vld [vmem:[%s3649 + $0x4d4] sm:$0xff]
      %v3754 = vld [vmem:[%s3649 + $0x4e0] sm:$0xff]
      %v3755 = vld [vmem:[%s3649 + $0x4ec] sm:$0xff]
      %v3756 = vld [vmem:[%s3649 + $0x4f8] sm:$0xff]
      %v3757 = vld [vmem:[%s3649 + $0x504] sm:$0xff]
      %v3758 = vld [vmem:[%s3649 + $0x510] sm:$0xff]
      %v3759 = vld [vmem:[%s3649 + $0x51c] sm:$0xff]
      %v3760 = vld [vmem:[%s3649 + $0x528] sm:$0xff]
      %v3761 = vld [vmem:[%s3649 + $0x534] sm:$0xff]
      %v3762 = vld [vmem:[%s3649 + $0x540] sm:$0xff]
      %v3763 = vld [vmem:[%s3649 + $0x54c] sm:$0xff]
      %v3764 = vld [vmem:[%s3649 + $0x558] sm:$0xff]
      %v3765 = vld [vmem:[%s3649 + $0x564] sm:$0xff]
      %v3766 = vld [vmem:[%s3649 + $0x570] sm:$0xff]
      %v3767 = vld [vmem:[%s3649 + $0x57c] sm:$0xff]
      %v3768 = vld [vmem:[%s3649 + $0x588] sm:$0xff]
      %v3769 = vld [vmem:[%s3649 + $0x594] sm:$0xff]
      %v3770 = vld [vmem:[%s3649 + $0x5a0] sm:$0xff]
      %v3771 = vld [vmem:[%s3649 + $0x5ac] sm:$0xff]
      %v3772 = vld [vmem:[%s3649 + $0x5b8] sm:$0xff]
      %v3773 = vld [vmem:[%s3649 + $0x5c4] sm:$0xff]
      %v3774 = vld [vmem:[%s3649 + $0x5d0] sm:$0xff]
      %v3775 = vld [vmem:[%s3649 + $0x5dc] sm:$0xff]
      %v3776 = vld [vmem:[%s3649 + $0x5e8] sm:$0xff]
      %v3777 = vld [vmem:[%s3649 + $0x5f4] sm:$0xff]
      %v3906 = vunpack.c.l.b16 %v3650
      %v3907 = vunpack.c.h.b16 %v3650
      %v3908 = vunpack.c.l.b16 %v3651
      %v3909 = vunpack.c.h.b16 %v3651
      %v3910 = vunpack.c.l.b16 %v3652
      %v3911 = vunpack.c.h.b16 %v3652
      %v3912 = vunpack.c.l.b16 %v3653
      %v3913 = vunpack.c.h.b16 %v3653
      %v3914 = vunpack.c.l.b16 %v3654
      %v3915 = vunpack.c.h.b16 %v3654
      %v3916 = vunpack.c.l.b16 %v3655
      %v3917 = vunpack.c.h.b16 %v3655
      %v3918 = vunpack.c.l.b16 %v3656
      %v3919 = vunpack.c.h.b16 %v3656
      %v3920 = vunpack.c.l.b16 %v3657
      %v3921 = vunpack.c.h.b16 %v3657
      %v3922 = vunpack.c.l.b16 %v3658
      %v3923 = vunpack.c.h.b16 %v3658
      %v3924 = vunpack.c.l.b16 %v3659
      %v3925 = vunpack.c.h.b16 %v3659
      %v3926 = vunpack.c.l.b16 %v3660
      %v3927 = vunpack.c.h.b16 %v3660
      %v3928 = vunpack.c.l.b16 %v3661
      %v3929 = vunpack.c.h.b16 %v3661
      %v3930 = vunpack.c.l.b16 %v3662
      %v3931 = vunpack.c.h.b16 %v3662
      %v3932 = vunpack.c.l.b16 %v3663
      %v3933 = vunpack.c.h.b16 %v3663
      %v3934 = vunpack.c.l.b16 %v3664
      %v3935 = vunpack.c.h.b16 %v3664
      %v3936 = vunpack.c.l.b16 %v3665
      %v3937 = vunpack.c.h.b16 %v3665
      %v3938 = vunpack.c.l.b16 %v3666
      %v3939 = vunpack.c.h.b16 %v3666
      %v3940 = vunpack.c.l.b16 %v3667
      %v3941 = vunpack.c.h.b16 %v3667
      %v3942 = vunpack.c.l.b16 %v3668
      %v3943 = vunpack.c.h.b16 %v3668
      %v3944 = vunpack.c.l.b16 %v3669
      %v3945 = vunpack.c.h.b16 %v3669
      %v3946 = vunpack.c.l.b16 %v3670
      %v3947 = vunpack.c.h.b16 %v3670
      %v3948 = vunpack.c.l.b16 %v3671
      %v3949 = vunpack.c.h.b16 %v3671
      %v3950 = vunpack.c.l.b16 %v3672
      %v3951 = vunpack.c.h.b16 %v3672
      %v3952 = vunpack.c.l.b16 %v3673
      %v3953 = vunpack.c.h.b16 %v3673
      %v3954 = vunpack.c.l.b16 %v3674
      %v3955 = vunpack.c.h.b16 %v3674
      %v3956 = vunpack.c.l.b16 %v3675
      %v3957 = vunpack.c.h.b16 %v3675
      %v3958 = vunpack.c.l.b16 %v3676
      %v3959 = vunpack.c.h.b16 %v3676
      %v3960 = vunpack.c.l.b16 %v3677
      %v3961 = vunpack.c.h.b16 %v3677
      %v3962 = vunpack.c.l.b16 %v3678
      %v3963 = vunpack.c.h.b16 %v3678
      %v3964 = vunpack.c.l.b16 %v3679
      %v3965 = vunpack.c.h.b16 %v3679
      %v3966 = vunpack.c.l.b16 %v3680
      %v3967 = vunpack.c.h.b16 %v3680
      %v3968 = vunpack.c.l.b16 %v3681
      %v3969 = vunpack.c.h.b16 %v3681
      %v3970 = vunpack.c.l.b16 %v3682
      %v3971 = vunpack.c.h.b16 %v3682
      %v3972 = vunpack.c.l.b16 %v3683
      %v3973 = vunpack.c.h.b16 %v3683
      %v3974 = vunpack.c.l.b16 %v3684
      %v3975 = vunpack.c.h.b16 %v3684
      %v3976 = vunpack.c.l.b16 %v3685
      %v3977 = vunpack.c.h.b16 %v3685
      %v3978 = vunpack.c.l.b16 %v3686
      %v3979 = vunpack.c.h.b16 %v3686
      %v3980 = vunpack.c.l.b16 %v3687
      %v3981 = vunpack.c.h.b16 %v3687
      %v3982 = vunpack.c.l.b16 %v3688
      %v3983 = vunpack.c.h.b16 %v3688
      %v3984 = vunpack.c.l.b16 %v3689
      %v3985 = vunpack.c.h.b16 %v3689
      %v3986 = vunpack.c.l.b16 %v3690
      %v3987 = vunpack.c.h.b16 %v3690
      %v3988 = vunpack.c.l.b16 %v3691
      %v3989 = vunpack.c.h.b16 %v3691
      %v3990 = vunpack.c.l.b16 %v3692
      %v3991 = vunpack.c.h.b16 %v3692
      %v3992 = vunpack.c.l.b16 %v3693
      %v3993 = vunpack.c.h.b16 %v3693
      %v3994 = vunpack.c.l.b16 %v3694
      %v3995 = vunpack.c.h.b16 %v3694
      %v3996 = vunpack.c.l.b16 %v3695
      %v3997 = vunpack.c.h.b16 %v3695
      %v3998 = vunpack.c.l.b16 %v3696
      %v3999 = vunpack.c.h.b16 %v3696
      %v4000 = vunpack.c.l.b16 %v3697
      %v4001 = vunpack.c.h.b16 %v3697
      %v4002 = vunpack.c.l.b16 %v3698
      %v4003 = vunpack.c.h.b16 %v3698
      %v4004 = vunpack.c.l.b16 %v3699
      %v4005 = vunpack.c.h.b16 %v3699
      %v4006 = vunpack.c.l.b16 %v3700
      %v4007 = vunpack.c.h.b16 %v3700
      %v4008 = vunpack.c.l.b16 %v3701
      %v4009 = vunpack.c.h.b16 %v3701
      %v4010 = vunpack.c.l.b16 %v3702
      %v4011 = vunpack.c.h.b16 %v3702
      %v4012 = vunpack.c.l.b16 %v3703
      %v4013 = vunpack.c.h.b16 %v3703
      %v4014 = vunpack.c.l.b16 %v3704
      %v4015 = vunpack.c.h.b16 %v3704
      %v4016 = vunpack.c.l.b16 %v3705
      %v4017 = vunpack.c.h.b16 %v3705
      %v4018 = vunpack.c.l.b16 %v3706
      %v4019 = vunpack.c.h.b16 %v3706
      %v4020 = vunpack.c.l.b16 %v3707
      %v4021 = vunpack.c.h.b16 %v3707
      %v4022 = vunpack.c.l.b16 %v3708
      %v4023 = vunpack.c.h.b16 %v3708
      %v4024 = vunpack.c.l.b16 %v3709
      %v4025 = vunpack.c.h.b16 %v3709
      %v4026 = vunpack.c.l.b16 %v3710
      %v4027 = vunpack.c.h.b16 %v3710
      %v4028 = vunpack.c.l.b16 %v3711
      %v4029 = vunpack.c.h.b16 %v3711
      %v4030 = vunpack.c.l.b16 %v3712
      %v4031 = vunpack.c.h.b16 %v3712
      %v4032 = vunpack.c.l.b16 %v3713
      %v4033 = vunpack.c.h.b16 %v3713
      %v4034 = vunpack.c.l.b16 %v3714
      %v4035 = vunpack.c.h.b16 %v3714
      %v4036 = vunpack.c.l.b16 %v3715
      %v4037 = vunpack.c.h.b16 %v3715
      %v4038 = vunpack.c.l.b16 %v3716
      %v4039 = vunpack.c.h.b16 %v3716
      %v4040 = vunpack.c.l.b16 %v3717
      %v4041 = vunpack.c.h.b16 %v3717
      %v4042 = vunpack.c.l.b16 %v3718
      %v4043 = vunpack.c.h.b16 %v3718
      %v4044 = vunpack.c.l.b16 %v3719
      %v4045 = vunpack.c.h.b16 %v3719
      %v4046 = vunpack.c.l.b16 %v3720
      %v4047 = vunpack.c.h.b16 %v3720
      %v4048 = vunpack.c.l.b16 %v3721
      %v4049 = vunpack.c.h.b16 %v3721
      %v4050 = vunpack.c.l.b16 %v3722
      %v4051 = vunpack.c.h.b16 %v3722
      %v4052 = vunpack.c.l.b16 %v3723
      %v4053 = vunpack.c.h.b16 %v3723
      %v4054 = vunpack.c.l.b16 %v3724
      %v4055 = vunpack.c.h.b16 %v3724
      %v4056 = vunpack.c.l.b16 %v3725
      %v4057 = vunpack.c.h.b16 %v3725
      %v4058 = vunpack.c.l.b16 %v3726
      %v4059 = vunpack.c.h.b16 %v3726
      %v4060 = vunpack.c.l.b16 %v3727
      %v4061 = vunpack.c.h.b16 %v3727
      %v4062 = vunpack.c.l.b16 %v3728
      %v4063 = vunpack.c.h.b16 %v3728
      %v4064 = vunpack.c.l.b16 %v3729
      %v4065 = vunpack.c.h.b16 %v3729
      %v4066 = vunpack.c.l.b16 %v3730
      %v4067 = vunpack.c.h.b16 %v3730
      %v4068 = vunpack.c.l.b16 %v3731
      %v4069 = vunpack.c.h.b16 %v3731
      %v4070 = vunpack.c.l.b16 %v3732
      %v4071 = vunpack.c.h.b16 %v3732
      %v4072 = vunpack.c.l.b16 %v3733
      %v4073 = vunpack.c.h.b16 %v3733
      %v4074 = vunpack.c.l.b16 %v3734
      %v4075 = vunpack.c.h.b16 %v3734
      %v4076 = vunpack.c.l.b16 %v3735
      %v4077 = vunpack.c.h.b16 %v3735
      %v4078 = vunpack.c.l.b16 %v3736
      %v4079 = vunpack.c.h.b16 %v3736
      %v4080 = vunpack.c.l.b16 %v3737
      %v4081 = vunpack.c.h.b16 %v3737
      %v4082 = vunpack.c.l.b16 %v3738
      %v4083 = vunpack.c.h.b16 %v3738
      %v4084 = vunpack.c.l.b16 %v3739
      %v4085 = vunpack.c.h.b16 %v3739
      %v4086 = vunpack.c.l.b16 %v3740
      %v4087 = vunpack.c.h.b16 %v3740
      %v4088 = vunpack.c.l.b16 %v3741
      %v4089 = vunpack.c.h.b16 %v3741
      %v4090 = vunpack.c.l.b16 %v3742
      %v4091 = vunpack.c.h.b16 %v3742
      %v4092 = vunpack.c.l.b16 %v3743
      %v4093 = vunpack.c.h.b16 %v3743
      %v4094 = vunpack.c.l.b16 %v3744
      %v4095 = vunpack.c.h.b16 %v3744
      %v4096 = vunpack.c.l.b16 %v3745
      %v4097 = vunpack.c.h.b16 %v3745
      %v4098 = vunpack.c.l.b16 %v3746
      %v4099 = vunpack.c.h.b16 %v3746
      %v4100 = vunpack.c.l.b16 %v3747
      %v4101 = vunpack.c.h.b16 %v3747
      %v4102 = vunpack.c.l.b16 %v3748
      %v4103 = vunpack.c.h.b16 %v3748
      %v4104 = vunpack.c.l.b16 %v3749
      %v4105 = vunpack.c.h.b16 %v3749
      %v4106 = vunpack.c.l.b16 %v3750
      %v4107 = vunpack.c.h.b16 %v3750
      %v4108 = vunpack.c.l.b16 %v3751
      %v4109 = vunpack.c.h.b16 %v3751
      %v4110 = vunpack.c.l.b16 %v3752
      %v4111 = vunpack.c.h.b16 %v3752
      %v4112 = vunpack.c.l.b16 %v3753
      %v4113 = vunpack.c.h.b16 %v3753
      %v4114 = vunpack.c.l.b16 %v3754
      %v4115 = vunpack.c.h.b16 %v3754
      %v4116 = vunpack.c.l.b16 %v3755
      %v4117 = vunpack.c.h.b16 %v3755
      %v4118 = vunpack.c.l.b16 %v3756
      %v4119 = vunpack.c.h.b16 %v3756
      %v4120 = vunpack.c.l.b16 %v3757
      %v4121 = vunpack.c.h.b16 %v3757
      %v4122 = vunpack.c.l.b16 %v3758
      %v4123 = vunpack.c.h.b16 %v3758
      %v4124 = vunpack.c.l.b16 %v3759
      %v4125 = vunpack.c.h.b16 %v3759
      %v4126 = vunpack.c.l.b16 %v3760
      %v4127 = vunpack.c.h.b16 %v3760
      %v4128 = vunpack.c.l.b16 %v3761
      %v4129 = vunpack.c.h.b16 %v3761
      %v4130 = vunpack.c.l.b16 %v3762
      %v4131 = vunpack.c.h.b16 %v3762
      %v4132 = vunpack.c.l.b16 %v3763
      %v4133 = vunpack.c.h.b16 %v3763
      %v4134 = vunpack.c.l.b16 %v3764
      %v4135 = vunpack.c.h.b16 %v3764
      %v4136 = vunpack.c.l.b16 %v3765
      %v4137 = vunpack.c.h.b16 %v3765
      %v4138 = vunpack.c.l.b16 %v3766
      %v4139 = vunpack.c.h.b16 %v3766
      %v4140 = vunpack.c.l.b16 %v3767
      %v4141 = vunpack.c.h.b16 %v3767
      %v4142 = vunpack.c.l.b16 %v3768
      %v4143 = vunpack.c.h.b16 %v3768
      %v4144 = vunpack.c.l.b16 %v3769
      %v4145 = vunpack.c.h.b16 %v3769
      %v4146 = vunpack.c.l.b16 %v3770
      %v4147 = vunpack.c.h.b16 %v3770
      %v4148 = vunpack.c.l.b16 %v3771
      %v4149 = vunpack.c.h.b16 %v3771
      %v4150 = vunpack.c.l.b16 %v3772
      %v4151 = vunpack.c.h.b16 %v3772
      %v4152 = vunpack.c.l.b16 %v3773
      %v4153 = vunpack.c.h.b16 %v3773
      %v4154 = vunpack.c.l.b16 %v3774
      %v4155 = vunpack.c.h.b16 %v3774
      %v4156 = vunpack.c.l.b16 %v3775
      %v4157 = vunpack.c.h.b16 %v3775
      %v4158 = vunpack.c.l.b16 %v3776
      %v4159 = vunpack.c.h.b16 %v3776
      %v4160 = vunpack.c.l.b16 %v3777
      %v4161 = vunpack.c.h.b16 %v3777
      %v4162 = vpack.c.b16 %v3908, %v3906
      %v4163 = vpack.c.b16 %v3909, %v3907
      %v4164 = vpack.c.b16 %v3912, %v3910
      %v4165 = vpack.c.b16 %v3913, %v3911
      %v4166 = vpack.c.b16 %v3916, %v3914
      %v4167 = vpack.c.b16 %v3917, %v3915
      %v4168 = vpack.c.b16 %v3920, %v3918
      %v4169 = vpack.c.b16 %v3921, %v3919
      %v4170 = vpack.c.b16 %v3924, %v3922
      %v4171 = vpack.c.b16 %v3925, %v3923
      %v4172 = vpack.c.b16 %v3928, %v3926
      %v4173 = vpack.c.b16 %v3929, %v3927
      %v4174 = vpack.c.b16 %v3932, %v3930
      %v4175 = vpack.c.b16 %v3933, %v3931
      %v4176 = vpack.c.b16 %v3936, %v3934
      %v4177 = vpack.c.b16 %v3937, %v3935
      %v4178 = vpack.c.b16 %v3940, %v3938
      %v4179 = vpack.c.b16 %v3941, %v3939
      %v4180 = vpack.c.b16 %v3944, %v3942
      %v4181 = vpack.c.b16 %v3945, %v3943
      %v4182 = vpack.c.b16 %v3948, %v3946
      %v4183 = vpack.c.b16 %v3949, %v3947
      %v4184 = vpack.c.b16 %v3952, %v3950
      %v4185 = vpack.c.b16 %v3953, %v3951
      %v4186 = vpack.c.b16 %v3956, %v3954
      %v4187 = vpack.c.b16 %v3957, %v3955
      %v4188 = vpack.c.b16 %v3960, %v3958
      %v4189 = vpack.c.b16 %v3961, %v3959
      %v4190 = vpack.c.b16 %v3964, %v3962
      %v4191 = vpack.c.b16 %v3965, %v3963
      %v4192 = vpack.c.b16 %v3968, %v3966
      %v4193 = vpack.c.b16 %v3969, %v3967
      %v4194 = vpack.c.b16 %v3972, %v3970
      %v4195 = vpack.c.b16 %v3973, %v3971
      %v4196 = vpack.c.b16 %v3976, %v3974
      %v4197 = vpack.c.b16 %v3977, %v3975
      %v4198 = vpack.c.b16 %v3980, %v3978
      %v4199 = vpack.c.b16 %v3981, %v3979
      %v4200 = vpack.c.b16 %v3984, %v3982
      %v4201 = vpack.c.b16 %v3985, %v3983
      %v4202 = vpack.c.b16 %v3988, %v3986
      %v4203 = vpack.c.b16 %v3989, %v3987
      %v4204 = vpack.c.b16 %v3992, %v3990
      %v4205 = vpack.c.b16 %v3993, %v3991
      %v4206 = vpack.c.b16 %v3996, %v3994
      %v4207 = vpack.c.b16 %v3997, %v3995
      %v4208 = vpack.c.b16 %v4000, %v3998
      %v4209 = vpack.c.b16 %v4001, %v3999
      %v4210 = vpack.c.b16 %v4004, %v4002
      %v4211 = vpack.c.b16 %v4005, %v4003
      %v4212 = vpack.c.b16 %v4008, %v4006
      %v4213 = vpack.c.b16 %v4009, %v4007
      %v4214 = vpack.c.b16 %v4012, %v4010
      %v4215 = vpack.c.b16 %v4013, %v4011
      %v4216 = vpack.c.b16 %v4016, %v4014
      %v4217 = vpack.c.b16 %v4017, %v4015
      %v4218 = vpack.c.b16 %v4020, %v4018
      %v4219 = vpack.c.b16 %v4021, %v4019
      %v4220 = vpack.c.b16 %v4024, %v4022
      %v4221 = vpack.c.b16 %v4025, %v4023
      %v4222 = vpack.c.b16 %v4028, %v4026
      %v4223 = vpack.c.b16 %v4029, %v4027
      %v4224 = vpack.c.b16 %v4032, %v4030
      %v4225 = vpack.c.b16 %v4033, %v4031
      %v4226 = vpack.c.b16 %v4036, %v4034
      %v4227 = vpack.c.b16 %v4037, %v4035
      %v4228 = vpack.c.b16 %v4040, %v4038
      %v4229 = vpack.c.b16 %v4041, %v4039
      %v4230 = vpack.c.b16 %v4044, %v4042
      %v4231 = vpack.c.b16 %v4045, %v4043
      %v4232 = vpack.c.b16 %v4048, %v4046
      %v4233 = vpack.c.b16 %v4049, %v4047
      %v4234 = vpack.c.b16 %v4052, %v4050
      %v4235 = vpack.c.b16 %v4053, %v4051
      %v4236 = vpack.c.b16 %v4056, %v4054
      %v4237 = vpack.c.b16 %v4057, %v4055
      %v4238 = vpack.c.b16 %v4060, %v4058
      %v4239 = vpack.c.b16 %v4061, %v4059
      %v4240 = vpack.c.b16 %v4064, %v4062
      %v4241 = vpack.c.b16 %v4065, %v4063
      %v4242 = vpack.c.b16 %v4068, %v4066
      %v4243 = vpack.c.b16 %v4069, %v4067
      %v4244 = vpack.c.b16 %v4072, %v4070
      %v4245 = vpack.c.b16 %v4073, %v4071
      %v4246 = vpack.c.b16 %v4076, %v4074
      %v4247 = vpack.c.b16 %v4077, %v4075
      %v4248 = vpack.c.b16 %v4080, %v4078
      %v4249 = vpack.c.b16 %v4081, %v4079
      %v4250 = vpack.c.b16 %v4084, %v4082
      %v4251 = vpack.c.b16 %v4085, %v4083
      %v4252 = vpack.c.b16 %v4088, %v4086
      %v4253 = vpack.c.b16 %v4089, %v4087
      %v4254 = vpack.c.b16 %v4092, %v4090
      %v4255 = vpack.c.b16 %v4093, %v4091
      %v4256 = vpack.c.b16 %v4096, %v4094
      %v4257 = vpack.c.b16 %v4097, %v4095
      %v4258 = vpack.c.b16 %v4100, %v4098
      %v4259 = vpack.c.b16 %v4101, %v4099
      %v4260 = vpack.c.b16 %v4104, %v4102
      %v4261 = vpack.c.b16 %v4105, %v4103
      %v4262 = vpack.c.b16 %v4108, %v4106
      %v4263 = vpack.c.b16 %v4109, %v4107
      %v4264 = vpack.c.b16 %v4112, %v4110
      %v4265 = vpack.c.b16 %v4113, %v4111
      %v4266 = vpack.c.b16 %v4116, %v4114
      %v4267 = vpack.c.b16 %v4117, %v4115
      %v4268 = vpack.c.b16 %v4120, %v4118
      %v4269 = vpack.c.b16 %v4121, %v4119
      %v4270 = vpack.c.b16 %v4124, %v4122
      %v4271 = vpack.c.b16 %v4125, %v4123
      %v4272 = vpack.c.b16 %v4128, %v4126
      %v4273 = vpack.c.b16 %v4129, %v4127
      %v4274 = vpack.c.b16 %v4132, %v4130
      %v4275 = vpack.c.b16 %v4133, %v4131
      %v4276 = vpack.c.b16 %v4136, %v4134
      %v4277 = vpack.c.b16 %v4137, %v4135
      %v4278 = vpack.c.b16 %v4140, %v4138
      %v4279 = vpack.c.b16 %v4141, %v4139
      %v4280 = vpack.c.b16 %v4144, %v4142
      %v4281 = vpack.c.b16 %v4145, %v4143
      %v4282 = vpack.c.b16 %v4148, %v4146
      %v4283 = vpack.c.b16 %v4149, %v4147
      %v4284 = vpack.c.b16 %v4152, %v4150
      %v4285 = vpack.c.b16 %v4153, %v4151
      %v4286 = vpack.c.b16 %v4156, %v4154
      %v4287 = vpack.c.b16 %v4157, %v4155
      %v4288 = vpack.c.b16 %v4160, %v4158
      %v4289 = vpack.c.b16 %v4161, %v4159
      %4418 = vmatprep.subr.bf16.mxu0 %v4163
      %4419 = vmatpush1.bf16.msra.mxu0 %v4162
      %4420 = vmatprep.subr.bf16.mxu0 %v4165
      %4421 = vmatpush1.bf16.msra.mxu0 %v4164
      %4422 = vmatprep.subr.bf16.mxu0 %v4167
      %4423 = vmatpush1.bf16.msra.mxu0 %v4166
      %4424 = vmatprep.subr.bf16.mxu0 %v4169
      %4425 = vmatpush1.bf16.msra.mxu0 %v4168
      %4426 = vmatprep.subr.bf16.mxu0 %v4171
      %4427 = vmatpush1.bf16.msra.mxu0 %v4170
      %4428 = vmatprep.subr.bf16.mxu0 %v4173
      %4429 = vmatpush1.bf16.msra.mxu0 %v4172
      %4430 = vmatprep.subr.bf16.mxu0 %v4175
      %4431 = vmatpush1.bf16.msra.mxu0 %v4174
      %4432 = vmatprep.subr.bf16.mxu0 %v4177
      %4433 = vmatpush1.bf16.msra.mxu0 %v4176
      %4434 = vmatprep.subr.bf16.mxu0 %v4179
      %4435 = vmatpush1.bf16.msra.mxu0 %v4178
      %4436 = vmatprep.subr.bf16.mxu0 %v4181
      %4437 = vmatpush1.bf16.msra.mxu0 %v4180
      %4438 = vmatprep.subr.bf16.mxu0 %v4183
      %4439 = vmatpush1.bf16.msra.mxu0 %v4182
      %4440 = vmatprep.subr.bf16.mxu0 %v4185
      %4441 = vmatpush1.bf16.msra.mxu0 %v4184
      %4442 = vmatprep.subr.bf16.mxu0 %v4187
      %4443 = vmatpush1.bf16.msra.mxu0 %v4186
      %4444 = vmatprep.subr.bf16.mxu0 %v4189
      %4445 = vmatpush1.bf16.msra.mxu0 %v4188
      %4446 = vmatprep.subr.bf16.mxu0 %v4191
      %4447 = vmatpush1.bf16.msra.mxu0 %v4190
      %4448 = vmatprep.subr.bf16.mxu0 %v4193
      %4449 = vmatpush1.bf16.msra.mxu0 %v4192
      %4450 = vmatprep.mubr.bf16.mxu0 %v481
      %4451 = vmatmul.mubr.bf16.gmra.mrb[0].mxu0 %v480
      %v4452 = vpop.f32.mrb[0].mxu0
      %v4453 = vadd.f32 0.0, %v4452
      %v4454 = vpop.f32.mrb[0].mxu0
      %v4455 = vadd.f32 0.0, %v4454
      %v4456 = vpop.f32.mrb[0].mxu0
      %v4457 = vadd.f32 0.0, %v4456
      %v4458 = vpop.f32.mrb[0].mxu0
      %v4459 = vadd.f32 0.0, %v4458
      %4460 = vmatprep.mubr.bf16.mxu0 %v489
      %4461 = vmatmul.mubr.bf16.gmra.mrb[0].mxu0 %v488
      %v4462 = vpop.f32.mrb[0].mxu0
      %v4463 = vadd.f32 0.0, %v4462
      %v4464 = vpop.f32.mrb[0].mxu0
      %v4465 = vadd.f32 0.0, %v4464
      %v4466 = vpop.f32.mrb[0].mxu0
      %v4467 = vpop.f32.mrb[0].mxu0
      %4468 = vdwg.mxu0
      %4469 = vmatprep.subr.bf16.mxu0 %v4195
      %4470 = vmatpush1.bf16.msra.mxu0 %v4194
      %4471 = vmatprep.subr.bf16.mxu0 %v4197
      %4472 = vmatpush1.bf16.msra.mxu0 %v4196
      %4473 = vmatprep.subr.bf16.mxu0 %v4199
      %4474 = vmatpush1.bf16.msra.mxu0 %v4198
      %4475 = vmatprep.subr.bf16.mxu0 %v4201
      %4476 = vmatpush1.bf16.msra.mxu0 %v4200
      %4477 = vmatprep.subr.bf16.mxu0 %v4203
      %4478 = vmatpush1.bf16.msra.mxu0 %v4202
      %4479 = vmatprep.subr.bf16.mxu0 %v4205
      %4480 = vmatpush1.bf16.msra.mxu0 %v4204
      %4481 = vmatprep.subr.bf16.mxu0 %v4207
      %4482 = vmatpush1.bf16.msra.mxu0 %v4206
      %4483 = vmatprep.subr.bf16.mxu0 %v4209
      %4484 = vmatpush1.bf16.msra.mxu0 %v4208
      %4485 = vmatprep.subr.bf16.mxu0 %v4211
      %4486 = vmatpush1.bf16.msra.mxu0 %v4210
      %4487 = vmatprep.subr.bf16.mxu0 %v4213
      %4488 = vmatpush1.bf16.msra.mxu0 %v4212
      %4489 = vmatprep.subr.bf16.mxu0 %v4215
      %4490 = vmatpush1.bf16.msra.mxu0 %v4214
      %4491 = vmatprep.subr.bf16.mxu0 %v4217
      %4492 = vmatpush1.bf16.msra.mxu0 %v4216
      %4493 = vmatprep.subr.bf16.mxu0 %v4219
      %4494 = vmatpush1.bf16.msra.mxu0 %v4218
      %4495 = vmatprep.subr.bf16.mxu0 %v4221
      %4496 = vmatpush1.bf16.msra.mxu0 %v4220
      %4497 = vmatprep.subr.bf16.mxu0 %v4223
      %4498 = vmatpush1.bf16.msra.mxu0 %v4222
      %4499 = vmatprep.subr.bf16.mxu0 %v4225
      %4500 = vmatpush1.bf16.msra.mxu0 %v4224
      %4501 = vmatprep.mubr.bf16.mxu0 %v483
      %4502 = vmatmul.mubr.bf16.gmra.mrb[0].mxu0 %v482
      %v4503 = vpop.f32.mrb[0].mxu0
      %v4504 = vadd.f32 %v4453, %v4503
      %v4505 = vpop.f32.mrb[0].mxu0
      %v4506 = vadd.f32 %v4455, %v4505
      %v4507 = vpop.f32.mrb[0].mxu0
      %v4508 = vadd.f32 %v4457, %v4507
      %v4509 = vpop.f32.mrb[0].mxu0
      %v4510 = vadd.f32 %v4459, %v4509
      %4511 = vmatprep.mubr.bf16.mxu0 %v491
      %4512 = vmatmul.mubr.bf16.gmra.mrb[0].mxu0 %v490
      %v4513 = vpop.f32.mrb[0].mxu0
      %v4514 = vadd.f32 %v4463, %v4513
      %v4515 = vpop.f32.mrb[0].mxu0
      %v4516 = vadd.f32 %v4465, %v4515
      %v4517 = vpop.f32.mrb[0].mxu0
      %v4518 = vpop.f32.mrb[0].mxu0
      %4519 = vdwg.mxu0
      %4520 = vmatprep.subr.bf16.mxu0 %v4227
      %4521 = vmatpush1.bf16.msra.mxu0 %v4226
      %4522 = vmatprep.subr.bf16.mxu0 %v4229
      %4523 = vmatpush1.bf16.msra.mxu0 %v4228
      %4524 = vmatprep.subr.bf16.mxu0 %v4231
      %4525 = vmatpush1.bf16.msra.mxu0 %v4230
      %4526 = vmatprep.subr.bf16.mxu0 %v4233
      %4527 = vmatpush1.bf16.msra.mxu0 %v4232
      %4528 = vmatprep.subr.bf16.mxu0 %v4235
      %4529 = vmatpush1.bf16.msra.mxu0 %v4234
      %4530 = vmatprep.subr.bf16.mxu0 %v4237
      %4531 = vmatpush1.bf16.msra.mxu0 %v4236
      %4532 = vmatprep.subr.bf16.mxu0 %v4239
      %4533 = vmatpush1.bf16.msra.mxu0 %v4238
      %4534 = vmatprep.subr.bf16.mxu0 %v4241
      %4535 = vmatpush1.bf16.msra.mxu0 %v4240
      %4536 = vmatprep.subr.bf16.mxu0 %v4243
      %4537 = vmatpush1.bf16.msra.mxu0 %v4242
      %4538 = vmatprep.subr.bf16.mxu0 %v4245
      %4539 = vmatpush1.bf16.msra.mxu0 %v4244
      %4540 = vmatprep.subr.bf16.mxu0 %v4247
      %4541 = vmatpush1.bf16.msra.mxu0 %v4246
      %4542 = vmatprep.subr.bf16.mxu0 %v4249
      %4543 = vmatpush1.bf16.msra.mxu0 %v4248
      %4544 = vmatprep.subr.bf16.mxu0 %v4251
      %4545 = vmatpush1.bf16.msra.mxu0 %v4250
      %4546 = vmatprep.subr.bf16.mxu0 %v4253
      %4547 = vmatpush1.bf16.msra.mxu0 %v4252
      %4548 = vmatprep.subr.bf16.mxu0 %v4255
      %4549 = vmatpush1.bf16.msra.mxu0 %v4254
      %4550 = vmatprep.subr.bf16.mxu0 %v4257
      %4551 = vmatpush1.bf16.msra.mxu0 %v4256
      %4552 = vmatprep.mubr.bf16.mxu0 %v485
      %4553 = vmatmul.mubr.bf16.gmra.mrb[0].mxu0 %v484
      %v4554 = vpop.f32.mrb[0].mxu0
      %v4555 = vadd.f32 %v4504, %v4554
      %v4556 = vpop.f32.mrb[0].mxu0
      %v4557 = vadd.f32 %v4506, %v4556
      %v4558 = vpop.f32.mrb[0].mxu0
      %v4559 = vadd.f32 %v4508, %v4558
      %v4560 = vpop.f32.mrb[0].mxu0
      %v4561 = vadd.f32 %v4510, %v4560
      %4562 = vmatprep.mubr.bf16.mxu0 %v493
      %4563 = vmatmul.mubr.bf16.gmra.mrb[0].mxu0 %v492
      %v4564 = vpop.f32.mrb[0].mxu0
      %v4565 = vadd.f32 %v4514, %v4564
      %v4566 = vpop.f32.mrb[0].mxu0
      %v4567 = vadd.f32 %v4516, %v4566
      %v4568 = vpop.f32.mrb[0].mxu0
      %v4569 = vpop.f32.mrb[0].mxu0
      %4570 = vdwg.mxu0
      %4571 = vmatprep.subr.bf16.mxu0 %v4259
      %4572 = vmatpush1.bf16.msra.mxu0 %v4258
      %4573 = vmatprep.subr.bf16.mxu0 %v4261
      %4574 = vmatpush1.bf16.msra.mxu0 %v4260
      %4575 = vmatprep.subr.bf16.mxu0 %v4263
      %4576 = vmatpush1.bf16.msra.mxu0 %v4262
      %4577 = vmatprep.subr.bf16.mxu0 %v4265
      %4578 = vmatpush1.bf16.msra.mxu0 %v4264
      %4579 = vmatprep.subr.bf16.mxu0 %v4267
      %4580 = vmatpush1.bf16.msra.mxu0 %v4266
      %4581 = vmatprep.subr.bf16.mxu0 %v4269
      %4582 = vmatpush1.bf16.msra.mxu0 %v4268
      %4583 = vmatprep.subr.bf16.mxu0 %v4271
      %4584 = vmatpush1.bf16.msra.mxu0 %v4270
      %4585 = vmatprep.subr.bf16.mxu0 %v4273
      %4586 = vmatpush1.bf16.msra.mxu0 %v4272
      %4587 = vmatprep.subr.bf16.mxu0 %v4275
      %4588 = vmatpush1.bf16.msra.mxu0 %v4274
      %4589 = vmatprep.subr.bf16.mxu0 %v4277
      %4590 = vmatpush1.bf16.msra.mxu0 %v4276
      %4591 = vmatprep.subr.bf16.mxu0 %v4279
      %4592 = vmatpush1.bf16.msra.mxu0 %v4278
      %4593 = vmatprep.subr.bf16.mxu0 %v4281
      %4594 = vmatpush1.bf16.msra.mxu0 %v4280
      %4595 = vmatprep.subr.bf16.mxu0 %v4283
      %4596 = vmatpush1.bf16.msra.mxu0 %v4282
      %4597 = vmatprep.subr.bf16.mxu0 %v4285
      %4598 = vmatpush1.bf16.msra.mxu0 %v4284
      %4599 = vmatprep.subr.bf16.mxu0 %v4287
      %4600 = vmatpush1.bf16.msra.mxu0 %v4286
      %4601 = vmatprep.subr.bf16.mxu0 %v4289
      %4602 = vmatpush1.bf16.msra.mxu0 %v4288
      %4603 = vmatprep.mubr.bf16.mxu0 %v487
      %4604 = vmatmul.mubr.bf16.gmra.mrb[0].mxu0 %v486
      %v4605 = vpop.f32.mrb[0].mxu0
      %v4606 = vadd.f32 %v4555, %v4605
      %v4607 = vpop.f32.mrb[0].mxu0
      %v4608 = vadd.f32 %v4557, %v4607
      %v4609 = vpop.f32.mrb[0].mxu0
      %v4610 = vadd.f32 %v4559, %v4609
      %v4611 = vpop.f32.mrb[0].mxu0
      %v4612 = vadd.f32 %v4561, %v4611
      %4613 = vmatprep.mubr.bf16.mxu0 %v495
      %4614 = vmatmul.mubr.bf16.gmra.mrb[0].mxu0 %v494
      %v4615 = vpop.f32.mrb[0].mxu0
      %v4616 = vadd.f32 %v4565, %v4615
      %v4617 = vpop.f32.mrb[0].mxu0
      %v4618 = vadd.f32 %v4567, %v4617
      %v4619 = vpop.f32.mrb[0].mxu0
      %v4620 = vpop.f32.mrb[0].mxu0
      %4621 = vdwg.mxu0
      %v4622 = vrot.slane %v4606, 3
      %v4623 = vrot.slane %v4608, 3
      %v4624 = vrot.slane %v4610, 3
      %v4625 = vrot.slane %v4612, 3
      %v4626 = vrot.slane %v4616, 3
      %v4627 = vrot.slane %v4618, 3
      %vm4628 = vcmp.lt.s32.totalorder %v1363, 5
      %v4629 = vsel %vm4628, %v4624, %v4626
      %v4630 = vsel %vm4628, %v4625, %v4627
      %v4631 = vsel %vm4628, %v4622, %v4624
      %v4632 = vsel %vm4628, %v4623, %v4625
      %v4633 = vsel %vm4628, %v4626, %v4622
      %v4634 = vsel %vm4628, %v4627, %v4623
      %v4635 = vadd.f32 %v3643, %v4631
      %v4636 = vadd.f32 %v3644, %v4629
      %v4637 = vadd.f32 %v3645, %v4633
      %v4638 = vadd.f32 %v3646, %v4632
      %v4639 = vadd.f32 %v3647, %v4630
      %v4640 = vadd.f32 %v3648, %v4634
      %s4641 = scalar_lea.vmem %s1, 6144
      %v4642 = vld [vmem:[%s4641] sm:$0xf]
      %v4643 = vld [vmem:[%s4641 + $0xc] sm:$0xf]
      %v4644 = vld [vmem:[%s4641 + $0x18] sm:$0xf]
      %v4645 = vld [vmem:[%s4641 + $0x24] sm:$0xf]
      %v4646 = vld [vmem:[%s4641 + $0x30] sm:$0xf]
      %v4647 = vld [vmem:[%s4641 + $0x3c] sm:$0xf]
      %v4648 = vld [vmem:[%s4641 + $0x48] sm:$0xf]
      %v4649 = vld [vmem:[%s4641 + $0x54] sm:$0xf]
      %v4650 = vld [vmem:[%s4641 + $0x60] sm:$0xf]
      %v4651 = vld [vmem:[%s4641 + $0x6c] sm:$0xf]
      %v4652 = vld [vmem:[%s4641 + $0x78] sm:$0xf]
      %v4653 = vld [vmem:[%s4641 + $0x84] sm:$0xf]
      %v4654 = vld [vmem:[%s4641 + $0x90] sm:$0xf]
      %v4655 = vld [vmem:[%s4641 + $0x9c] sm:$0xf]
      %v4656 = vld [vmem:[%s4641 + $0xa8] sm:$0xf]
      %v4657 = vld [vmem:[%s4641 + $0xb4] sm:$0xf]
      %v4658 = vld [vmem:[%s4641 + $0xc0] sm:$0xf]
      %v4659 = vld [vmem:[%s4641 + $0xcc] sm:$0xf]
      %v4660 = vld [vmem:[%s4641 + $0xd8] sm:$0xf]
      %v4661 = vld [vmem:[%s4641 + $0xe4] sm:$0xf]
      %v4662 = vld [vmem:[%s4641 + $0xf0] sm:$0xf]
      %v4663 = vld [vmem:[%s4641 + $0xfc] sm:$0xf]
      %v4664 = vld [vmem:[%s4641 + $0x108] sm:$0xf]
      %v4665 = vld [vmem:[%s4641 + $0x114] sm:$0xf]
      %v4666 = vld [vmem:[%s4641 + $0x120] sm:$0xf]
      %v4667 = vld [vmem:[%s4641 + $0x12c] sm:$0xf]
      %v4668 = vld [vmem:[%s4641 + $0x138] sm:$0xf]
      %v4669 = vld [vmem:[%s4641 + $0x144] sm:$0xf]
      %v4670 = vld [vmem:[%s4641 + $0x150] sm:$0xf]
      %v4671 = vld [vmem:[%s4641 + $0x15c] sm:$0xf]
      %v4672 = vld [vmem:[%s4641 + $0x168] sm:$0xf]
      %v4673 = vld [vmem:[%s4641 + $0x174] sm:$0xf]
      %v4674 = vld [vmem:[%s4641 + $0x180] sm:$0xf]
      %v4675 = vld [vmem:[%s4641 + $0x18c] sm:$0xf]
      %v4676 = vld [vmem:[%s4641 + $0x198] sm:$0xf]
      %v4677 = vld [vmem:[%s4641 + $0x1a4] sm:$0xf]
      %v4678 = vld [vmem:[%s4641 + $0x1b0] sm:$0xf]
      %v4679 = vld [vmem:[%s4641 + $0x1bc] sm:$0xf]
      %v4680 = vld [vmem:[%s4641 + $0x1c8] sm:$0xf]
      %v4681 = vld [vmem:[%s4641 + $0x1d4] sm:$0xf]
      %v4682 = vld [vmem:[%s4641 + $0x1e0] sm:$0xf]
      %v4683 = vld [vmem:[%s4641 + $0x1ec] sm:$0xf]
      %v4684 = vld [vmem:[%s4641 + $0x1f8] sm:$0xf]
      %v4685 = vld [vmem:[%s4641 + $0x204] sm:$0xf]
      %v4686 = vld [vmem:[%s4641 + $0x210] sm:$0xf]
      %v4687 = vld [vmem:[%s4641 + $0x21c] sm:$0xf]
      %v4688 = vld [vmem:[%s4641 + $0x228] sm:$0xf]
      %v4689 = vld [vmem:[%s4641 + $0x234] sm:$0xf]
      %v4690 = vld [vmem:[%s4641 + $0x240] sm:$0xf]
      %v4691 = vld [vmem:[%s4641 + $0x24c] sm:$0xf]
      %v4692 = vld [vmem:[%s4641 + $0x258] sm:$0xf]
      %v4693 = vld [vmem:[%s4641 + $0x264] sm:$0xf]
      %v4694 = vld [vmem:[%s4641 + $0x270] sm:$0xf]
      %v4695 = vld [vmem:[%s4641 + $0x27c] sm:$0xf]
      %v4696 = vld [vmem:[%s4641 + $0x288] sm:$0xf]
      %v4697 = vld [vmem:[%s4641 + $0x294] sm:$0xf]
      %v4698 = vld [vmem:[%s4641 + $0x2a0] sm:$0xf]
      %v4699 = vld [vmem:[%s4641 + $0x2ac] sm:$0xf]
      %v4700 = vld [vmem:[%s4641 + $0x2b8] sm:$0xf]
      %v4701 = vld [vmem:[%s4641 + $0x2c4] sm:$0xf]
      %v4702 = vld [vmem:[%s4641 + $0x2d0] sm:$0xf]
      %v4703 = vld [vmem:[%s4641 + $0x2dc] sm:$0xf]
      %v4704 = vld [vmem:[%s4641 + $0x2e8] sm:$0xf]
      %v4705 = vld [vmem:[%s4641 + $0x2f4] sm:$0xf]
      %v4706 = vld [vmem:[%s4641 + $0x300] sm:$0xf]
      %v4707 = vld [vmem:[%s4641 + $0x30c] sm:$0xf]
      %v4708 = vld [vmem:[%s4641 + $0x318] sm:$0xf]
      %v4709 = vld [vmem:[%s4641 + $0x324] sm:$0xf]
      %v4710 = vld [vmem:[%s4641 + $0x330] sm:$0xf]
      %v4711 = vld [vmem:[%s4641 + $0x33c] sm:$0xf]
      %v4712 = vld [vmem:[%s4641 + $0x348] sm:$0xf]
      %v4713 = vld [vmem:[%s4641 + $0x354] sm:$0xf]
      %v4714 = vld [vmem:[%s4641 + $0x360] sm:$0xf]
      %v4715 = vld [vmem:[%s4641 + $0x36c] sm:$0xf]
      %v4716 = vld [vmem:[%s4641 + $0x378] sm:$0xf]
      %v4717 = vld [vmem:[%s4641 + $0x384] sm:$0xf]
      %v4718 = vld [vmem:[%s4641 + $0x390] sm:$0xf]
      %v4719 = vld [vmem:[%s4641 + $0x39c] sm:$0xf]
      %v4720 = vld [vmem:[%s4641 + $0x3a8] sm:$0xf]
      %v4721 = vld [vmem:[%s4641 + $0x3b4] sm:$0xf]
      %v4722 = vld [vmem:[%s4641 + $0x3c0] sm:$0xf]
      %v4723 = vld [vmem:[%s4641 + $0x3cc] sm:$0xf]
      %v4724 = vld [vmem:[%s4641 + $0x3d8] sm:$0xf]
      %v4725 = vld [vmem:[%s4641 + $0x3e4] sm:$0xf]
      %v4726 = vld [vmem:[%s4641 + $0x3f0] sm:$0xf]
      %v4727 = vld [vmem:[%s4641 + $0x3fc] sm:$0xf]
      %v4728 = vld [vmem:[%s4641 + $0x408] sm:$0xf]
      %v4729 = vld [vmem:[%s4641 + $0x414] sm:$0xf]
      %v4730 = vld [vmem:[%s4641 + $0x420] sm:$0xf]
      %v4731 = vld [vmem:[%s4641 + $0x42c] sm:$0xf]
      %v4732 = vld [vmem:[%s4641 + $0x438] sm:$0xf]
      %v4733 = vld [vmem:[%s4641 + $0x444] sm:$0xf]
      %v4734 = vld [vmem:[%s4641 + $0x450] sm:$0xf]
      %v4735 = vld [vmem:[%s4641 + $0x45c] sm:$0xf]
      %v4736 = vld [vmem:[%s4641 + $0x468] sm:$0xf]
      %v4737 = vld [vmem:[%s4641 + $0x474] sm:$0xf]
      %v4738 = vld [vmem:[%s4641 + $0x480] sm:$0xf]
      %v4739 = vld [vmem:[%s4641 + $0x48c] sm:$0xf]
      %v4740 = vld [vmem:[%s4641 + $0x498] sm:$0xf]
      %v4741 = vld [vmem:[%s4641 + $0x4a4] sm:$0xf]
      %v4742 = vld [vmem:[%s4641 + $0x4b0] sm:$0xf]
      %v4743 = vld [vmem:[%s4641 + $0x4bc] sm:$0xf]
      %v4744 = vld [vmem:[%s4641 + $0x4c8] sm:$0xf]
      %v4745 = vld [vmem:[%s4641 + $0x4d4] sm:$0xf]
      %v4746 = vld [vmem:[%s4641 + $0x4e0] sm:$0xf]
      %v4747 = vld [vmem:[%s4641 + $0x4ec] sm:$0xf]
      %v4748 = vld [vmem:[%s4641 + $0x4f8] sm:$0xf]
      %v4749 = vld [vmem:[%s4641 + $0x504] sm:$0xf]
      %v4750 = vld [vmem:[%s4641 + $0x510] sm:$0xf]
      %v4751 = vld [vmem:[%s4641 + $0x51c] sm:$0xf]
      %v4752 = vld [vmem:[%s4641 + $0x528] sm:$0xf]
      %v4753 = vld [vmem:[%s4641 + $0x534] sm:$0xf]
      %v4754 = vld [vmem:[%s4641 + $0x540] sm:$0xf]
      %v4755 = vld [vmem:[%s4641 + $0x54c] sm:$0xf]
      %v4756 = vld [vmem:[%s4641 + $0x558] sm:$0xf]
      %v4757 = vld [vmem:[%s4641 + $0x564] sm:$0xf]
      %v4758 = vld [vmem:[%s4641 + $0x570] sm:$0xf]
      %v4759 = vld [vmem:[%s4641 + $0x57c] sm:$0xf]
      %v4760 = vld [vmem:[%s4641 + $0x588] sm:$0xf]
      %v4761 = vld [vmem:[%s4641 + $0x594] sm:$0xf]
      %v4762 = vld [vmem:[%s4641 + $0x5a0] sm:$0xf]
      %v4763 = vld [vmem:[%s4641 + $0x5ac] sm:$0xf]
      %v4764 = vld [vmem:[%s4641 + $0x5b8] sm:$0xf]
      %v4765 = vld [vmem:[%s4641 + $0x5c4] sm:$0xf]
      %v4766 = vld [vmem:[%s4641 + $0x5d0] sm:$0xf]
      %v4767 = vld [vmem:[%s4641 + $0x5dc] sm:$0xf]
      %v4768 = vld [vmem:[%s4641 + $0x5e8] sm:$0xf]
      %v4769 = vld [vmem:[%s4641 + $0x5f4] sm:$0xf]
      %v4898 = vunpack.c.l.b16 %v4642
      %v4899 = vunpack.c.l.b16 %v4643
      %v4900 = vunpack.c.l.b16 %v4644
      %v4901 = vunpack.c.l.b16 %v4645
      %v4902 = vunpack.c.l.b16 %v4646
      %v4903 = vunpack.c.l.b16 %v4647
      %v4904 = vunpack.c.l.b16 %v4648
      %v4905 = vunpack.c.l.b16 %v4649
      %v4906 = vunpack.c.l.b16 %v4650
      %v4907 = vunpack.c.l.b16 %v4651
      %v4908 = vunpack.c.l.b16 %v4652
      %v4909 = vunpack.c.l.b16 %v4653
      %v4910 = vunpack.c.l.b16 %v4654
      %v4911 = vunpack.c.l.b16 %v4655
      %v4912 = vunpack.c.l.b16 %v4656
      %v4913 = vunpack.c.l.b16 %v4657
      %v4914 = vunpack.c.l.b16 %v4658
      %v4915 = vunpack.c.l.b16 %v4659
      %v4916 = vunpack.c.l.b16 %v4660
      %v4917 = vunpack.c.l.b16 %v4661
      %v4918 = vunpack.c.l.b16 %v4662
      %v4919 = vunpack.c.l.b16 %v4663
      %v4920 = vunpack.c.l.b16 %v4664
      %v4921 = vunpack.c.l.b16 %v4665
      %v4922 = vunpack.c.l.b16 %v4666
      %v4923 = vunpack.c.l.b16 %v4667
      %v4924 = vunpack.c.l.b16 %v4668
      %v4925 = vunpack.c.l.b16 %v4669
      %v4926 = vunpack.c.l.b16 %v4670
      %v4927 = vunpack.c.l.b16 %v4671
      %v4928 = vunpack.c.l.b16 %v4672
      %v4929 = vunpack.c.l.b16 %v4673
      %v4930 = vunpack.c.l.b16 %v4674
      %v4931 = vunpack.c.l.b16 %v4675
      %v4932 = vunpack.c.l.b16 %v4676
      %v4933 = vunpack.c.l.b16 %v4677
      %v4934 = vunpack.c.l.b16 %v4678
      %v4935 = vunpack.c.l.b16 %v4679
      %v4936 = vunpack.c.l.b16 %v4680
      %v4937 = vunpack.c.l.b16 %v4681
      %v4938 = vunpack.c.l.b16 %v4682
      %v4939 = vunpack.c.l.b16 %v4683
      %v4940 = vunpack.c.l.b16 %v4684
      %v4941 = vunpack.c.l.b16 %v4685
      %v4942 = vunpack.c.l.b16 %v4686
      %v4943 = vunpack.c.l.b16 %v4687
      %v4944 = vunpack.c.l.b16 %v4688
      %v4945 = vunpack.c.l.b16 %v4689
      %v4946 = vunpack.c.l.b16 %v4690
      %v4947 = vunpack.c.l.b16 %v4691
      %v4948 = vunpack.c.l.b16 %v4692
      %v4949 = vunpack.c.l.b16 %v4693
      %v4950 = vunpack.c.l.b16 %v4694
      %v4951 = vunpack.c.l.b16 %v4695
      %v4952 = vunpack.c.l.b16 %v4696
      %v4953 = vunpack.c.l.b16 %v4697
      %v4954 = vunpack.c.l.b16 %v4698
      %v4955 = vunpack.c.l.b16 %v4699
      %v4956 = vunpack.c.l.b16 %v4700
      %v4957 = vunpack.c.l.b16 %v4701
      %v4958 = vunpack.c.l.b16 %v4702
      %v4959 = vunpack.c.l.b16 %v4703
      %v4960 = vunpack.c.l.b16 %v4704
      %v4961 = vunpack.c.l.b16 %v4705
      %v4962 = vunpack.c.l.b16 %v4706
      %v4963 = vunpack.c.l.b16 %v4707
      %v4964 = vunpack.c.l.b16 %v4708
      %v4965 = vunpack.c.l.b16 %v4709
      %v4966 = vunpack.c.l.b16 %v4710
      %v4967 = vunpack.c.l.b16 %v4711
      %v4968 = vunpack.c.l.b16 %v4712
      %v4969 = vunpack.c.l.b16 %v4713
      %v4970 = vunpack.c.l.b16 %v4714
      %v4971 = vunpack.c.l.b16 %v4715
      %v4972 = vunpack.c.l.b16 %v4716
      %v4973 = vunpack.c.l.b16 %v4717
      %v4974 = vunpack.c.l.b16 %v4718
      %v4975 = vunpack.c.l.b16 %v4719
      %v4976 = vunpack.c.l.b16 %v4720
      %v4977 = vunpack.c.l.b16 %v4721
      %v4978 = vunpack.c.l.b16 %v4722
      %v4979 = vunpack.c.l.b16 %v4723
      %v4980 = vunpack.c.l.b16 %v4724
      %v4981 = vunpack.c.l.b16 %v4725
      %v4982 = vunpack.c.l.b16 %v4726
      %v4983 = vunpack.c.l.b16 %v4727
      %v4984 = vunpack.c.l.b16 %v4728
      %v4985 = vunpack.c.l.b16 %v4729
      %v4986 = vunpack.c.l.b16 %v4730
      %v4987 = vunpack.c.l.b16 %v4731
      %v4988 = vunpack.c.l.b16 %v4732
      %v4989 = vunpack.c.l.b16 %v4733
      %v4990 = vunpack.c.l.b16 %v4734
      %v4991 = vunpack.c.l.b16 %v4735
      %v4992 = vunpack.c.l.b16 %v4736
      %v4993 = vunpack.c.l.b16 %v4737
      %v4994 = vunpack.c.l.b16 %v4738
      %v4995 = vunpack.c.l.b16 %v4739
      %v4996 = vunpack.c.l.b16 %v4740
      %v4997 = vunpack.c.l.b16 %v4741
      %v4998 = vunpack.c.l.b16 %v4742
      %v4999 = vunpack.c.l.b16 %v4743
      %v5000 = vunpack.c.l.b16 %v4744
      %v5001 = vunpack.c.l.b16 %v4745
      %v5002 = vunpack.c.l.b16 %v4746
      %v5003 = vunpack.c.l.b16 %v4747
      %v5004 = vunpack.c.l.b16 %v4748
      %v5005 = vunpack.c.l.b16 %v4749
      %v5006 = vunpack.c.l.b16 %v4750
      %v5007 = vunpack.c.l.b16 %v4751
      %v5008 = vunpack.c.l.b16 %v4752
      %v5009 = vunpack.c.l.b16 %v4753
      %v5010 = vunpack.c.l.b16 %v4754
      %v5011 = vunpack.c.l.b16 %v4755
      %v5012 = vunpack.c.l.b16 %v4756
      %v5013 = vunpack.c.l.b16 %v4757
      %v5014 = vunpack.c.l.b16 %v4758
      %v5015 = vunpack.c.l.b16 %v4759
      %v5016 = vunpack.c.l.b16 %v4760
      %v5017 = vunpack.c.l.b16 %v4761
      %v5018 = vunpack.c.l.b16 %v4762
      %v5019 = vunpack.c.l.b16 %v4763
      %v5020 = vunpack.c.l.b16 %v4764
      %v5021 = vunpack.c.l.b16 %v4765
      %v5022 = vunpack.c.l.b16 %v4766
      %v5023 = vunpack.c.l.b16 %v4767
      %v5024 = vunpack.c.l.b16 %v4768
      %v5025 = vunpack.c.l.b16 %v4769
      %v5026 = vpack.c.b16 %v4899, %v4898
      %v5027 = vpack.c.b16 %v4901, %v4900
      %v5028 = vpack.c.b16 %v4903, %v4902
      %v5029 = vpack.c.b16 %v4905, %v4904
      %v5030 = vpack.c.b16 %v4907, %v4906
      %v5031 = vpack.c.b16 %v4909, %v4908
      %v5032 = vpack.c.b16 %v4911, %v4910
      %v5033 = vpack.c.b16 %v4913, %v4912
      %v5034 = vpack.c.b16 %v4915, %v4914
      %v5035 = vpack.c.b16 %v4917, %v4916
      %v5036 = vpack.c.b16 %v4919, %v4918
      %v5037 = vpack.c.b16 %v4921, %v4920
      %v5038 = vpack.c.b16 %v4923, %v4922
      %v5039 = vpack.c.b16 %v4925, %v4924
      %v5040 = vpack.c.b16 %v4927, %v4926
      %v5041 = vpack.c.b16 %v4929, %v4928
      %v5042 = vpack.c.b16 %v4931, %v4930
      %v5043 = vpack.c.b16 %v4933, %v4932
      %v5044 = vpack.c.b16 %v4935, %v4934
      %v5045 = vpack.c.b16 %v4937, %v4936
      %v5046 = vpack.c.b16 %v4939, %v4938
      %v5047 = vpack.c.b16 %v4941, %v4940
      %v5048 = vpack.c.b16 %v4943, %v4942
      %v5049 = vpack.c.b16 %v4945, %v4944
      %v5050 = vpack.c.b16 %v4947, %v4946
      %v5051 = vpack.c.b16 %v4949, %v4948
      %v5052 = vpack.c.b16 %v4951, %v4950
      %v5053 = vpack.c.b16 %v4953, %v4952
      %v5054 = vpack.c.b16 %v4955, %v4954
      %v5055 = vpack.c.b16 %v4957, %v4956
      %v5056 = vpack.c.b16 %v4959, %v4958
      %v5057 = vpack.c.b16 %v4961, %v4960
      %v5058 = vpack.c.b16 %v4963, %v4962
      %v5059 = vpack.c.b16 %v4965, %v4964
      %v5060 = vpack.c.b16 %v4967, %v4966
      %v5061 = vpack.c.b16 %v4969, %v4968
      %v5062 = vpack.c.b16 %v4971, %v4970
      %v5063 = vpack.c.b16 %v4973, %v4972
      %v5064 = vpack.c.b16 %v4975, %v4974
      %v5065 = vpack.c.b16 %v4977, %v4976
      %v5066 = vpack.c.b16 %v4979, %v4978
      %v5067 = vpack.c.b16 %v4981, %v4980
      %v5068 = vpack.c.b16 %v4983, %v4982
      %v5069 = vpack.c.b16 %v4985, %v4984
      %v5070 = vpack.c.b16 %v4987, %v4986
      %v5071 = vpack.c.b16 %v4989, %v4988
      %v5072 = vpack.c.b16 %v4991, %v4990
      %v5073 = vpack.c.b16 %v4993, %v4992
      %v5074 = vpack.c.b16 %v4995, %v4994
      %v5075 = vpack.c.b16 %v4997, %v4996
      %v5076 = vpack.c.b16 %v4999, %v4998
      %v5077 = vpack.c.b16 %v5001, %v5000
      %v5078 = vpack.c.b16 %v5003, %v5002
      %v5079 = vpack.c.b16 %v5005, %v5004
      %v5080 = vpack.c.b16 %v5007, %v5006
      %v5081 = vpack.c.b16 %v5009, %v5008
      %v5082 = vpack.c.b16 %v5011, %v5010
      %v5083 = vpack.c.b16 %v5013, %v5012
      %v5084 = vpack.c.b16 %v5015, %v5014
      %v5085 = vpack.c.b16 %v5017, %v5016
      %v5086 = vpack.c.b16 %v5019, %v5018
      %v5087 = vpack.c.b16 %v5021, %v5020
      %v5088 = vpack.c.b16 %v5023, %v5022
      %v5089 = vpack.c.b16 %v5025, %v5024
      %5154 = vmatprep.subr.bf16.mxu0 0
      %5155 = vmatpush1.bf16.msra.mxu0 %v5026
      %5156 = vmatprep.subr.bf16.mxu0 0
      %5157 = vmatpush1.bf16.msra.mxu0 %v5027
      %5158 = vmatprep.subr.bf16.mxu0 0
      %5159 = vmatpush1.bf16.msra.mxu0 %v5028
      %5160 = vmatprep.subr.bf16.mxu0 0
      %5161 = vmatpush1.bf16.msra.mxu0 %v5029
      %5162 = vmatprep.subr.bf16.mxu0 0
      %5163 = vmatpush1.bf16.msra.mxu0 %v5030
      %5164 = vmatprep.subr.bf16.mxu0 0
      %5165 = vmatpush1.bf16.msra.mxu0 %v5031
      %5166 = vmatprep.subr.bf16.mxu0 0
      %5167 = vmatpush1.bf16.msra.mxu0 %v5032
      %5168 = vmatprep.subr.bf16.mxu0 0
      %5169 = vmatpush1.bf16.msra.mxu0 %v5033
      %5170 = vmatprep.subr.bf16.mxu0 0
      %5171 = vmatpush1.bf16.msra.mxu0 %v5034
      %5172 = vmatprep.subr.bf16.mxu0 0
      %5173 = vmatpush1.bf16.msra.mxu0 %v5035
      %5174 = vmatprep.subr.bf16.mxu0 0
      %5175 = vmatpush1.bf16.msra.mxu0 %v5036
      %5176 = vmatprep.subr.bf16.mxu0 0
      %5177 = vmatpush1.bf16.msra.mxu0 %v5037
      %5178 = vmatprep.subr.bf16.mxu0 0
      %5179 = vmatpush1.bf16.msra.mxu0 %v5038
      %5180 = vmatprep.subr.bf16.mxu0 0
      %5181 = vmatpush1.bf16.msra.mxu0 %v5039
      %5182 = vmatprep.subr.bf16.mxu0 0
      %5183 = vmatpush1.bf16.msra.mxu0 %v5040
      %5184 = vmatprep.subr.bf16.mxu0 0
      %5185 = vmatpush1.bf16.msra.mxu0 %v5041
      %5186 = vmatprep.mubr.bf16.mxu0 %v481
      %5187 = vmatmul.mubr.bf16.gmra.mrb[0].mxu0 %v480
      %v5188 = vpop.f32.mrb[0].mxu0
      %v5189 = vadd.f32 0.0, %v5188
      %v5190 = vpop.f32.mrb[0].mxu0
      %v5191 = vpop.f32.mrb[0].mxu0
      %v5192 = vadd.f32 0.0, %v5191
      %v5193 = vpop.f32.mrb[0].mxu0
      %5194 = vmatprep.mubr.bf16.mxu0 %v489
      %5195 = vmatmul.mubr.bf16.gmra.mrb[0].mxu0 %v488
      %v5196 = vpop.f32.mrb[0].mxu0
      %v5197 = vadd.f32 0.0, %v5196
      %v5198 = vpop.f32.mrb[0].mxu0
      %v5199 = vpop.f32.mrb[0].mxu0
      %v5200 = vpop.f32.mrb[0].mxu0
      %5201 = vdwg.mxu0
      %5202 = vmatprep.subr.bf16.mxu0 0
      %5203 = vmatpush1.bf16.msra.mxu0 %v5042
      %5204 = vmatprep.subr.bf16.mxu0 0
      %5205 = vmatpush1.bf16.msra.mxu0 %v5043
      %5206 = vmatprep.subr.bf16.mxu0 0
      %5207 = vmatpush1.bf16.msra.mxu0 %v5044
      %5208 = vmatprep.subr.bf16.mxu0 0
      %5209 = vmatpush1.bf16.msra.mxu0 %v5045
      %5210 = vmatprep.subr.bf16.mxu0 0
      %5211 = vmatpush1.bf16.msra.mxu0 %v5046
      %5212 = vmatprep.subr.bf16.mxu0 0
      %5213 = vmatpush1.bf16.msra.mxu0 %v5047
      %5214 = vmatprep.subr.bf16.mxu0 0
      %5215 = vmatpush1.bf16.msra.mxu0 %v5048
      %5216 = vmatprep.subr.bf16.mxu0 0
      %5217 = vmatpush1.bf16.msra.mxu0 %v5049
      %5218 = vmatprep.subr.bf16.mxu0 0
      %5219 = vmatpush1.bf16.msra.mxu0 %v5050
      %5220 = vmatprep.subr.bf16.mxu0 0
      %5221 = vmatpush1.bf16.msra.mxu0 %v5051
      %5222 = vmatprep.subr.bf16.mxu0 0
      %5223 = vmatpush1.bf16.msra.mxu0 %v5052
      %5224 = vmatprep.subr.bf16.mxu0 0
      %5225 = vmatpush1.bf16.msra.mxu0 %v5053
      %5226 = vmatprep.subr.bf16.mxu0 0
      %5227 = vmatpush1.bf16.msra.mxu0 %v5054
      %5228 = vmatprep.subr.bf16.mxu0 0
      %5229 = vmatpush1.bf16.msra.mxu0 %v5055
      %5230 = vmatprep.subr.bf16.mxu0 0
      %5231 = vmatpush1.bf16.msra.mxu0 %v5056
      %5232 = vmatprep.subr.bf16.mxu0 0
      %5233 = vmatpush1.bf16.msra.mxu0 %v5057
      %5234 = vmatprep.mubr.bf16.mxu0 %v483
      %5235 = vmatmul.mubr.bf16.gmra.mrb[0].mxu0 %v482
      %v5236 = vpop.f32.mrb[0].mxu0
      %v5237 = vadd.f32 %v5189, %v5236
      %v5238 = vpop.f32.mrb[0].mxu0
      %v5239 = vpop.f32.mrb[0].mxu0
      %v5240 = vadd.f32 %v5192, %v5239
      %v5241 = vpop.f32.mrb[0].mxu0
      %5242 = vmatprep.mubr.bf16.mxu0 %v491
      %5243 = vmatmul.mubr.bf16.gmra.mrb[0].mxu0 %v490
      %v5244 = vpop.f32.mrb[0].mxu0
      %v5245 = vadd.f32 %v5197, %v5244
      %v5246 = vpop.f32.mrb[0].mxu0
      %v5247 = vpop.f32.mrb[0].mxu0
      %v5248 = vpop.f32.mrb[0].mxu0
      %5249 = vdwg.mxu0
      %5250 = vmatprep.subr.bf16.mxu0 0
      %5251 = vmatpush1.bf16.msra.mxu0 %v5058
      %5252 = vmatprep.subr.bf16.mxu0 0
      %5253 = vmatpush1.bf16.msra.mxu0 %v5059
      %5254 = vmatprep.subr.bf16.mxu0 0
      %5255 = vmatpush1.bf16.msra.mxu0 %v5060
      %5256 = vmatprep.subr.bf16.mxu0 0
      %5257 = vmatpush1.bf16.msra.mxu0 %v5061
      %5258 = vmatprep.subr.bf16.mxu0 0
      %5259 = vmatpush1.bf16.msra.mxu0 %v5062
      %5260 = vmatprep.subr.bf16.mxu0 0
      %5261 = vmatpush1.bf16.msra.mxu0 %v5063
      %5262 = vmatprep.subr.bf16.mxu0 0
      %5263 = vmatpush1.bf16.msra.mxu0 %v5064
      %5264 = vmatprep.subr.bf16.mxu0 0
      %5265 = vmatpush1.bf16.msra.mxu0 %v5065
      %5266 = vmatprep.subr.bf16.mxu0 0
      %5267 = vmatpush1.bf16.msra.mxu0 %v5066
      %5268 = vmatprep.subr.bf16.mxu0 0
      %5269 = vmatpush1.bf16.msra.mxu0 %v5067
      %5270 = vmatprep.subr.bf16.mxu0 0
      %5271 = vmatpush1.bf16.msra.mxu0 %v5068
      %5272 = vmatprep.subr.bf16.mxu0 0
      %5273 = vmatpush1.bf16.msra.mxu0 %v5069
      %5274 = vmatprep.subr.bf16.mxu0 0
      %5275 = vmatpush1.bf16.msra.mxu0 %v5070
      %5276 = vmatprep.subr.bf16.mxu0 0
      %5277 = vmatpush1.bf16.msra.mxu0 %v5071
      %5278 = vmatprep.subr.bf16.mxu0 0
      %5279 = vmatpush1.bf16.msra.mxu0 %v5072
      %5280 = vmatprep.subr.bf16.mxu0 0
      %5281 = vmatpush1.bf16.msra.mxu0 %v5073
      %5282 = vmatprep.mubr.bf16.mxu0 %v485
      %5283 = vmatmul.mubr.bf16.gmra.mrb[0].mxu0 %v484
      %v5284 = vpop.f32.mrb[0].mxu0
      %v5285 = vadd.f32 %v5237, %v5284
      %v5286 = vpop.f32.mrb[0].mxu0
      %v5287 = vpop.f32.mrb[0].mxu0
      %v5288 = vadd.f32 %v5240, %v5287
      %v5289 = vpop.f32.mrb[0].mxu0
      %5290 = vmatprep.mubr.bf16.mxu0 %v493
      %5291 = vmatmul.mubr.bf16.gmra.mrb[0].mxu0 %v492
      %v5292 = vpop.f32.mrb[0].mxu0
      %v5293 = vadd.f32 %v5245, %v5292
      %v5294 = vpop.f32.mrb[0].mxu0
      %v5295 = vpop.f32.mrb[0].mxu0
      %v5296 = vpop.f32.mrb[0].mxu0
      %5297 = vdwg.mxu0
      %5298 = vmatprep.subr.bf16.mxu0 0
      %5299 = vmatpush1.bf16.msra.mxu0 %v5074
      %5300 = vmatprep.subr.bf16.mxu0 0
      %5301 = vmatpush1.bf16.msra.mxu0 %v5075
      %5302 = vmatprep.subr.bf16.mxu0 0
      %5303 = vmatpush1.bf16.msra.mxu0 %v5076
      %5304 = vmatprep.subr.bf16.mxu0 0
      %5305 = vmatpush1.bf16.msra.mxu0 %v5077
      %5306 = vmatprep.subr.bf16.mxu0 0
      %5307 = vmatpush1.bf16.msra.mxu0 %v5078
      %5308 = vmatprep.subr.bf16.mxu0 0
      %5309 = vmatpush1.bf16.msra.mxu0 %v5079
      %5310 = vmatprep.subr.bf16.mxu0 0
      %5311 = vmatpush1.bf16.msra.mxu0 %v5080
      %5312 = vmatprep.subr.bf16.mxu0 0
      %5313 = vmatpush1.bf16.msra.mxu0 %v5081
      %5314 = vmatprep.subr.bf16.mxu0 0
      %5315 = vmatpush1.bf16.msra.mxu0 %v5082
      %5316 = vmatprep.subr.bf16.mxu0 0
      %5317 = vmatpush1.bf16.msra.mxu0 %v5083
      %5318 = vmatprep.subr.bf16.mxu0 0
      %5319 = vmatpush1.bf16.msra.mxu0 %v5084
      %5320 = vmatprep.subr.bf16.mxu0 0
      %5321 = vmatpush1.bf16.msra.mxu0 %v5085
      %5322 = vmatprep.subr.bf16.mxu0 0
      %5323 = vmatpush1.bf16.msra.mxu0 %v5086
      %5324 = vmatprep.subr.bf16.mxu0 0
      %5325 = vmatpush1.bf16.msra.mxu0 %v5087
      %5326 = vmatprep.subr.bf16.mxu0 0
      %5327 = vmatpush1.bf16.msra.mxu0 %v5088
      %5328 = vmatprep.subr.bf16.mxu0 0
      %5329 = vmatpush1.bf16.msra.mxu0 %v5089
      %5330 = vmatprep.mubr.bf16.mxu0 %v487
      %5331 = vmatmul.mubr.bf16.gmra.mrb[0].mxu0 %v486
      %v5332 = vpop.f32.mrb[0].mxu0
      %v5333 = vadd.f32 %v5285, %v5332
      %v5334 = vpop.f32.mrb[0].mxu0
      %v5335 = vpop.f32.mrb[0].mxu0
      %v5336 = vadd.f32 %v5288, %v5335
      %v5337 = vpop.f32.mrb[0].mxu0
      %5338 = vmatprep.mubr.bf16.mxu0 %v495
      %5339 = vmatmul.mubr.bf16.gmra.mrb[0].mxu0 %v494
      %v5340 = vpop.f32.mrb[0].mxu0
      %v5341 = vadd.f32 %v5293, %v5340
      %v5342 = vpop.f32.mrb[0].mxu0
      %v5343 = vpop.f32.mrb[0].mxu0
      %v5344 = vpop.f32.mrb[0].mxu0
      %5345 = vdwg.mxu0
      %v5346 = vrot.slane %v5333, 4
      %v5347 = vrot.slane %v5336, 4
      %v5348 = vrot.slane %v5341, 4
      %vm5349 = vcmp.lt.s32.totalorder %v1363, 4
      %v5350 = vsel %vm5349, %v5347, %v5348
      %v5351 = vsel %vm5349, %v5346, %v5347
      %v5352 = vsel %vm5349, %v5348, %v5346
      %v5353 = vadd.f32 %v4635, %v5351
      %v5354 = vadd.f32 %v4636, %v5350
      %v5355 = vadd.f32 %v4637, %v5352
      %v5356 = vadd.s32 %v1363, 8
      %v5357 = vadd.s32 %v1363, 16
      %vm5358 = vcmp.lt.s32.totalorder %v1363, 16
      %vm5359 = vcmp.lt.s32.totalorder %v5356, 16
      %vm5360 = vcmp.lt.s32.totalorder %v5357, 16
      %v5361 = vsel %vm5358, %v5353, -inf
      %v5362 = vsel %vm5359, %v5354, -inf
      %v5363 = vsel %vm5360, %v5355, -inf
      %v5364 = vmax.f32 %v5361, %v5362
      %v5365 = vmax.f32 %v5364, %v5363
      %v5366 = vrot.slane %v5365, 4
      %v5367 = vmax.f32 %v5365, %v5366
      %v5368 = vrot.slane %v5367, 2
      %v5369 = vmax.f32 %v5367, %v5368
      %v5370 = vrot.slane %v5369, 1
      %v5371 = vmax.f32 %v5369, %v5370
      %v5372 = vld [vmem:[%s2] sm:$0x1]
      %v5373 = vadd.f32 %v5371, %v5372
      %v5374 = vmax.f32 %v5373, 0.0
      %v5375 = vsel %vm5358, %v4638, -inf
      %v5376 = vsel %vm5359, %v4639, -inf
      %v5377 = vsel %vm5360, %v4640, -inf
      %v5378 = vmax.f32 %v5375, %v5376
      %v5379 = vmax.f32 %v5378, %v5377
      %v5380 = vrot.slane %v5379, 4
      %v5381 = vmax.f32 %v5379, %v5380
      %v5382 = vrot.slane %v5381, 2
      %v5383 = vmax.f32 %v5381, %v5382
      %v5384 = vrot.slane %v5383, 1
      %v5385 = vmax.f32 %v5383, %v5384
      %v5386 = vld [vmem:[%s2 + $0x1] sm:$0x1]
      %v5387 = vadd.f32 %v5385, %v5386
      %v5388 = vmax.f32 %v5387, 0.0
      %v5389 = vsel %vm5358, %v3639, -inf
      %v5390 = vsel %vm5359, %v3636, -inf
      %v5391 = vsel %vm5360, %v3642, -inf
      %v5392 = vmax.f32 %v5389, %v5390
      %v5393 = vmax.f32 %v5392, %v5391
      %v5394 = vrot.slane %v5393, 4
      %v5395 = vmax.f32 %v5393, %v5394
      %v5396 = vrot.slane %v5395, 2
      %v5397 = vmax.f32 %v5395, %v5396
      %v5398 = vrot.slane %v5397, 1
      %v5399 = vmax.f32 %v5397, %v5398
      %v5400 = vld [vmem:[%s2 + $0x2] sm:$0x1]
      %v5401 = vadd.f32 %v5399, %v5400
      %v5402 = vmax.f32 %v5401, 0.0
      %v5406 = vcombine.low %v5374, %v5388
      %v5408 = vunpack.c.l.s4 1966171168
      %v5409 = vunpack.c.0.s8 %v5408
      %v5410 = vlaneseq
      %v5411 = vshrl.u32 %v5410, 7
      %v5412 = vsub.s32 %v5409, %v5411
      %v5413 = vrot.slane %v5406, %v5412
      %v5415 = vunpack.c.l.s4 1966171168
      %v5416 = vunpack.c.0.s8 %v5415
      %v5417 = vlaneseq
      %v5418 = vshrl.u32 %v5417, 7
      %v5419 = vsub.s32 %v5416, %v5418
      %v5420 = vrot.slane %v5402, %v5419
      %v5421 = vcombine.low %v5413, %v5420
      %v5423 = vunpack.c.l.s4 1966171168
      %v5424 = vunpack.c.0.s8 %v5423
      %v5425 = vlaneseq
      %v5426 = vshrl.u32 %v5425, 7
      %v5427 = vsub.s32 %v5424, %v5426
      %v5428 = vrot.slane %v5421, %v5427
      %v5430 = vlaneseq
      %vm5431 = vcmp.ge.s32.totalorder %v5430, 0
      %vm5432 = vcmp.lt.s32.totalorder %v5430, 384
      %vm5433 = vmand %vm5431, %vm5432
      %5434 = vst.msk [vmem:[%s173] sm:$0x7] %vm5433, %v5428
      %p5435 = scmp.lt.s32.totalorder %s14, 1
      %s5436 = scalar_select %p5435, %s14, 1
      %s5437 = smul.addr %s5436, 3
      %s5438 = scalar_lea.vmem %s3, %s5437
      // Predicated region
      $region33: #{structure_cnn_forward.1} parent=31 // pred_check
        %p5439 = pneg %p100
      $region34: #{structure_cnn_forward.1} parent=31 // pred_check_branch
        %5441 = sbr.rel (%p5439) target = $region36
      $region35: #{structure_cnn_forward.1} parent=31 // pred_region
        _
      $region36: #{structure_cnn_forward.1} parent=31 // pred_fallthru
        _
    $region32: #{structure_cnn_forward.1} parent=5 // pred_fallthru
      _
    %p5442 = scmp.le.s32.totalorder 2, %s9
    // Predicated region
    $region37: #{structure_cnn_forward.1} parent=5 // pred_check
      %p5443 = pneg %p5442
    $region38: #{structure_cnn_forward.1} parent=5 // pred_check_branch
      %5445 = sbr.rel (%p5443) target = $region40
    $region39: #{structure_cnn_forward.1} parent=5 // pred_region
      %s5446 = ssub.s32 %s9, 2
      // Predicated region
      $region41: #{structure_cnn_forward.1} parent=39 // pred_check
        %p5447 = pneg %p106
      $region42: #{structure_cnn_forward.1} parent=39 // pred_check_branch
        %5449 = sbr.rel (%p5447) target = $region44
      $region43: #{structure_cnn_forward.1} parent=39 // pred_region
        %p5450 = scmp.lt.s32.totalorder %s15, 1
        %s5451 = scalar_select %p5450, %s15, 1
        %s5452 = smul.addr %s5451, 3
        %s5453 = scalar_lea.vmem %s3, %s5452
      $region44: #{structure_cnn_forward.1} parent=39 // pred_fallthru
        _
    $region40: #{structure_cnn_forward.1} parent=5 // pred_fallthru
      _
  $region6: #{structure_cnn_forward.1} parent=0 // loop_footer
    %s13 = sadd.s32 1, %s9
  $region7: #{structure_cnn_forward.1} parent=0 // loop_footer_branch
    %8 = sbr.rel target = $region3
  $region8: #{structure_cnn_forward.1} parent=0 // loop_exit
    _

</llo_original>
